<compile_context>
chip_gen: v5e
topology: v5e:2x2
jax: 0.10.0
libtpu: 0.0.40
codegen_flags: <defaults>
</compile_context>

<pallas_src>
from functools import partial

import jax
import jax.numpy as jnp
from jax.experimental import pallas as pl
from jax.experimental.pallas import tpu as pltpu


def transformer_block_kernel(x_ref,
                             wq_ref, wkv_ref, wo_ref, bo_ref,
                             g1_ref, beta1_ref,
                             w1_ref, b1_ref, w2_ref, b2_ref,
                             g2_ref, beta2_ref,
                             o_ref,
                             k_scr, v_scr, ctx_scr,
                             *, num_heads, head_dim, k_dim, tq, ffn_chunk,
                             compute_dtype):
    f32 = jnp.float32
    cdt = compute_dtype
    H, D, K = num_heads, head_dim, k_dim
    S = x_ref.shape[1]

    qidx = pl.program_id(1)

    # ---- K/V projection for the whole sequence: once per batch element. ----
    # Correctness relies on the query-tile grid axis being sequential
    # ("arbitrary", innermost) so this scratch persists across query tiles.
    @pl.when(qidx == 0)
    def _():
        x_all = x_ref[0].astype(cdt)                                     # (S, K)
        kv = jnp.dot(x_all, wkv_ref[...], preferred_element_type=f32)    # (S, 2K)
        k_scr[...] = kv[:, :K].astype(cdt)
        v_scr[...] = kv[:, K:].astype(cdt)

    # ---- Per-tile Q projection (1/sqrt(D) already folded into W_q). --------
    row0 = pl.multiple_of(qidx * tq, tq)
    x_tile_f32 = x_ref[0, pl.ds(row0, tq), :]                            # (tq, K) f32
    q_all = jnp.dot(x_tile_f32.astype(cdt), wq_ref[...],
                    preferred_element_type=f32).astype(cdt)              # (tq, K)

    # ---- Attention, one head at a time (bounds softmax live set to (tq,S)).
    for h in range(H):                 # static loop; H is small
        lo = h * D
        qh = q_all[:, lo:lo + D]                                         # (tq, D)
        kh = k_scr[:, lo:lo + D]                                         # (S, D)
        s = jnp.dot(qh, kh.T, preferred_element_type=f32)                # (tq, S)
        s = s - jnp.max(s, axis=-1, keepdims=True)
        p = jnp.exp(s)
        p = p * pl.reciprocal(jnp.sum(p, axis=-1, keepdims=True), approx=True)
        ctx_scr[:, lo:lo + D] = jnp.dot(
            p.astype(cdt), v_scr[:, lo:lo + D],
            preferred_element_type=f32).astype(cdt)                      # (tq, D)

    # ---- Output projection: ONE K-deep matmul over all heads. --------------
    attn = jnp.dot(ctx_scr[...], wo_ref[...],
                   preferred_element_type=f32) + bo_ref[...]             # (tq, K)

    # ---- Residual + LayerNorm 1 ---------------------------------------------
    h1 = x_tile_f32 + attn
    mu = jnp.mean(h1, axis=-1, keepdims=True)
    var = jnp.mean(jnp.square(h1 - mu), axis=-1, keepdims=True)
    h1 = (h1 - mu) * jax.lax.rsqrt(var + 1e-5) * g1_ref[...] + beta1_ref[...]

    # ---- Feed-forward K -> 4K -> K, fori_loop over hidden-dim chunks --------
    h1c = h1.astype(cdt)
    n_chunks = w1_ref.shape[0] // ffn_chunk

    def ffn_body(c, ff):
        lo2 = pl.multiple_of(c * ffn_chunk, ffn_chunk)
        w1c = w1_ref[pl.ds(lo2, ffn_chunk), :]                           # (cf, K)
        hc = jnp.dot(h1c, w1c.T, preferred_element_type=f32)             # (tq, cf)
        hc = jnp.maximum(hc + b1_ref[pl.ds(c, 1), :], 0.0)
        w2c = w2_ref[pl.ds(lo2, ffn_chunk), :]                           # (cf, K)
        return ff + jnp.dot(hc.astype(cdt), w2c, preferred_element_type=f32)

    ff = jax.lax.fori_loop(0, n_chunks, ffn_body, jnp.zeros((tq, K), f32))
    ff = ff + b2_ref[...]

    # ---- Residual + LayerNorm 2 ---------------------------------------------
    h2 = h1 + ff
    mu2 = jnp.mean(h2, axis=-1, keepdims=True)
    var2 = jnp.mean(jnp.square(h2 - mu2), axis=-1, keepdims=True)
    out = (h2 - mu2) * jax.lax.rsqrt(var2 + 1e-5) * g2_ref[...] + beta2_ref[...]

    o_ref[0] = out.astype(o_ref.dtype)


def prepare_block_params(params, num_heads, *, ffn_chunk=512,
                         compute_dtype=jnp.bfloat16):
    """One-time weight prep (concat / transpose / cast / scale-fold), hoisted
    out of the per-call path."""
    K = params["wq"].shape[0]
    assert K % num_heads == 0, "input_dim must be divisible by num_heads"
    D = K // num_heads
    hidden = params["w1"].shape[1]                 # 4K
    cf = min(hidden, ffn_chunk)
    assert hidden % cf == 0
    n_chunks = hidden // cf
    cdt = compute_dtype
    scale = 1.0 / (float(D) ** 0.5)

    prepared = {
        "wq": (params["wq"] * scale).astype(cdt),                          # (K, K)
        "wkv": jnp.concatenate([params["wk"], params["wv"]], 1).astype(cdt),  # (K, 2K)
        "wo": params["wo"].astype(cdt),                                    # (K, K)
        "bo": params["bo"],
        "g1": params["g1"], "beta1": params["beta1"],
        "w1": params["w1"].T.astype(cdt),                                  # (4K, K)
        "b1": params["b1"].reshape(n_chunks, cf),                          # (nc, cf)
        "w2": params["w2"].astype(cdt),                                    # (4K, K)
        "b2": params["b2"],
        "g2": params["g2"], "beta2": params["beta2"],
    }
    meta = dict(num_heads=num_heads, head_dim=D, k_dim=K,
                ffn_chunk=cf, compute_dtype=cdt)
    return prepared, meta


def transformer_block(x, prepared, meta, *, q_tile=256):
    """x: (B, S, K) f32.  prepared/meta from prepare_block_params."""
    B, S, K = x.shape
    assert K == meta["k_dim"]
    H, D = meta["num_heads"], meta["head_dim"]
    cf = meta["ffn_chunk"]
    cdt = meta["compute_dtype"]

    tq = S if S <= q_tile else q_tile
    assert S % tq == 0, "sequence length must divide evenly into query tiles"
    nq = S // tq

    p = prepared
    weights = (p["wq"], p["wkv"], p["wo"], p["bo"], p["g1"], p["beta1"],
               p["w1"], p["b1"], p["w2"], p["b2"], p["g2"], p["beta2"])

    kernel = partial(transformer_block_kernel,
                     num_heads=H, head_dim=D, k_dim=K, tq=tq, ffn_chunk=cf,
                     compute_dtype=cdt)

    x = x.astype(jnp.float32)
    out_shape = jax.ShapeDtypeStruct((B, S, K), jnp.float32)

    # ---- Generation-aware VMEM budget ----------------------------------------
    isz = jnp.dtype(cdt).itemsize
    wbytes = sum(int(a.size) * a.dtype.itemsize for a in weights)
    scratch_bytes = (2 * S * K + tq * K) * isz
    act_bytes = 2 * S * K * 4 + 2 * tq * K * 4          # double-buffered x / out
    tmp_bytes = 8 * S * K + 4 * tq * S * 4 + (2 << 20)  # kv f32 temp + softmax temps
    try:
        vmem_cap = int(pltpu.get_tpu_info().vmem_capacity_bytes)
    except Exception:
        vmem_cap = 64 << 20

    # ---- Cost hint for XLA scheduling ----------------------------------------
    flops = 24 * B * S * K * K + 4 * B * S * S * K
    cost = pl.CostEstimate(flops=int(flops),
                           transcendentals=int(B * H * S * S),
                           bytes_accessed=int(2 * B * S * K * 4 + wbytes))

    def build_and_run(single_buffer_weights):
        wbuf = 1 if single_buffer_weights else 2

        def const_spec(a):
            idx = lambda b, q, n=a.ndim: (0,) * n
            if single_buffer_weights:
                # Constant-index blocks never change: one buffer is enough.
                return pl.BlockSpec(a.shape, idx,
                                    pipeline_mode=pl.Buffered(buffer_count=1))
            return pl.BlockSpec(a.shape, idx)

        in_specs = [pl.BlockSpec((1, S, K), lambda b, q: (b, 0, 0))] + \
                   [const_spec(a) for a in weights]
        out_spec = pl.BlockSpec((1, tq, K), lambda b, q: (b, q, 0))

        need = wbuf * wbytes + act_bytes + scratch_bytes + tmp_bytes
        vmem_limit = int(min(max(need, 32 << 20), int(vmem_cap * 0.9)))

        fn = pl.pallas_call(
            kernel,
            out_shape=out_shape,
            grid_spec=pltpu.PrefetchScalarGridSpec(
                num_scalar_prefetch=0,
                grid=(B, nq),
                in_specs=in_specs,
                out_specs=out_spec,
                scratch_shapes=[pltpu.VMEM((S, K), cdt),     # K, lane-dense
                                pltpu.VMEM((S, K), cdt),     # V, lane-dense
                                pltpu.VMEM((tq, K), cdt)],   # per-tile context
            ),
            compiler_params=pltpu.CompilerParams(
                # q-tile axis must stay "arbitrary": K/V scratch from qidx==0
                # is reused by later query tiles of the same batch element.
                dimension_semantics=("parallel", "arbitrary"),
                vmem_limit_bytes=vmem_limit),
            cost_estimate=cost,
        )
        out = fn(x, *weights)
        return jax.block_until_ready(out)

    try:
        return build_and_run(True)
    except Exception:
        # pl.Buffered(1) not supported on this version -> default buffering.
        return build_and_run(False)


def init_params(key, K):
    """Deterministic parameter init.  Linear weights stored transposed: (in, out)."""
    ks = jax.random.split(key, 8)
    s = 0.1
    params = {
        "wq": s * jax.random.normal(ks[0], (K, K), jnp.float32),
        "wk": s * jax.random.normal(ks[1], (K, K), jnp.float32),
        "wv": s * jax.random.normal(ks[2], (K, K), jnp.float32),
        "wo": s * jax.random.normal(ks[3], (K, K), jnp.float32),
        "bo": s * jax.random.normal(ks[4], (1, K), jnp.float32),
        "w1": s * jax.random.normal(ks[5], (K, 4 * K), jnp.float32),
        "b1": s * jax.random.normal(ks[6], (1, 4 * K), jnp.float32),
        "w2": s * jax.random.normal(ks[7], (4 * K, K), jnp.float32),
        "b2": jnp.zeros((1, K), jnp.float32),
        # LayerNorm affine params (PyTorch default init: gamma=1, beta=0)
        "g1": jnp.ones((1, K), jnp.float32),
        "beta1": jnp.zeros((1, K), jnp.float32),
        "g2": jnp.ones((1, K), jnp.float32),
        "beta2": jnp.zeros((1, K), jnp.float32),
    }
    return params


def reference_block(x, p, num_heads):
    """Pure-JAX reference mirroring the PyTorch forward (eval mode)."""
    B, S, K = x.shape
    D = K // num_heads
    q = x @ p["wq"]; k = x @ p["wk"]; v = x @ p["wv"]
    qh = q.reshape(B, S, num_heads, D).transpose(0, 2, 1, 3)
    kh = k.reshape(B, S, num_heads, D).transpose(0, 2, 1, 3)
    vh = v.reshape(B, S, num_heads, D).transpose(0, 2, 1, 3)
    scores = jnp.einsum("bhqd,bhkd->bhqk", qh, kh) / jnp.sqrt(jnp.float32(D))
    attn = jax.nn.softmax(scores, axis=-1)
    o = jnp.einsum("bhqk,bhkd->bhqd", attn, vh)
    o = o.transpose(0, 2, 1, 3).reshape(B, S, K)
    o = o @ p["wo"] + p["bo"]

    def ln(y, g, b):
        mu = y.mean(-1, keepdims=True)
        var = ((y - mu) ** 2).mean(-1, keepdims=True)
        return (y - mu) * jax.lax.rsqrt(var + 1e-5) * g + b

    h1 = ln(x + o, p["g1"], p["beta1"])
    ff = jnp.maximum(h1 @ p["w1"] + p["b1"], 0.0) @ p["w2"] + p["b2"]
    return ln(h1 + ff, p["g2"], p["beta2"])


if __name__ == "__main__":
    B, S, K, heads = 2, 8, 32, 4
    key = jax.random.PRNGKey(0)
    kx, kp = jax.random.split(key)
    x = jax.random.normal(kx, (B, S, K), jnp.float32)
    params = init_params(kp, K)
    ref = reference_block(x, params, heads)

    # f32-operand path (tighter check; softmax uses approx reciprocal).
    prep32, meta32 = prepare_block_params(params, heads, compute_dtype=jnp.float32)
    out_f32 = transformer_block(x, prep32, meta32)
    assert out_f32.shape == (B, S, K)
    assert jnp.allclose(out_f32, ref, rtol=2e-2, atol=2e-2), "f32 path mismatch"

    # Default bf16-operand path (f32 accumulate, f32 softmax/LayerNorm stats).
    prep16, meta16 = prepare_block_params(params, heads)
    out = transformer_block(x, prep16, meta16)
    assert out.shape == (B, S, K)
    assert jnp.allclose(out, ref, rtol=5e-2, atol=5e-2), "bf16 path mismatch"

    print("KERNEL_OK")
</pallas_src>

<mosaic_0001>
module attributes {stable_mosaic.version = 11 : i64} {
  func.func @transformer_block_kernel(%arg0: i32, %arg1: i32, %arg2: memref<1x8x32xf32, #tpu.memory_space<vmem>>, %arg3: memref<32x32xf32, #tpu.memory_space<vmem>>, %arg4: memref<32x64xf32, #tpu.memory_space<vmem>>, %arg5: memref<32x32xf32, #tpu.memory_space<vmem>>, %arg6: memref<1x32xf32, #tpu.memory_space<vmem>>, %arg7: memref<1x32xf32, #tpu.memory_space<vmem>>, %arg8: memref<1x32xf32, #tpu.memory_space<vmem>>, %arg9: memref<128x32xf32, #tpu.memory_space<vmem>>, %arg10: memref<1x128xf32, #tpu.memory_space<vmem>>, %arg11: memref<128x32xf32, #tpu.memory_space<vmem>>, %arg12: memref<1x32xf32, #tpu.memory_space<vmem>>, %arg13: memref<1x32xf32, #tpu.memory_space<vmem>>, %arg14: memref<1x32xf32, #tpu.memory_space<vmem>>, %arg15: memref<1x8x32xf32, #tpu.memory_space<vmem>>, %arg16: memref<8x32xf32, #tpu.memory_space<vmem>>, %arg17: memref<8x32xf32, #tpu.memory_space<vmem>>, %arg18: memref<8x32xf32, #tpu.memory_space<vmem>>) attributes {dimension_semantics = [#tpu.dimension_semantics<parallel>, #tpu.dimension_semantics<arbitrary>], iteration_bounds = array<i64: 2, 1>, scalar_prefetch = 0 : i64, scratch_operands = 3 : i64, tpu.core_type = #tpu.core_type<tc>, window_params = [{transform_indices = @transform_0, window_bounds = array<i64: 1, 8, 32>}, {pipeline_mode = #tpu.pipeline_mode<synchronous>, transform_indices = @transform_1, window_bounds = array<i64: 32, 32>}, {pipeline_mode = #tpu.pipeline_mode<synchronous>, transform_indices = @transform_2, window_bounds = array<i64: 32, 64>}, {pipeline_mode = #tpu.pipeline_mode<synchronous>, transform_indices = @transform_3, window_bounds = array<i64: 32, 32>}, {pipeline_mode = #tpu.pipeline_mode<synchronous>, transform_indices = @transform_4, window_bounds = array<i64: 1, 32>}, {pipeline_mode = #tpu.pipeline_mode<synchronous>, transform_indices = @transform_5, window_bounds = array<i64: 1, 32>}, {pipeline_mode = #tpu.pipeline_mode<synchronous>, transform_indices = @transform_6, window_bounds = array<i64: 1, 32>}, {pipeline_mode = #tpu.pipeline_mode<synchronous>, transform_indices = @transform_7, window_bounds = array<i64: 128, 32>}, {pipeline_mode = #tpu.pipeline_mode<synchronous>, transform_indices = @transform_8, window_bounds = array<i64: 1, 128>}, {pipeline_mode = #tpu.pipeline_mode<synchronous>, transform_indices = @transform_9, window_bounds = array<i64: 128, 32>}, {pipeline_mode = #tpu.pipeline_mode<synchronous>, transform_indices = @transform_10, window_bounds = array<i64: 1, 32>}, {pipeline_mode = #tpu.pipeline_mode<synchronous>, transform_indices = @transform_11, window_bounds = array<i64: 1, 32>}, {pipeline_mode = #tpu.pipeline_mode<synchronous>, transform_indices = @transform_12, window_bounds = array<i64: 1, 32>}, {transform_indices = @transform_13, window_bounds = array<i64: 1, 8, 32>}]} {
    %c0_i32 = arith.constant 0 : i32
    %0 = arith.cmpi eq, %arg1, %c0_i32 : i32
    %1 = arith.extui %0 : i1 to i32
    %c0_i32_0 = arith.constant 0 : i32
    %2 = arith.cmpi ne, %1, %c0_i32_0 : i32
    scf.if %2 {
      %c0_79 = arith.constant 0 : index
      %c0_80 = arith.constant 0 : index
      %c0_81 = arith.constant 0 : index
      %157 = vector.load %arg2[%c0_79, %c0_80, %c0_81] : memref<1x8x32xf32, #tpu.memory_space<vmem>>, vector<1x8x32xf32>
      %158 = vector.shape_cast %157 : vector<1x8x32xf32> to vector<8x32xf32>
      %c0_82 = arith.constant 0 : index
      %c0_83 = arith.constant 0 : index
      %159 = vector.load %arg4[%c0_82, %c0_83] : memref<32x64xf32, #tpu.memory_space<vmem>>, vector<32x64xf32>
      %cst_84 = arith.constant dense<0.000000e+00> : vector<8x64xf32>
      %160 = tpu.matmul %158, %159, %cst_84 {dimension_numbers = #tpu.dot_dimension_numbers<[1], [0], [0], [1], [0, 0, 1, 1], [], []>} : vector<8x32xf32>, vector<32x64xf32>, vector<8x64xf32> -> vector<8x64xf32>
      %161 = vector.extract_strided_slice %160 {offsets = [0, 0], sizes = [8, 32], strides = [1, 1]} : vector<8x64xf32> to vector<8x32xf32>
      %c0_85 = arith.constant 0 : index
      %c0_86 = arith.constant 0 : index
      %162 = vector.load %arg16[%c0_85, %c0_86] : memref<8x32xf32, #tpu.memory_space<vmem>>, vector<8x32xf32>
      tpu.vector_store %arg16[%c0_85, %c0_86], %161 {strides = array<i32>} : memref<8x32xf32, #tpu.memory_space<vmem>>, vector<8x32xf32>,
      %163 = vector.extract_strided_slice %160 {offsets = [0, 32], sizes = [8, 32], strides = [1, 1]} : vector<8x64xf32> to vector<8x32xf32>
      %c0_87 = arith.constant 0 : index
      %c0_88 = arith.constant 0 : index
      %164 = vector.load %arg17[%c0_87, %c0_88] : memref<8x32xf32, #tpu.memory_space<vmem>>, vector<8x32xf32>
      tpu.vector_store %arg17[%c0_87, %c0_88], %163 {strides = array<i32>} : memref<8x32xf32, #tpu.memory_space<vmem>>, vector<8x32xf32>,
    } else {
    }
    %c8_i32 = arith.constant 8 : i32
    %3 = arith.muli %arg1, %c8_i32 : i32
    %4 = tpu.assume_multiple %3, 8 : i32
    %c0 = arith.constant 0 : index
    %5 = arith.index_cast %4 : i32 to index
    %c0_1 = arith.constant 0 : index
    %6 = vector.load %arg2[%c0, %5, %c0_1] : memref<1x8x32xf32, #tpu.memory_space<vmem>>, vector<1x8x32xf32>
    %7 = vector.shape_cast %6 : vector<1x8x32xf32> to vector<8x32xf32>
    %c0_2 = arith.constant 0 : index
    %c0_3 = arith.constant 0 : index
    %8 = vector.load %arg3[%c0_2, %c0_3] : memref<32x32xf32, #tpu.memory_space<vmem>>, vector<32x32xf32>
    %cst = arith.constant dense<0.000000e+00> : vector<8x32xf32>
    %9 = tpu.matmul %7, %8, %cst {dimension_numbers = #tpu.dot_dimension_numbers<[1], [0], [0], [1], [0, 0, 1, 1], [], []>} : vector<8x32xf32>, vector<32x32xf32>, vector<8x32xf32> -> vector<8x32xf32>
    %10 = vector.extract_strided_slice %9 {offsets = [0, 0], sizes = [8, 8], strides = [1, 1]} : vector<8x32xf32> to vector<8x8xf32>
    %c0_4 = arith.constant 0 : index
    %c0_5 = arith.constant 0 : index
    %11 = vector.load %arg16[%c0_4, %c0_5] : memref<8x32xf32, #tpu.memory_space<vmem>>, vector<8x8xf32>
    %12 = tpu.transpose %11, [1, 0] : vector<8x8xf32> -> vector<8x8xf32>
    %cst_6 = arith.constant dense<0.000000e+00> : vector<8x8xf32>
    %13 = tpu.matmul %10, %12, %cst_6 {dimension_numbers = #tpu.dot_dimension_numbers<[1], [0], [0], [1], [0, 0, 1, 1], [], []>} : vector<8x8xf32>, vector<8x8xf32>, vector<8x8xf32> -> vector<8x8xf32>
    %cst_7 = arith.constant dense<0xFF800000> : vector<8xf32>
    %14 = vector.multi_reduction <maximumf>, %13, %cst_7 [1] : vector<8x8xf32> to vector<8xf32>
    %15 = vector.shape_cast %14 : vector<8xf32> to vector<8x1xf32>
    %16 = vector.broadcast %15 : vector<8x1xf32> to vector<8x8xf32>
    %17 = arith.subf %13, %16 : vector<8x8xf32>
    %18 = math.exp %17 : vector<8x8xf32>
    %cst_8 = arith.constant dense<0.000000e+00> : vector<8xf32>
    %19 = vector.multi_reduction <add>, %18, %cst_8 [1] : vector<8x8xf32> to vector<8xf32>
    %20 = vector.shape_cast %19 : vector<8xf32> to vector<8x1xf32>
    %21 = tpu.reciprocal %20 {approx = true} : vector<8x1xf32> -> vector<8x1xf32>
    %22 = vector.broadcast %21 : vector<8x1xf32> to vector<8x8xf32>
    %23 = arith.mulf %18, %22 : vector<8x8xf32>
    %c0_9 = arith.constant 0 : index
    %c0_10 = arith.constant 0 : index
    %24 = vector.load %arg17[%c0_9, %c0_10] : memref<8x32xf32, #tpu.memory_space<vmem>>, vector<8x8xf32>
    %cst_11 = arith.constant dense<0.000000e+00> : vector<8x8xf32>
    %25 = tpu.matmul %23, %24, %cst_11 {dimension_numbers = #tpu.dot_dimension_numbers<[1], [0], [0], [1], [0, 0, 1, 1], [], []>} : vector<8x8xf32>, vector<8x8xf32>, vector<8x8xf32> -> vector<8x8xf32>
    %c0_12 = arith.constant 0 : index
    %c0_13 = arith.constant 0 : index
    %26 = vector.load %arg18[%c0_12, %c0_13] : memref<8x32xf32, #tpu.memory_space<vmem>>, vector<8x8xf32>
    tpu.vector_store %arg18[%c0_12, %c0_13], %25 {strides = array<i32>} : memref<8x32xf32, #tpu.memory_space<vmem>>, vector<8x8xf32>,
    %27 = vector.extract_strided_slice %9 {offsets = [0, 8], sizes = [8, 8], strides = [1, 1]} : vector<8x32xf32> to vector<8x8xf32>
    %c0_14 = arith.constant 0 : index
    %c8 = arith.constant 8 : index
    %28 = vector.load %arg16[%c0_14, %c8] : memref<8x32xf32, #tpu.memory_space<vmem>>, vector<8x8xf32>
    %29 = tpu.transpose %28, [1, 0] : vector<8x8xf32> -> vector<8x8xf32>
    %cst_15 = arith.constant dense<0.000000e+00> : vector<8x8xf32>
    %30 = tpu.matmul %27, %29, %cst_15 {dimension_numbers = #tpu.dot_dimension_numbers<[1], [0], [0], [1], [0, 0, 1, 1], [], []>} : vector<8x8xf32>, vector<8x8xf32>, vector<8x8xf32> -> vector<8x8xf32>
    %cst_16 = arith.constant dense<0xFF800000> : vector<8xf32>
    %31 = vector.multi_reduction <maximumf>, %30, %cst_16 [1] : vector<8x8xf32> to vector<8xf32>
    %32 = vector.shape_cast %31 : vector<8xf32> to vector<8x1xf32>
    %33 = vector.broadcast %32 : vector<8x1xf32> to vector<8x8xf32>
    %34 = arith.subf %30, %33 : vector<8x8xf32>
    %35 = math.exp %34 : vector<8x8xf32>
    %cst_17 = arith.constant dense<0.000000e+00> : vector<8xf32>
    %36 = vector.multi_reduction <add>, %35, %cst_17 [1] : vector<8x8xf32> to vector<8xf32>
    %37 = vector.shape_cast %36 : vector<8xf32> to vector<8x1xf32>
    %38 = tpu.reciprocal %37 {approx = true} : vector<8x1xf32> -> vector<8x1xf32>
    %39 = vector.broadcast %38 : vector<8x1xf32> to vector<8x8xf32>
    %40 = arith.mulf %35, %39 : vector<8x8xf32>
    %c0_18 = arith.constant 0 : index
    %c8_19 = arith.constant 8 : index
    %41 = vector.load %arg17[%c0_18, %c8_19] : memref<8x32xf32, #tpu.memory_space<vmem>>, vector<8x8xf32>
    %cst_20 = arith.constant dense<0.000000e+00> : vector<8x8xf32>
    %42 = tpu.matmul %40, %41, %cst_20 {dimension_numbers = #tpu.dot_dimension_numbers<[1], [0], [0], [1], [0, 0, 1, 1], [], []>} : vector<8x8xf32>, vector<8x8xf32>, vector<8x8xf32> -> vector<8x8xf32>
    %c0_21 = arith.constant 0 : index
    %c8_22 = arith.constant 8 : index
    %43 = vector.load %arg18[%c0_21, %c8_22] : memref<8x32xf32, #tpu.memory_space<vmem>>, vector<8x8xf32>
    tpu.vector_store %arg18[%c0_21, %c8_22], %42 {strides = array<i32>} : memref<8x32xf32, #tpu.memory_space<vmem>>, vector<8x8xf32>,
    %44 = vector.extract_strided_slice %9 {offsets = [0, 16], sizes = [8, 8], strides = [1, 1]} : vector<8x32xf32> to vector<8x8xf32>
    %c0_23 = arith.constant 0 : index
    %c16 = arith.constant 16 : index
    %45 = vector.load %arg16[%c0_23, %c16] : memref<8x32xf32, #tpu.memory_space<vmem>>, vector<8x8xf32>
    %46 = tpu.transpose %45, [1, 0] : vector<8x8xf32> -> vector<8x8xf32>
    %cst_24 = arith.constant dense<0.000000e+00> : vector<8x8xf32>
    %47 = tpu.matmul %44, %46, %cst_24 {dimension_numbers = #tpu.dot_dimension_numbers<[1], [0], [0], [1], [0, 0, 1, 1], [], []>} : vector<8x8xf32>, vector<8x8xf32>, vector<8x8xf32> -> vector<8x8xf32>
    %cst_25 = arith.constant dense<0xFF800000> : vector<8xf32>
    %48 = vector.multi_reduction <maximumf>, %47, %cst_25 [1] : vector<8x8xf32> to vector<8xf32>
    %49 = vector.shape_cast %48 : vector<8xf32> to vector<8x1xf32>
    %50 = vector.broadcast %49 : vector<8x1xf32> to vector<8x8xf32>
    %51 = arith.subf %47, %50 : vector<8x8xf32>
    %52 = math.exp %51 : vector<8x8xf32>
    %cst_26 = arith.constant dense<0.000000e+00> : vector<8xf32>
    %53 = vector.multi_reduction <add>, %52, %cst_26 [1] : vector<8x8xf32> to vector<8xf32>
    %54 = vector.shape_cast %53 : vector<8xf32> to vector<8x1xf32>
    %55 = tpu.reciprocal %54 {approx = true} : vector<8x1xf32> -> vector<8x1xf32>
    %56 = vector.broadcast %55 : vector<8x1xf32> to vector<8x8xf32>
    %57 = arith.mulf %52, %56 : vector<8x8xf32>
    %c0_27 = arith.constant 0 : index
    %c16_28 = arith.constant 16 : index
    %58 = vector.load %arg17[%c0_27, %c16_28] : memref<8x32xf32, #tpu.memory_space<vmem>>, vector<8x8xf32>
    %cst_29 = arith.constant dense<0.000000e+00> : vector<8x8xf32>
    %59 = tpu.matmul %57, %58, %cst_29 {dimension_numbers = #tpu.dot_dimension_numbers<[1], [0], [0], [1], [0, 0, 1, 1], [], []>} : vector<8x8xf32>, vector<8x8xf32>, vector<8x8xf32> -> vector<8x8xf32>
    %c0_30 = arith.constant 0 : index
    %c16_31 = arith.constant 16 : index
    %60 = vector.load %arg18[%c0_30, %c16_31] : memref<8x32xf32, #tpu.memory_space<vmem>>, vector<8x8xf32>
    tpu.vector_store %arg18[%c0_30, %c16_31], %59 {strides = array<i32>} : memref<8x32xf32, #tpu.memory_space<vmem>>, vector<8x8xf32>,
    %61 = vector.extract_strided_slice %9 {offsets = [0, 24], sizes = [8, 8], strides = [1, 1]} : vector<8x32xf32> to vector<8x8xf32>
    %c0_32 = arith.constant 0 : index
    %c24 = arith.constant 24 : index
    %62 = vector.load %arg16[%c0_32, %c24] : memref<8x32xf32, #tpu.memory_space<vmem>>, vector<8x8xf32>
    %63 = tpu.transpose %62, [1, 0] : vector<8x8xf32> -> vector<8x8xf32>
    %cst_33 = arith.constant dense<0.000000e+00> : vector<8x8xf32>
    %64 = tpu.matmul %61, %63, %cst_33 {dimension_numbers = #tpu.dot_dimension_numbers<[1], [0], [0], [1], [0, 0, 1, 1], [], []>} : vector<8x8xf32>, vector<8x8xf32>, vector<8x8xf32> -> vector<8x8xf32>
    %cst_34 = arith.constant dense<0xFF800000> : vector<8xf32>
    %65 = vector.multi_reduction <maximumf>, %64, %cst_34 [1] : vector<8x8xf32> to vector<8xf32>
    %66 = vector.shape_cast %65 : vector<8xf32> to vector<8x1xf32>
    %67 = vector.broadcast %66 : vector<8x1xf32> to vector<8x8xf32>
    %68 = arith.subf %64, %67 : vector<8x8xf32>
    %69 = math.exp %68 : vector<8x8xf32>
    %cst_35 = arith.constant dense<0.000000e+00> : vector<8xf32>
    %70 = vector.multi_reduction <add>, %69, %cst_35 [1] : vector<8x8xf32> to vector<8xf32>
    %71 = vector.shape_cast %70 : vector<8xf32> to vector<8x1xf32>
    %72 = tpu.reciprocal %71 {approx = true} : vector<8x1xf32> -> vector<8x1xf32>
    %73 = vector.broadcast %72 : vector<8x1xf32> to vector<8x8xf32>
    %74 = arith.mulf %69, %73 : vector<8x8xf32>
    %c0_36 = arith.constant 0 : index
    %c24_37 = arith.constant 24 : index
    %75 = vector.load %arg17[%c0_36, %c24_37] : memref<8x32xf32, #tpu.memory_space<vmem>>, vector<8x8xf32>
    %cst_38 = arith.constant dense<0.000000e+00> : vector<8x8xf32>
    %76 = tpu.matmul %74, %75, %cst_38 {dimension_numbers = #tpu.dot_dimension_numbers<[1], [0], [0], [1], [0, 0, 1, 1], [], []>} : vector<8x8xf32>, vector<8x8xf32>, vector<8x8xf32> -> vector<8x8xf32>
    %c0_39 = arith.constant 0 : index
    %c24_40 = arith.constant 24 : index
    %77 = vector.load %arg18[%c0_39, %c24_40] : memref<8x32xf32, #tpu.memory_space<vmem>>, vector<8x8xf32>
    tpu.vector_store %arg18[%c0_39, %c24_40], %76 {strides = array<i32>} : memref<8x32xf32, #tpu.memory_space<vmem>>, vector<8x8xf32>,
    %c0_41 = arith.constant 0 : index
    %c0_42 = arith.constant 0 : index
    %78 = vector.load %arg18[%c0_41, %c0_42] : memref<8x32xf32, #tpu.memory_space<vmem>>, vector<8x32xf32>
    %c0_43 = arith.constant 0 : index
    %c0_44 = arith.constant 0 : index
    %79 = vector.load %arg5[%c0_43, %c0_44] : memref<32x32xf32, #tpu.memory_space<vmem>>, vector<32x32xf32>
    %cst_45 = arith.constant dense<0.000000e+00> : vector<8x32xf32>
    %80 = tpu.matmul %78, %79, %cst_45 {dimension_numbers = #tpu.dot_dimension_numbers<[1], [0], [0], [1], [0, 0, 1, 1], [], []>} : vector<8x32xf32>, vector<32x32xf32>, vector<8x32xf32> -> vector<8x32xf32>
    %c0_46 = arith.constant 0 : index
    %c0_47 = arith.constant 0 : index
    %81 = vector.load %arg6[%c0_46, %c0_47] : memref<1x32xf32, #tpu.memory_space<vmem>>, vector<1x32xf32>
    %82 = vector.broadcast %81 : vector<1x32xf32> to vector<8x32xf32>
    %83 = arith.addf %80, %82 : vector<8x32xf32>
    %84 = arith.addf %7, %83 : vector<8x32xf32>
    %cst_48 = arith.constant dense<0.000000e+00> : vector<8xf32>
    %85 = vector.multi_reduction <add>, %84, %cst_48 [1] : vector<8x32xf32> to vector<8xf32>
    %86 = vector.shape_cast %85 : vector<8xf32> to vector<8x1xf32>
    %cst_49 = arith.constant 3.200000e+01 : f32
    %87 = vector.broadcast %cst_49 : f32 to vector<8x1xf32>
    %88 = arith.divf %86, %87 : vector<8x1xf32>
    %89 = vector.broadcast %88 : vector<8x1xf32> to vector<8x32xf32>
    %90 = arith.subf %84, %89 : vector<8x32xf32>
    %91 = arith.mulf %90, %90 : vector<8x32xf32>
    %cst_50 = arith.constant dense<0.000000e+00> : vector<8xf32>
    %92 = vector.multi_reduction <add>, %91, %cst_50 [1] : vector<8x32xf32> to vector<8xf32>
    %93 = vector.shape_cast %92 : vector<8xf32> to vector<8x1xf32>
    %cst_51 = arith.constant 3.200000e+01 : f32
    %94 = vector.broadcast %cst_51 : f32 to vector<8x1xf32>
    %95 = arith.divf %93, %94 : vector<8x1xf32>
    %96 = vector.broadcast %88 : vector<8x1xf32> to vector<8x32xf32>
    %97 = arith.subf %84, %96 : vector<8x32xf32>
    %cst_52 = arith.constant 9.99999974E-6 : f32
    %98 = vector.broadcast %cst_52 : f32 to vector<8x1xf32>
    %99 = arith.addf %95, %98 : vector<8x1xf32>
    %100 = math.rsqrt %99 : vector<8x1xf32>
    %101 = vector.broadcast %100 : vector<8x1xf32> to vector<8x32xf32>
    %102 = arith.mulf %97, %101 : vector<8x32xf32>
    %c0_53 = arith.constant 0 : index
    %c0_54 = arith.constant 0 : index
    %103 = vector.load %arg7[%c0_53, %c0_54] : memref<1x32xf32, #tpu.memory_space<vmem>>, vector<1x32xf32>
    %104 = vector.broadcast %103 : vector<1x32xf32> to vector<8x32xf32>
    %105 = arith.mulf %102, %104 : vector<8x32xf32>
    %c0_55 = arith.constant 0 : index
    %c0_56 = arith.constant 0 : index
    %106 = vector.load %arg8[%c0_55, %c0_56] : memref<1x32xf32, #tpu.memory_space<vmem>>, vector<1x32xf32>
    %107 = vector.broadcast %106 : vector<1x32xf32> to vector<8x32xf32>
    %108 = arith.addf %105, %107 : vector<8x32xf32>
    %cst_57 = arith.constant 0.000000e+00 : f32
    %109 = vector.broadcast %cst_57 : f32 to vector<8x32xf32>
    %c0_i32_58 = arith.constant 0 : i32
    %c128_i32 = arith.constant 128 : i32
    %110 = arith.muli %c0_i32_58, %c128_i32 : i32
    %111 = tpu.assume_multiple %110, 128 : i32
    %112 = arith.index_cast %111 : i32 to index
    %c0_59 = arith.constant 0 : index
    %113 = vector.load %arg9[%112, %c0_59] : memref<128x32xf32, #tpu.memory_space<vmem>>, vector<128x32xf32>
    %114 = tpu.transpose %113, [1, 0] : vector<128x32xf32> -> vector<32x128xf32>
    %cst_60 = arith.constant dense<0.000000e+00> : vector<8x128xf32>
    %115 = tpu.matmul %108, %114, %cst_60 {dimension_numbers = #tpu.dot_dimension_numbers<[1], [0], [0], [1], [0, 0, 1, 1], [], []>} : vector<8x32xf32>, vector<32x128xf32>, vector<8x128xf32> -> vector<8x128xf32>
    %116 = arith.index_cast %c0_i32_58 : i32 to index
    %c0_61 = arith.constant 0 : index
    %117 = vector.load %arg10[%116, %c0_61] : memref<1x128xf32, #tpu.memory_space<vmem>>, vector<1x128xf32>
    %118 = vector.broadcast %117 : vector<1x128xf32> to vector<8x128xf32>
    %119 = arith.addf %115, %118 : vector<8x128xf32>
    %cst_62 = arith.constant 0.000000e+00 : f32
    %120 = vector.broadcast %cst_62 : f32 to vector<8x128xf32>
    %121 = arith.maximumf %119, %120 : vector<8x128xf32>
    %122 = arith.index_cast %111 : i32 to index
    %c0_63 = arith.constant 0 : index
    %123 = vector.load %arg11[%122, %c0_63] : memref<128x32xf32, #tpu.memory_space<vmem>>, vector<128x32xf32>
    %cst_64 = arith.constant dense<0.000000e+00> : vector<8x32xf32>
    %124 = tpu.matmul %121, %123, %cst_64 {dimension_numbers = #tpu.dot_dimension_numbers<[1], [0], [0], [1], [0, 0, 1, 1], [], []>} : vector<8x128xf32>, vector<128x32xf32>, vector<8x32xf32> -> vector<8x32xf32>
    %125 = arith.addf %109, %124 : vector<8x32xf32>
    %c1_i32 = arith.constant 1 : i32
    %c0_65 = arith.constant 0 : index
    %c0_66 = arith.constant 0 : index
    %126 = vector.load %arg12[%c0_65, %c0_66] : memref<1x32xf32, #tpu.memory_space<vmem>>, vector<1x32xf32>
    %127 = vector.broadcast %126 : vector<1x32xf32> to vector<8x32xf32>
    %128 = arith.addf %125, %127 : vector<8x32xf32>
    %129 = arith.addf %108, %128 : vector<8x32xf32>
    %cst_67 = arith.constant dense<0.000000e+00> : vector<8xf32>
    %130 = vector.multi_reduction <add>, %129, %cst_67 [1] : vector<8x32xf32> to vector<8xf32>
    %131 = vector.shape_cast %130 : vector<8xf32> to vector<8x1xf32>
    %cst_68 = arith.constant 3.200000e+01 : f32
    %132 = vector.broadcast %cst_68 : f32 to vector<8x1xf32>
    %133 = arith.divf %131, %132 : vector<8x1xf32>
    %134 = vector.broadcast %133 : vector<8x1xf32> to vector<8x32xf32>
    %135 = arith.subf %129, %134 : vector<8x32xf32>
    %136 = arith.mulf %135, %135 : vector<8x32xf32>
    %cst_69 = arith.constant dense<0.000000e+00> : vector<8xf32>
    %137 = vector.multi_reduction <add>, %136, %cst_69 [1] : vector<8x32xf32> to vector<8xf32>
    %138 = vector.shape_cast %137 : vector<8xf32> to vector<8x1xf32>
    %cst_70 = arith.constant 3.200000e+01 : f32
    %139 = vector.broadcast %cst_70 : f32 to vector<8x1xf32>
    %140 = arith.divf %138, %139 : vector<8x1xf32>
    %141 = vector.broadcast %133 : vector<8x1xf32> to vector<8x32xf32>
    %142 = arith.subf %129, %141 : vector<8x32xf32>
    %cst_71 = arith.constant 9.99999974E-6 : f32
    %143 = vector.broadcast %cst_71 : f32 to vector<8x1xf32>
    %144 = arith.addf %140, %143 : vector<8x1xf32>
    %145 = math.rsqrt %144 : vector<8x1xf32>
    %146 = vector.broadcast %145 : vector<8x1xf32> to vector<8x32xf32>
    %147 = arith.mulf %142, %146 : vector<8x32xf32>
    %c0_72 = arith.constant 0 : index
    %c0_73 = arith.constant 0 : index
    %148 = vector.load %arg13[%c0_72, %c0_73] : memref<1x32xf32, #tpu.memory_space<vmem>>, vector<1x32xf32>
    %149 = vector.broadcast %148 : vector<1x32xf32> to vector<8x32xf32>
    %150 = arith.mulf %147, %149 : vector<8x32xf32>
    %c0_74 = arith.constant 0 : index
    %c0_75 = arith.constant 0 : index
    %151 = vector.load %arg14[%c0_74, %c0_75] : memref<1x32xf32, #tpu.memory_space<vmem>>, vector<1x32xf32>
    %152 = vector.broadcast %151 : vector<1x32xf32> to vector<8x32xf32>
    %153 = arith.addf %150, %152 : vector<8x32xf32>
    %c0_76 = arith.constant 0 : index
    %c0_77 = arith.constant 0 : index
    %c0_78 = arith.constant 0 : index
    %154 = vector.load %arg15[%c0_76, %c0_77, %c0_78] : memref<1x8x32xf32, #tpu.memory_space<vmem>>, vector<1x8x32xf32>
    %155 = vector.shape_cast %154 : vector<1x8x32xf32> to vector<8x32xf32>
    %156 = vector.shape_cast %153 : vector<8x32xf32> to vector<1x8x32xf32>
    tpu.vector_store %arg15[%c0_76, %c0_77, %c0_78], %156 {strides = array<i32>} : memref<1x8x32xf32, #tpu.memory_space<vmem>>, vector<1x8x32xf32>,
    return
  }
  func.func @transform_0(%arg0: i32, %arg1: i32) -> (i32, i32, i32) {
    %c0_i32 = arith.constant 0 : i32
    %c0_i32_0 = arith.constant 0 : i32
    %c0_i32_1 = arith.constant 0 : i32
    return %arg0, %c0_i32, %c0_i32_0 : i32, i32, i32
  }
  func.func @transform_1(%arg0: i32, %arg1: i32) -> (i32, i32) {
    %c0_i32 = arith.constant 0 : i32
    %c0_i32_0 = arith.constant 0 : i32
    %c0_i32_1 = arith.constant 0 : i32
    return %c0_i32, %c0_i32_0 : i32, i32
  }
  func.func @transform_2(%arg0: i32, %arg1: i32) -> (i32, i32) {
    %c0_i32 = arith.constant 0 : i32
    %c0_i32_0 = arith.constant 0 : i32
    %c0_i32_1 = arith.constant 0 : i32
    return %c0_i32, %c0_i32_0 : i32, i32
  }
  func.func @transform_3(%arg0: i32, %arg1: i32) -> (i32, i32) {
    %c0_i32 = arith.constant 0 : i32
    %c0_i32_0 = arith.constant 0 : i32
    %c0_i32_1 = arith.constant 0 : i32
    return %c0_i32, %c0_i32_0 : i32, i32
  }
  func.func @transform_4(%arg0: i32, %arg1: i32) -> (i32, i32) {
    %c0_i32 = arith.constant 0 : i32
    %c0_i32_0 = arith.constant 0 : i32
    %c0_i32_1 = arith.constant 0 : i32
    return %c0_i32, %c0_i32_0 : i32, i32
  }
  func.func @transform_5(%arg0: i32, %arg1: i32) -> (i32, i32) {
    %c0_i32 = arith.constant 0 : i32
    %c0_i32_0 = arith.constant 0 : i32
    %c0_i32_1 = arith.constant 0 : i32
    return %c0_i32, %c0_i32_0 : i32, i32
  }
  func.func @transform_6(%arg0: i32, %arg1: i32) -> (i32, i32) {
    %c0_i32 = arith.constant 0 : i32
    %c0_i32_0 = arith.constant 0 : i32
    %c0_i32_1 = arith.constant 0 : i32
    return %c0_i32, %c0_i32_0 : i32, i32
  }
  func.func @transform_7(%arg0: i32, %arg1: i32) -> (i32, i32) {
    %c0_i32 = arith.constant 0 : i32
    %c0_i32_0 = arith.constant 0 : i32
    %c0_i32_1 = arith.constant 0 : i32
    return %c0_i32, %c0_i32_0 : i32, i32
  }
  func.func @transform_8(%arg0: i32, %arg1: i32) -> (i32, i32) {
    %c0_i32 = arith.constant 0 : i32
    %c0_i32_0 = arith.constant 0 : i32
    %c0_i32_1 = arith.constant 0 : i32
    return %c0_i32, %c0_i32_0 : i32, i32
  }
  func.func @transform_9(%arg0: i32, %arg1: i32) -> (i32, i32) {
    %c0_i32 = arith.constant 0 : i32
    %c0_i32_0 = arith.constant 0 : i32
    %c0_i32_1 = arith.constant 0 : i32
    return %c0_i32, %c0_i32_0 : i32, i32
  }
  func.func @transform_10(%arg0: i32, %arg1: i32) -> (i32, i32) {
    %c0_i32 = arith.constant 0 : i32
    %c0_i32_0 = arith.constant 0 : i32
    %c0_i32_1 = arith.constant 0 : i32
    return %c0_i32, %c0_i32_0 : i32, i32
  }
  func.func @transform_11(%arg0: i32, %arg1: i32) -> (i32, i32) {
    %c0_i32 = arith.constant 0 : i32
    %c0_i32_0 = arith.constant 0 : i32
    %c0_i32_1 = arith.constant 0 : i32
    return %c0_i32, %c0_i32_0 : i32, i32
  }
  func.func @transform_12(%arg0: i32, %arg1: i32) -> (i32, i32) {
    %c0_i32 = arith.constant 0 : i32
    %c0_i32_0 = arith.constant 0 : i32
    %c0_i32_1 = arith.constant 0 : i32
    return %c0_i32, %c0_i32_0 : i32, i32
  }
  func.func @transform_13(%arg0: i32, %arg1: i32) -> (i32, i32, i32) {
    %c0_i32 = arith.constant 0 : i32
    %c0_i32_0 = arith.constant 0 : i32
    return %arg0, %arg1, %c0_i32 : i32, i32, i32
  }
}

module attributes {stable_mosaic.version = 11 : i64} {
  func.func @transformer_block_kernel(%arg0: i32, %arg1: i32, %arg2: memref<1x8x32xf32, #tpu.memory_space<vmem>>, %arg3: memref<32x32xf32, #tpu.memory_space<vmem>>, %arg4: memref<32x64xf32, #tpu.memory_space<vmem>>, %arg5: memref<32x32xf32, #tpu.memory_space<vmem>>, %arg6: memref<1x32xf32, #tpu.memory_space<vmem>>, %arg7: memref<1x32xf32, #tpu.memory_space<vmem>>, %arg8: memref<1x32xf32, #tpu.memory_space<vmem>>, %arg9: memref<128x32xf32, #tpu.memory_space<vmem>>, %arg10: memref<1x128xf32, #tpu.memory_space<vmem>>, %arg11: memref<128x32xf32, #tpu.memory_space<vmem>>, %arg12: memref<1x32xf32, #tpu.memory_space<vmem>>, %arg13: memref<1x32xf32, #tpu.memory_space<vmem>>, %arg14: memref<1x32xf32, #tpu.memory_space<vmem>>, %arg15: memref<1x8x32xf32, #tpu.memory_space<vmem>>, %arg16: memref<8x32xf32, #tpu.memory_space<vmem>>, %arg17: memref<8x32xf32, #tpu.memory_space<vmem>>, %arg18: memref<8x32xf32, #tpu.memory_space<vmem>>) attributes {dimension_semantics = [#tpu.dimension_semantics<parallel>, #tpu.dimension_semantics<arbitrary>], iteration_bounds = array<i64: 2, 1>, scalar_prefetch = 0 : i64, scratch_operands = 3 : i64, tpu.core_type = #tpu.core_type<tc>, window_params = [{transform_indices = @transform_0, window_bounds = array<i64: 1, 8, 32>}, {pipeline_mode = #tpu.pipeline_mode<synchronous>, transform_indices = @transform_1, window_bounds = array<i64: 32, 32>}, {pipeline_mode = #tpu.pipeline_mode<synchronous>, transform_indices = @transform_2, window_bounds = array<i64: 32, 64>}, {pipeline_mode = #tpu.pipeline_mode<synchronous>, transform_indices = @transform_3, window_bounds = array<i64: 32, 32>}, {pipeline_mode = #tpu.pipeline_mode<synchronous>, transform_indices = @transform_4, window_bounds = array<i64: 1, 32>}, {pipeline_mode = #tpu.pipeline_mode<synchronous>, transform_indices = @transform_5, window_bounds = array<i64: 1, 32>}, {pipeline_mode = #tpu.pipeline_mode<synchronous>, transform_indices = @transform_6, window_bounds = array<i64: 1, 32>}, {pipeline_mode = #tpu.pipeline_mode<synchronous>, transform_indices = @transform_7, window_bounds = array<i64: 128, 32>}, {pipeline_mode = #tpu.pipeline_mode<synchronous>, transform_indices = @transform_8, window_bounds = array<i64: 1, 128>}, {pipeline_mode = #tpu.pipeline_mode<synchronous>, transform_indices = @transform_9, window_bounds = array<i64: 128, 32>}, {pipeline_mode = #tpu.pipeline_mode<synchronous>, transform_indices = @transform_10, window_bounds = array<i64: 1, 32>}, {pipeline_mode = #tpu.pipeline_mode<synchronous>, transform_indices = @transform_11, window_bounds = array<i64: 1, 32>}, {pipeline_mode = #tpu.pipeline_mode<synchronous>, transform_indices = @transform_12, window_bounds = array<i64: 1, 32>}, {transform_indices = @transform_13, window_bounds = array<i64: 1, 8, 32>}]} {
    %c0_i32 = arith.constant 0 : i32
    %0 = arith.cmpi eq, %arg1, %c0_i32 : i32
    %1 = arith.extui %0 : i1 to i32
    %c0_i32_0 = arith.constant 0 : i32
    %2 = arith.cmpi ne, %1, %c0_i32_0 : i32
    scf.if %2 {
      %c0_79 = arith.constant 0 : index
      %c0_80 = arith.constant 0 : index
      %c0_81 = arith.constant 0 : index
      %157 = vector.load %arg2[%c0_79, %c0_80, %c0_81] : memref<1x8x32xf32, #tpu.memory_space<vmem>>, vector<1x8x32xf32>
      %158 = vector.shape_cast %157 : vector<1x8x32xf32> to vector<8x32xf32>
      %c0_82 = arith.constant 0 : index
      %c0_83 = arith.constant 0 : index
      %159 = vector.load %arg4[%c0_82, %c0_83] : memref<32x64xf32, #tpu.memory_space<vmem>>, vector<32x64xf32>
      %cst_84 = arith.constant dense<0.000000e+00> : vector<8x64xf32>
      %160 = tpu.matmul %158, %159, %cst_84 {dimension_numbers = #tpu.dot_dimension_numbers<[1], [0], [0], [1], [0, 0, 1, 1], [], []>} : vector<8x32xf32>, vector<32x64xf32>, vector<8x64xf32> -> vector<8x64xf32>
      %161 = vector.extract_strided_slice %160 {offsets = [0, 0], sizes = [8, 32], strides = [1, 1]} : vector<8x64xf32> to vector<8x32xf32>
      %c0_85 = arith.constant 0 : index
      %c0_86 = arith.constant 0 : index
      %162 = vector.load %arg16[%c0_85, %c0_86] : memref<8x32xf32, #tpu.memory_space<vmem>>, vector<8x32xf32>
      tpu.vector_store %arg16[%c0_85, %c0_86], %161 {strides = array<i32>} : memref<8x32xf32, #tpu.memory_space<vmem>>, vector<8x32xf32>,
      %163 = vector.extract_strided_slice %160 {offsets = [0, 32], sizes = [8, 32], strides = [1, 1]} : vector<8x64xf32> to vector<8x32xf32>
      %c0_87 = arith.constant 0 : index
      %c0_88 = arith.constant 0 : index
      %164 = vector.load %arg17[%c0_87, %c0_88] : memref<8x32xf32, #tpu.memory_space<vmem>>, vector<8x32xf32>
      tpu.vector_store %arg17[%c0_87, %c0_88], %163 {strides = array<i32>} : memref<8x32xf32, #tpu.memory_space<vmem>>, vector<8x32xf32>,
    } else {
    }
    %c8_i32 = arith.constant 8 : i32
    %3 = arith.muli %arg1, %c8_i32 : i32
    %4 = tpu.assume_multiple %3, 8 : i32
    %c0 = arith.constant 0 : index
    %5 = arith.index_cast %4 : i32 to index
    %c0_1 = arith.constant 0 : index
    %6 = vector.load %arg2[%c0, %5, %c0_1] : memref<1x8x32xf32, #tpu.memory_space<vmem>>, vector<1x8x32xf32>
    %7 = vector.shape_cast %6 : vector<1x8x32xf32> to vector<8x32xf32>
    %c0_2 = arith.constant 0 : index
    %c0_3 = arith.constant 0 : index
    %8 = vector.load %arg3[%c0_2, %c0_3] : memref<32x32xf32, #tpu.memory_space<vmem>>, vector<32x32xf32>
    %cst = arith.constant dense<0.000000e+00> : vector<8x32xf32>
    %9 = tpu.matmul %7, %8, %cst {dimension_numbers = #tpu.dot_dimension_numbers<[1], [0], [0], [1], [0, 0, 1, 1], [], []>} : vector<8x32xf32>, vector<32x32xf32>, vector<8x32xf32> -> vector<8x32xf32>
    %10 = vector.extract_strided_slice %9 {offsets = [0, 0], sizes = [8, 8], strides = [1, 1]} : vector<8x32xf32> to vector<8x8xf32>
    %c0_4 = arith.constant 0 : index
    %c0_5 = arith.constant 0 : index
    %11 = vector.load %arg16[%c0_4, %c0_5] : memref<8x32xf32, #tpu.memory_space<vmem>>, vector<8x8xf32>
    %12 = tpu.transpose %11, [1, 0] : vector<8x8xf32> -> vector<8x8xf32>
    %cst_6 = arith.constant dense<0.000000e+00> : vector<8x8xf32>
    %13 = tpu.matmul %10, %12, %cst_6 {dimension_numbers = #tpu.dot_dimension_numbers<[1], [0], [0], [1], [0, 0, 1, 1], [], []>} : vector<8x8xf32>, vector<8x8xf32>, vector<8x8xf32> -> vector<8x8xf32>
    %cst_7 = arith.constant dense<0xFF800000> : vector<8xf32>
    %14 = vector.multi_reduction <maximumf>, %13, %cst_7 [1] : vector<8x8xf32> to vector<8xf32>
    %15 = vector.shape_cast %14 : vector<8xf32> to vector<8x1xf32>
    %16 = vector.broadcast %15 : vector<8x1xf32> to vector<8x8xf32>
    %17 = arith.subf %13, %16 : vector<8x8xf32>
    %18 = math.exp %17 : vector<8x8xf32>
    %cst_8 = arith.constant dense<0.000000e+00> : vector<8xf32>
    %19 = vector.multi_reduction <add>, %18, %cst_8 [1] : vector<8x8xf32> to vector<8xf32>
    %20 = vector.shape_cast %19 : vector<8xf32> to vector<8x1xf32>
    %21 = tpu.reciprocal %20 {approx = true} : vector<8x1xf32> -> vector<8x1xf32>
    %22 = vector.broadcast %21 : vector<8x1xf32> to vector<8x8xf32>
    %23 = arith.mulf %18, %22 : vector<8x8xf32>
    %c0_9 = arith.constant 0 : index
    %c0_10 = arith.constant 0 : index
    %24 = vector.load %arg17[%c0_9, %c0_10] : memref<8x32xf32, #tpu.memory_space<vmem>>, vector<8x8xf32>
    %cst_11 = arith.constant dense<0.000000e+00> : vector<8x8xf32>
    %25 = tpu.matmul %23, %24, %cst_11 {dimension_numbers = #tpu.dot_dimension_numbers<[1], [0], [0], [1], [0, 0, 1, 1], [], []>} : vector<8x8xf32>, vector<8x8xf32>, vector<8x8xf32> -> vector<8x8xf32>
    %c0_12 = arith.constant 0 : index
    %c0_13 = arith.constant 0 : index
    %26 = vector.load %arg18[%c0_12, %c0_13] : memref<8x32xf32, #tpu.memory_space<vmem>>, vector<8x8xf32>
    tpu.vector_store %arg18[%c0_12, %c0_13], %25 {strides = array<i32>} : memref<8x32xf32, #tpu.memory_space<vmem>>, vector<8x8xf32>,
    %27 = vector.extract_strided_slice %9 {offsets = [0, 8], sizes = [8, 8], strides = [1, 1]} : vector<8x32xf32> to vector<8x8xf32>
    %c0_14 = arith.constant 0 : index
    %c8 = arith.constant 8 : index
    %28 = vector.load %arg16[%c0_14, %c8] : memref<8x32xf32, #tpu.memory_space<vmem>>, vector<8x8xf32>
    %29 = tpu.transpose %28, [1, 0] : vector<8x8xf32> -> vector<8x8xf32>
    %cst_15 = arith.constant dense<0.000000e+00> : vector<8x8xf32>
    %30 = tpu.matmul %27, %29, %cst_15 {dimension_numbers = #tpu.dot_dimension_numbers<[1], [0], [0], [1], [0, 0, 1, 1], [], []>} : vector<8x8xf32>, vector<8x8xf32>, vector<8x8xf32> -> vector<8x8xf32>
    %cst_16 = arith.constant dense<0xFF800000> : vector<8xf32>
    %31 = vector.multi_reduction <maximumf>, %30, %cst_16 [1] : vector<8x8xf32> to vector<8xf32>
    %32 = vector.shape_cast %31 : vector<8xf32> to vector<8x1xf32>
    %33 = vector.broadcast %32 : vector<8x1xf32> to vector<8x8xf32>
    %34 = arith.subf %30, %33 : vector<8x8xf32>
    %35 = math.exp %34 : vector<8x8xf32>
    %cst_17 = arith.constant dense<0.000000e+00> : vector<8xf32>
    %36 = vector.multi_reduction <add>, %35, %cst_17 [1] : vector<8x8xf32> to vector<8xf32>
    %37 = vector.shape_cast %36 : vector<8xf32> to vector<8x1xf32>
    %38 = tpu.reciprocal %37 {approx = true} : vector<8x1xf32> -> vector<8x1xf32>
    %39 = vector.broadcast %38 : vector<8x1xf32> to vector<8x8xf32>
    %40 = arith.mulf %35, %39 : vector<8x8xf32>
    %c0_18 = arith.constant 0 : index
    %c8_19 = arith.constant 8 : index
    %41 = vector.load %arg17[%c0_18, %c8_19] : memref<8x32xf32, #tpu.memory_space<vmem>>, vector<8x8xf32>
    %cst_20 = arith.constant dense<0.000000e+00> : vector<8x8xf32>
    %42 = tpu.matmul %40, %41, %cst_20 {dimension_numbers = #tpu.dot_dimension_numbers<[1], [0], [0], [1], [0, 0, 1, 1], [], []>} : vector<8x8xf32>, vector<8x8xf32>, vector<8x8xf32> -> vector<8x8xf32>
    %c0_21 = arith.constant 0 : index
    %c8_22 = arith.constant 8 : index
    %43 = vector.load %arg18[%c0_21, %c8_22] : memref<8x32xf32, #tpu.memory_space<vmem>>, vector<8x8xf32>
    tpu.vector_store %arg18[%c0_21, %c8_22], %42 {strides = array<i32>} : memref<8x32xf32, #tpu.memory_space<vmem>>, vector<8x8xf32>,
    %44 = vector.extract_strided_slice %9 {offsets = [0, 16], sizes = [8, 8], strides = [1, 1]} : vector<8x32xf32> to vector<8x8xf32>
    %c0_23 = arith.constant 0 : index
    %c16 = arith.constant 16 : index
    %45 = vector.load %arg16[%c0_23, %c16] : memref<8x32xf32, #tpu.memory_space<vmem>>, vector<8x8xf32>
    %46 = tpu.transpose %45, [1, 0] : vector<8x8xf32> -> vector<8x8xf32>
    %cst_24 = arith.constant dense<0.000000e+00> : vector<8x8xf32>
    %47 = tpu.matmul %44, %46, %cst_24 {dimension_numbers = #tpu.dot_dimension_numbers<[1], [0], [0], [1], [0, 0, 1, 1], [], []>} : vector<8x8xf32>, vector<8x8xf32>, vector<8x8xf32> -> vector<8x8xf32>
    %cst_25 = arith.constant dense<0xFF800000> : vector<8xf32>
    %48 = vector.multi_reduction <maximumf>, %47, %cst_25 [1] : vector<8x8xf32> to vector<8xf32>
    %49 = vector.shape_cast %48 : vector<8xf32> to vector<8x1xf32>
    %50 = vector.broadcast %49 : vector<8x1xf32> to vector<8x8xf32>
    %51 = arith.subf %47, %50 : vector<8x8xf32>
    %52 = math.exp %51 : vector<8x8xf32>
    %cst_26 = arith.constant dense<0.000000e+00> : vector<8xf32>
    %53 = vector.multi_reduction <add>, %52, %cst_26 [1] : vector<8x8xf32> to vector<8xf32>
    %54 = vector.shape_cast %53 : vector<8xf32> to vector<8x1xf32>
    %55 = tpu.reciprocal %54 {approx = true} : vector<8x1xf32> -> vector<8x1xf32>
    %56 = vector.broadcast %55 : vector<8x1xf32> to vector<8x8xf32>
    %57 = arith.mulf %52, %56 : vector<8x8xf32>
    %c0_27 = arith.constant 0 : index
    %c16_28 = arith.constant 16 : index
    %58 = vector.load %arg17[%c0_27, %c16_28] : memref<8x32xf32, #tpu.memory_space<vmem>>, vector<8x8xf32>
    %cst_29 = arith.constant dense<0.000000e+00> : vector<8x8xf32>
    %59 = tpu.matmul %57, %58, %cst_29 {dimension_numbers = #tpu.dot_dimension_numbers<[1], [0], [0], [1], [0, 0, 1, 1], [], []>} : vector<8x8xf32>, vector<8x8xf32>, vector<8x8xf32> -> vector<8x8xf32>
    %c0_30 = arith.constant 0 : index
    %c16_31 = arith.constant 16 : index
    %60 = vector.load %arg18[%c0_30, %c16_31] : memref<8x32xf32, #tpu.memory_space<vmem>>, vector<8x8xf32>
    tpu.vector_store %arg18[%c0_30, %c16_31], %59 {strides = array<i32>} : memref<8x32xf32, #tpu.memory_space<vmem>>, vector<8x8xf32>,
    %61 = vector.extract_strided_slice %9 {offsets = [0, 24], sizes = [8, 8], strides = [1, 1]} : vector<8x32xf32> to vector<8x8xf32>
    %c0_32 = arith.constant 0 : index
    %c24 = arith.constant 24 : index
    %62 = vector.load %arg16[%c0_32, %c24] : memref<8x32xf32, #tpu.memory_space<vmem>>, vector<8x8xf32>
    %63 = tpu.transpose %62, [1, 0] : vector<8x8xf32> -> vector<8x8xf32>
    %cst_33 = arith.constant dense<0.000000e+00> : vector<8x8xf32>
    %64 = tpu.matmul %61, %63, %cst_33 {dimension_numbers = #tpu.dot_dimension_numbers<[1], [0], [0], [1], [0, 0, 1, 1], [], []>} : vector<8x8xf32>, vector<8x8xf32>, vector<8x8xf32> -> vector<8x8xf32>
    %cst_34 = arith.constant dense<0xFF800000> : vector<8xf32>
    %65 = vector.multi_reduction <maximumf>, %64, %cst_34 [1] : vector<8x8xf32> to vector<8xf32>
    %66 = vector.shape_cast %65 : vector<8xf32> to vector<8x1xf32>
    %67 = vector.broadcast %66 : vector<8x1xf32> to vector<8x8xf32>
    %68 = arith.subf %64, %67 : vector<8x8xf32>
    %69 = math.exp %68 : vector<8x8xf32>
    %cst_35 = arith.constant dense<0.000000e+00> : vector<8xf32>
    %70 = vector.multi_reduction <add>, %69, %cst_35 [1] : vector<8x8xf32> to vector<8xf32>
    %71 = vector.shape_cast %70 : vector<8xf32> to vector<8x1xf32>
    %72 = tpu.reciprocal %71 {approx = true} : vector<8x1xf32> -> vector<8x1xf32>
    %73 = vector.broadcast %72 : vector<8x1xf32> to vector<8x8xf32>
    %74 = arith.mulf %69, %73 : vector<8x8xf32>
    %c0_36 = arith.constant 0 : index
    %c24_37 = arith.constant 24 : index
    %75 = vector.load %arg17[%c0_36, %c24_37] : memref<8x32xf32, #tpu.memory_space<vmem>>, vector<8x8xf32>
    %cst_38 = arith.constant dense<0.000000e+00> : vector<8x8xf32>
    %76 = tpu.matmul %74, %75, %cst_38 {dimension_numbers = #tpu.dot_dimension_numbers<[1], [0], [0], [1], [0, 0, 1, 1], [], []>} : vector<8x8xf32>, vector<8x8xf32>, vector<8x8xf32> -> vector<8x8xf32>
    %c0_39 = arith.constant 0 : index
    %c24_40 = arith.constant 24 : index
    %77 = vector.load %arg18[%c0_39, %c24_40] : memref<8x32xf32, #tpu.memory_space<vmem>>, vector<8x8xf32>
    tpu.vector_store %arg18[%c0_39, %c24_40], %76 {strides = array<i32>} : memref<8x32xf32, #tpu.memory_space<vmem>>, vector<8x8xf32>,
    %c0_41 = arith.constant 0 : index
    %c0_42 = arith.constant 0 : index
    %78 = vector.load %arg18[%c0_41, %c0_42] : memref<8x32xf32, #tpu.memory_space<vmem>>, vector<8x32xf32>
    %c0_43 = arith.constant 0 : index
    %c0_44 = arith.constant 0 : index
    %79 = vector.load %arg5[%c0_43, %c0_44] : memref<32x32xf32, #tpu.memory_space<vmem>>, vector<32x32xf32>
    %cst_45 = arith.constant dense<0.000000e+00> : vector<8x32xf32>
    %80 = tpu.matmul %78, %79, %cst_45 {dimension_numbers = #tpu.dot_dimension_numbers<[1], [0], [0], [1], [0, 0, 1, 1], [], []>} : vector<8x32xf32>, vector<32x32xf32>, vector<8x32xf32> -> vector<8x32xf32>
    %c0_46 = arith.constant 0 : index
    %c0_47 = arith.constant 0 : index
    %81 = vector.load %arg6[%c0_46, %c0_47] : memref<1x32xf32, #tpu.memory_space<vmem>>, vector<1x32xf32>
    %82 = vector.broadcast %81 : vector<1x32xf32> to vector<8x32xf32>
    %83 = arith.addf %80, %82 : vector<8x32xf32>
    %84 = arith.addf %7, %83 : vector<8x32xf32>
    %cst_48 = arith.constant dense<0.000000e+00> : vector<8xf32>
    %85 = vector.multi_reduction <add>, %84, %cst_48 [1] : vector<8x32xf32> to vector<8xf32>
    %86 = vector.shape_cast %85 : vector<8xf32> to vector<8x1xf32>
    %cst_49 = arith.constant 3.200000e+01 : f32
    %87 = vector.broadcast %cst_49 : f32 to vector<8x1xf32>
    %88 = arith.divf %86, %87 : vector<8x1xf32>
    %89 = vector.broadcast %88 : vector<8x1xf32> to vector<8x32xf32>
    %90 = arith.subf %84, %89 : vector<8x32xf32>
    %91 = arith.mulf %90, %90 : vector<8x32xf32>
    %cst_50 = arith.constant dense<0.000000e+00> : vector<8xf32>
    %92 = vector.multi_reduction <add>, %91, %cst_50 [1] : vector<8x32xf32> to vector<8xf32>
    %93 = vector.shape_cast %92 : vector<8xf32> to vector<8x1xf32>
    %cst_51 = arith.constant 3.200000e+01 : f32
    %94 = vector.broadcast %cst_51 : f32 to vector<8x1xf32>
    %95 = arith.divf %93, %94 : vector<8x1xf32>
    %96 = vector.broadcast %88 : vector<8x1xf32> to vector<8x32xf32>
    %97 = arith.subf %84, %96 : vector<8x32xf32>
    %cst_52 = arith.constant 9.99999974E-6 : f32
    %98 = vector.broadcast %cst_52 : f32 to vector<8x1xf32>
    %99 = arith.addf %95, %98 : vector<8x1xf32>
    %100 = math.rsqrt %99 : vector<8x1xf32>
    %101 = vector.broadcast %100 : vector<8x1xf32> to vector<8x32xf32>
    %102 = arith.mulf %97, %101 : vector<8x32xf32>
    %c0_53 = arith.constant 0 : index
    %c0_54 = arith.constant 0 : index
    %103 = vector.load %arg7[%c0_53, %c0_54] : memref<1x32xf32, #tpu.memory_space<vmem>>, vector<1x32xf32>
    %104 = vector.broadcast %103 : vector<1x32xf32> to vector<8x32xf32>
    %105 = arith.mulf %102, %104 : vector<8x32xf32>
    %c0_55 = arith.constant 0 : index
    %c0_56 = arith.constant 0 : index
    %106 = vector.load %arg8[%c0_55, %c0_56] : memref<1x32xf32, #tpu.memory_space<vmem>>, vector<1x32xf32>
    %107 = vector.broadcast %106 : vector<1x32xf32> to vector<8x32xf32>
    %108 = arith.addf %105, %107 : vector<8x32xf32>
    %cst_57 = arith.constant 0.000000e+00 : f32
    %109 = vector.broadcast %cst_57 : f32 to vector<8x32xf32>
    %c0_i32_58 = arith.constant 0 : i32
    %c128_i32 = arith.constant 128 : i32
    %110 = arith.muli %c0_i32_58, %c128_i32 : i32
    %111 = tpu.assume_multiple %110, 128 : i32
    %112 = arith.index_cast %111 : i32 to index
    %c0_59 = arith.constant 0 : index
    %113 = vector.load %arg9[%112, %c0_59] : memref<128x32xf32, #tpu.memory_space<vmem>>, vector<128x32xf32>
    %114 = tpu.transpose %113, [1, 0] : vector<128x32xf32> -> vector<32x128xf32>
    %cst_60 = arith.constant dense<0.000000e+00> : vector<8x128xf32>
    %115 = tpu.matmul %108, %114, %cst_60 {dimension_numbers = #tpu.dot_dimension_numbers<[1], [0], [0], [1], [0, 0, 1, 1], [], []>} : vector<8x32xf32>, vector<32x128xf32>, vector<8x128xf32> -> vector<8x128xf32>
    %116 = arith.index_cast %c0_i32_58 : i32 to index
    %c0_61 = arith.constant 0 : index
    %117 = vector.load %arg10[%116, %c0_61] : memref<1x128xf32, #tpu.memory_space<vmem>>, vector<1x128xf32>
    %118 = vector.broadcast %117 : vector<1x128xf32> to vector<8x128xf32>
    %119 = arith.addf %115, %118 : vector<8x128xf32>
    %cst_62 = arith.constant 0.000000e+00 : f32
    %120 = vector.broadcast %cst_62 : f32 to vector<8x128xf32>
    %121 = arith.maximumf %119, %120 : vector<8x128xf32>
    %122 = arith.index_cast %111 : i32 to index
    %c0_63 = arith.constant 0 : index
    %123 = vector.load %arg11[%122, %c0_63] : memref<128x32xf32, #tpu.memory_space<vmem>>, vector<128x32xf32>
    %cst_64 = arith.constant dense<0.000000e+00> : vector<8x32xf32>
    %124 = tpu.matmul %121, %123, %cst_64 {dimension_numbers = #tpu.dot_dimension_numbers<[1], [0], [0], [1], [0, 0, 1, 1], [], []>} : vector<8x128xf32>, vector<128x32xf32>, vector<8x32xf32> -> vector<8x32xf32>
    %125 = arith.addf %109, %124 : vector<8x32xf32>
    %c1_i32 = arith.constant 1 : i32
    %c0_65 = arith.constant 0 : index
    %c0_66 = arith.constant 0 : index
    %126 = vector.load %arg12[%c0_65, %c0_66] : memref<1x32xf32, #tpu.memory_space<vmem>>, vector<1x32xf32>
    %127 = vector.broadcast %126 : vector<1x32xf32> to vector<8x32xf32>
    %128 = arith.addf %125, %127 : vector<8x32xf32>
    %129 = arith.addf %108, %128 : vector<8x32xf32>
    %cst_67 = arith.constant dense<0.000000e+00> : vector<8xf32>
    %130 = vector.multi_reduction <add>, %129, %cst_67 [1] : vector<8x32xf32> to vector<8xf32>
    %131 = vector.shape_cast %130 : vector<8xf32> to vector<8x1xf32>
    %cst_68 = arith.constant 3.200000e+01 : f32
    %132 = vector.broadcast %cst_68 : f32 to vector<8x1xf32>
    %133 = arith.divf %131, %132 : vector<8x1xf32>
    %134 = vector.broadcast %133 : vector<8x1xf32> to vector<8x32xf32>
    %135 = arith.subf %129, %134 : vector<8x32xf32>
    %136 = arith.mulf %135, %135 : vector<8x32xf32>
    %cst_69 = arith.constant dense<0.000000e+00> : vector<8xf32>
    %137 = vector.multi_reduction <add>, %136, %cst_69 [1] : vector<8x32xf32> to vector<8xf32>
    %138 = vector.shape_cast %137 : vector<8xf32> to vector<8x1xf32>
    %cst_70 = arith.constant 3.200000e+01 : f32
    %139 = vector.broadcast %cst_70 : f32 to vector<8x1xf32>
    %140 = arith.divf %138, %139 : vector<8x1xf32>
    %141 = vector.broadcast %133 : vector<8x1xf32> to vector<8x32xf32>
    %142 = arith.subf %129, %141 : vector<8x32xf32>
    %cst_71 = arith.constant 9.99999974E-6 : f32
    %143 = vector.broadcast %cst_71 : f32 to vector<8x1xf32>
    %144 = arith.addf %140, %143 : vector<8x1xf32>
    %145 = math.rsqrt %144 : vector<8x1xf32>
    %146 = vector.broadcast %145 : vector<8x1xf32> to vector<8x32xf32>
    %147 = arith.mulf %142, %146 : vector<8x32xf32>
    %c0_72 = arith.constant 0 : index
    %c0_73 = arith.constant 0 : index
    %148 = vector.load %arg13[%c0_72, %c0_73] : memref<1x32xf32, #tpu.memory_space<vmem>>, vector<1x32xf32>
    %149 = vector.broadcast %148 : vector<1x32xf32> to vector<8x32xf32>
    %150 = arith.mulf %147, %149 : vector<8x32xf32>
    %c0_74 = arith.constant 0 : index
    %c0_75 = arith.constant 0 : index
    %151 = vector.load %arg14[%c0_74, %c0_75] : memref<1x32xf32, #tpu.memory_space<vmem>>, vector<1x32xf32>
    %152 = vector.broadcast %151 : vector<1x32xf32> to vector<8x32xf32>
    %153 = arith.addf %150, %152 : vector<8x32xf32>
    %c0_76 = arith.constant 0 : index
    %c0_77 = arith.constant 0 : index
    %c0_78 = arith.constant 0 : index
    %154 = vector.load %arg15[%c0_76, %c0_77, %c0_78] : memref<1x8x32xf32, #tpu.memory_space<vmem>>, vector<1x8x32xf32>
    %155 = vector.shape_cast %154 : vector<1x8x32xf32> to vector<8x32xf32>
    %156 = vector.shape_cast %153 : vector<8x32xf32> to vector<1x8x32xf32>
    tpu.vector_store %arg15[%c0_76, %c0_77, %c0_78], %156 {strides = array<i32>} : memref<1x8x32xf32, #tpu.memory_space<vmem>>, vector<1x8x32xf32>,
    return
  }
  func.func @transform_0(%arg0: i32, %arg1: i32) -> (i32, i32, i32) {
    %c0_i32 = arith.constant 0 : i32
    %c0_i32_0 = arith.constant 0 : i32
    %c0_i32_1 = arith.constant 0 : i32
    return %arg0, %c0_i32, %c0_i32_0 : i32, i32, i32
  }
  func.func @transform_1(%arg0: i32, %arg1: i32) -> (i32, i32) {
    %c0_i32 = arith.constant 0 : i32
    %c0_i32_0 = arith.constant 0 : i32
    %c0_i32_1 = arith.constant 0 : i32
    return %c0_i32, %c0_i32_0 : i32, i32
  }
  func.func @transform_2(%arg0: i32, %arg1: i32) -> (i32, i32) {
    %c0_i32 = arith.constant 0 : i32
    %c0_i32_0 = arith.constant 0 : i32
    %c0_i32_1 = arith.constant 0 : i32
    return %c0_i32, %c0_i32_0 : i32, i32
  }
  func.func @transform_3(%arg0: i32, %arg1: i32) -> (i32, i32) {
    %c0_i32 = arith.constant 0 : i32
    %c0_i32_0 = arith.constant 0 : i32
    %c0_i32_1 = arith.constant 0 : i32
    return %c0_i32, %c0_i32_0 : i32, i32
  }
  func.func @transform_4(%arg0: i32, %arg1: i32) -> (i32, i32) {
    %c0_i32 = arith.constant 0 : i32
    %c0_i32_0 = arith.constant 0 : i32
    %c0_i32_1 = arith.constant 0 : i32
    return %c0_i32, %c0_i32_0 : i32, i32
  }
  func.func @transform_5(%arg0: i32, %arg1: i32) -> (i32, i32) {
    %c0_i32 = arith.constant 0 : i32
    %c0_i32_0 = arith.constant 0 : i32
    %c0_i32_1 = arith.constant 0 : i32
    return %c0_i32, %c0_i32_0 : i32, i32
  }
  func.func @transform_6(%arg0: i32, %arg1: i32) -> (i32, i32) {
    %c0_i32 = arith.constant 0 : i32
    %c0_i32_0 = arith.constant 0 : i32
    %c0_i32_1 = arith.constant 0 : i32
    return %c0_i32, %c0_i32_0 : i32, i32
  }
  func.func @transform_7(%arg0: i32, %arg1: i32) -> (i32, i32) {
    %c0_i32 = arith.constant 0 : i32
    %c0_i32_0 = arith.constant 0 : i32
    %c0_i32_1 = arith.constant 0 : i32
    return %c0_i32, %c0_i32_0 : i32, i32
  }
  func.func @transform_8(%arg0: i32, %arg1: i32) -> (i32, i32) {
    %c0_i32 = arith.constant 0 : i32
    %c0_i32_0 = arith.constant 0 : i32
    %c0_i32_1 = arith.constant 0 : i32
    return %c0_i32, %c0_i32_0 : i32, i32
  }
  func.func @transform_9(%arg0: i32, %arg1: i32) -> (i32, i32) {
    %c0_i32 = arith.constant 0 : i32
    %c0_i32_0 = arith.constant 0 : i32
    %c0_i32_1 = arith.constant 0 : i32
    return %c0_i32, %c0_i32_0 : i32, i32
  }
  func.func @transform_10(%arg0: i32, %arg1: i32) -> (i32, i32) {
    %c0_i32 = arith.constant 0 : i32
    %c0_i32_0 = arith.constant 0 : i32
    %c0_i32_1 = arith.constant 0 : i32
    return %c0_i32, %c0_i32_0 : i32, i32
  }
  func.func @transform_11(%arg0: i32, %arg1: i32) -> (i32, i32) {
    %c0_i32 = arith.constant 0 : i32
    %c0_i32_0 = arith.constant 0 : i32
    %c0_i32_1 = arith.constant 0 : i32
    return %c0_i32, %c0_i32_0 : i32, i32
  }
  func.func @transform_12(%arg0: i32, %arg1: i32) -> (i32, i32) {
    %c0_i32 = arith.constant 0 : i32
    %c0_i32_0 = arith.constant 0 : i32
    %c0_i32_1 = arith.constant 0 : i32
    return %c0_i32, %c0_i32_0 : i32, i32
  }
  func.func @transform_13(%arg0: i32, %arg1: i32) -> (i32, i32, i32) {
    %c0_i32 = arith.constant 0 : i32
    %c0_i32_0 = arith.constant 0 : i32
    return %arg0, %arg1, %c0_i32 : i32, i32, i32
  }
}

</mosaic_0001>

<llo_original>
// kernel: tpu_custom_call.1
$region0: #{tpu_custom_call.1}
  #allocation0 [shape = 'u32[]', space=smem, size = 0x4, offset = 0x4, fixed_abs, tag = 'smem constant byte address 0x4 - core index']
  #allocation1 [shape = 'u32[72,128]{1,0:T(1,128)}', space=vmem, size = 0x9000, scoped, tag = 'internal scratch']
  #allocation2 [shape = 'f32[8,32]{1,0:T(8,128)}', space=vmem, size = 0x1000, scoped, tag = 'scratch operand']
  #allocation3 [shape = 'f32[8,32]{1,0:T(8,128)}', space=vmem, size = 0x1000, scoped, tag = 'scratch operand']
  #allocation4 [shape = 'f32[8,32]{1,0:T(8,128)}', space=vmem, size = 0x1000, scoped, tag = 'scratch operand']
  %s0 = inlined_call_operand.vmem [shape: f32[2,8,32], index: 0, kind: input, shape index: {}]
  %s1 = inlined_call_operand.vmem [shape: f32[32,32], index: 1, kind: input, shape index: {}]
  %s2 = inlined_call_operand.vmem [shape: f32[32,64], index: 2, kind: input, shape index: {}]
  %s3 = inlined_call_operand.vmem [shape: f32[32,32], index: 3, kind: input, shape index: {}]
  %s4 = inlined_call_operand.vmem [shape: f32[1,32], index: 4, kind: input, shape index: {}]
  %s5 = inlined_call_operand.vmem [shape: f32[1,32], index: 5, kind: input, shape index: {}]
  %s6 = inlined_call_operand.vmem [shape: f32[1,32], index: 6, kind: input, shape index: {}]
  %s7 = inlined_call_operand.vmem [shape: f32[128,32], index: 7, kind: input, shape index: {}]
  %s8 = inlined_call_operand.vmem [shape: f32[1,128], index: 8, kind: input, shape index: {}]
  %s9 = inlined_call_operand.vmem [shape: f32[128,32], index: 9, kind: input, shape index: {}]
  %s10 = inlined_call_operand.vmem [shape: f32[1,32], index: 10, kind: input, shape index: {}]
  %s11 = inlined_call_operand.vmem [shape: f32[1,32], index: 11, kind: input, shape index: {}]
  %s12 = inlined_call_operand.vmem [shape: f32[1,32], index: 12, kind: input, shape index: {}]
  %s13 = inlined_call_operand.hbm [shape: f32[2,8,32], index: 13, kind: output, shape index: {}]
  %s14 = sld [smem:[#allocation0]]
  $region89: #{tpu_custom_call.1} parent=0
    _
  %s16 = ssub.s32 1, %s14
  %s17 = scalar_select 0, %s16, %s14
  $region1: #{tpu_custom_call.1} parent=0
    #allocation5 [shape = 'u8[8192]{0}', space=vmem, size = 0x2000, scoped, tag = 'output window, operand 0']
    #allocation6 [shape = 's32[2]{0}', space=sflag, size = 0x8, scoped, tag = 'scoped memory for tpu_custom_call.1']
    %18 = vsyncpa [#allocation6], 0
    %s19 = scalar_lea.sflag [#allocation6], 1
    %20 = vsyncpa %s19, 0
    loop: start=0, step=1, limit=4
    $region2: #{tpu_custom_call.1} parent=1 // loop_pre_header
      _
    $region3: #{tpu_custom_call.1} parent=1 // loop_header
      %s22 = sphi 0, %s26
      %p23 = scmp.ge.s32.totalorder %s22, 4
      %s29 = sphi 0, %s41
      %s30 = sphi 0, %s37
      %s31 = sphi 0, %s29
      %s32 = sphi 0, %s30
      %s33 = sphi 0, %s31
      %s34 = sphi 0, %s32
      %s44 = sphi 0, %s46
      %s47 = sphi 0, %s44
      %s48 = sphi 0, %s47
      %s64 = sphi 0, %s48
      %s68 = sphi 0, %s68
      %s70 = sphi 0, %s68
      %s71 = sphi 0, %s70
      %s85 = sphi 0, %s71
      %s89 = sphi 0, %s89
      %s91 = sphi 0, %s89
      %s92 = sphi 0, %s91
      %s106 = sphi 0, %s92
      %s110 = sphi 0, %s110
      %s112 = sphi 0, %s110
      %s113 = sphi 0, %s112
      %s127 = sphi 0, %s113
      %s131 = sphi 0, %s131
      %s133 = sphi 0, %s131
      %s134 = sphi 0, %s133
      %s148 = sphi 0, %s134
      %s152 = sphi 0, %s152
      %s154 = sphi 0, %s152
      %s155 = sphi 0, %s154
      %s169 = sphi 0, %s155
      %s173 = sphi 0, %s173
      %s175 = sphi 0, %s173
      %s176 = sphi 0, %s175
      %s190 = sphi 0, %s176
      %s194 = sphi 0, %s194
      %s196 = sphi 0, %s194
      %s197 = sphi 0, %s196
      %s211 = sphi 0, %s197
      %s215 = sphi 0, %s215
      %s217 = sphi 0, %s215
      %s218 = sphi 0, %s217
      %s232 = sphi 0, %s218
      %s236 = sphi 0, %s236
      %s238 = sphi 0, %s236
      %s239 = sphi 0, %s238
      %s253 = sphi 0, %s239
      %s257 = sphi 0, %s257
      %s259 = sphi 0, %s257
      %s260 = sphi 0, %s259
      %s274 = sphi 0, %s260
      %s278 = sphi 0, %s278
      %s280 = sphi 0, %s278
      %s281 = sphi 0, %s280
      %s295 = sphi 0, %s281
      %s299 = sphi 0, %s299
      %s301 = sphi 0, %s299
      %s302 = sphi 0, %s301
      %s316 = sphi 0, %s302
      %s324 = sphi 0, %s326
      %s327 = sphi 0, %s324
      %s328 = sphi 0, %s327
      %s344 = sphi 0, %s328
    $region4: #{tpu_custom_call.1} parent=1 // loop_header_branch
      %25 = sbr.rel (%p23) target = $region8
    $region5: #{tpu_custom_call.1} parent=1 // loop_body
      %s27 = ssub.s32 %s22, 1
      %s28 = ssub.s32 %s22, 2
      %s35 = sadd.s32 1, %s30
      %p36 = scmp.ge.s32.totalorder %s35, 1
      %s37 = scalar_select %p36, 0, %s35
      %s38 = sadd.s32 1, %s29
      %s39 = scalar_select %p36, %s38, %s29
      %p40 = scmp.ge.s32.totalorder %s39, 2
      %s41 = scalar_select %p40, 0, %s39
      %s42 = ssub.s32 %s29, %s41
      %p43 = scmp.eq.s32.totalorder %s42, 0
      %s45 = sadd.s32 %s44, 1
      %s46 = scalar_select %p43, %s44, %s45
      %p49 = pneg %p43
      %p50 = scmp.eq.s32.totalorder %s22, 1
      %p51 = por %p49, %p50
      %p52 = scmp.ne.s32.totalorder %s44, %s47
      %p53 = scmp.eq.s32.totalorder %s22, 0
      %p54 = por %p52, %p53
      %p55 = scmp.ne.s32.totalorder %s44, %s47
      %p56 = scmp.eq.s32.totalorder %s27, 1
      %p57 = por %p55, %p56
      %p58 = scmp.ne.s32.totalorder %s47, %s48
      %p59 = scmp.eq.s32.totalorder %s27, 0
      %p60 = por %p58, %p59
      %p61 = scmp.ne.s32.totalorder %s47, %s48
      %p62 = scmp.eq.s32.totalorder %s28, 1
      %p63 = por %p61, %p62
      %p65 = scmp.ne.s32.totalorder %s48, %s64
      %p66 = scmp.eq.s32.totalorder %s28, 0
      %p67 = por %p65, %p66
      %s69 = sadd.s32 %s68, 1
      %p72 = scmp.eq.s32.totalorder %s22, 1
      %p73 = scmp.ne.s32.totalorder %s68, %s70
      %p74 = scmp.eq.s32.totalorder %s22, 0
      %p75 = por %p73, %p74
      %p76 = scmp.ne.s32.totalorder %s68, %s70
      %p77 = scmp.eq.s32.totalorder %s27, 1
      %p78 = por %p76, %p77
      %p79 = scmp.ne.s32.totalorder %s70, %s71
      %p80 = scmp.eq.s32.totalorder %s27, 0
      %p81 = por %p79, %p80
      %p82 = scmp.ne.s32.totalorder %s70, %s71
      %p83 = scmp.eq.s32.totalorder %s28, 1
      %p84 = por %p82, %p83
      %p86 = scmp.ne.s32.totalorder %s71, %s85
      %p87 = scmp.eq.s32.totalorder %s28, 0
      %p88 = por %p86, %p87
      %s90 = sadd.s32 %s89, 1
      %p93 = scmp.eq.s32.totalorder %s22, 1
      %p94 = scmp.ne.s32.totalorder %s89, %s91
      %p95 = scmp.eq.s32.totalorder %s22, 0
      %p96 = por %p94, %p95
      %p97 = scmp.ne.s32.totalorder %s89, %s91
      %p98 = scmp.eq.s32.totalorder %s27, 1
      %p99 = por %p97, %p98
      %p100 = scmp.ne.s32.totalorder %s91, %s92
      %p101 = scmp.eq.s32.totalorder %s27, 0
      %p102 = por %p100, %p101
      %p103 = scmp.ne.s32.totalorder %s91, %s92
      %p104 = scmp.eq.s32.totalorder %s28, 1
      %p105 = por %p103, %p104
      %p107 = scmp.ne.s32.totalorder %s92, %s106
      %p108 = scmp.eq.s32.totalorder %s28, 0
      %p109 = por %p107, %p108
      %s111 = sadd.s32 %s110, 1
      %p114 = scmp.eq.s32.totalorder %s22, 1
      %p115 = scmp.ne.s32.totalorder %s110, %s112
      %p116 = scmp.eq.s32.totalorder %s22, 0
      %p117 = por %p115, %p116
      %p118 = scmp.ne.s32.totalorder %s110, %s112
      %p119 = scmp.eq.s32.totalorder %s27, 1
      %p120 = por %p118, %p119
      %p121 = scmp.ne.s32.totalorder %s112, %s113
      %p122 = scmp.eq.s32.totalorder %s27, 0
      %p123 = por %p121, %p122
      %p124 = scmp.ne.s32.totalorder %s112, %s113
      %p125 = scmp.eq.s32.totalorder %s28, 1
      %p126 = por %p124, %p125
      %p128 = scmp.ne.s32.totalorder %s113, %s127
      %p129 = scmp.eq.s32.totalorder %s28, 0
      %p130 = por %p128, %p129
      %s132 = sadd.s32 %s131, 1
      %p135 = scmp.eq.s32.totalorder %s22, 1
      %p136 = scmp.ne.s32.totalorder %s131, %s133
      %p137 = scmp.eq.s32.totalorder %s22, 0
      %p138 = por %p136, %p137
      %p139 = scmp.ne.s32.totalorder %s131, %s133
      %p140 = scmp.eq.s32.totalorder %s27, 1
      %p141 = por %p139, %p140
      %p142 = scmp.ne.s32.totalorder %s133, %s134
      %p143 = scmp.eq.s32.totalorder %s27, 0
      %p144 = por %p142, %p143
      %p145 = scmp.ne.s32.totalorder %s133, %s134
      %p146 = scmp.eq.s32.totalorder %s28, 1
      %p147 = por %p145, %p146
      %p149 = scmp.ne.s32.totalorder %s134, %s148
      %p150 = scmp.eq.s32.totalorder %s28, 0
      %p151 = por %p149, %p150
      %s153 = sadd.s32 %s152, 1
      %p156 = scmp.eq.s32.totalorder %s22, 1
      %p157 = scmp.ne.s32.totalorder %s152, %s154
      %p158 = scmp.eq.s32.totalorder %s22, 0
      %p159 = por %p157, %p158
      %p160 = scmp.ne.s32.totalorder %s152, %s154
      %p161 = scmp.eq.s32.totalorder %s27, 1
      %p162 = por %p160, %p161
      %p163 = scmp.ne.s32.totalorder %s154, %s155
      %p164 = scmp.eq.s32.totalorder %s27, 0
      %p165 = por %p163, %p164
      %p166 = scmp.ne.s32.totalorder %s154, %s155
      %p167 = scmp.eq.s32.totalorder %s28, 1
      %p168 = por %p166, %p167
      %p170 = scmp.ne.s32.totalorder %s155, %s169
      %p171 = scmp.eq.s32.totalorder %s28, 0
      %p172 = por %p170, %p171
      %s174 = sadd.s32 %s173, 1
      %p177 = scmp.eq.s32.totalorder %s22, 1
      %p178 = scmp.ne.s32.totalorder %s173, %s175
      %p179 = scmp.eq.s32.totalorder %s22, 0
      %p180 = por %p178, %p179
      %p181 = scmp.ne.s32.totalorder %s173, %s175
      %p182 = scmp.eq.s32.totalorder %s27, 1
      %p183 = por %p181, %p182
      %p184 = scmp.ne.s32.totalorder %s175, %s176
      %p185 = scmp.eq.s32.totalorder %s27, 0
      %p186 = por %p184, %p185
      %p187 = scmp.ne.s32.totalorder %s175, %s176
      %p188 = scmp.eq.s32.totalorder %s28, 1
      %p189 = por %p187, %p188
      %p191 = scmp.ne.s32.totalorder %s176, %s190
      %p192 = scmp.eq.s32.totalorder %s28, 0
      %p193 = por %p191, %p192
      %s195 = sadd.s32 %s194, 1
      %p198 = scmp.eq.s32.totalorder %s22, 1
      %p199 = scmp.ne.s32.totalorder %s194, %s196
      %p200 = scmp.eq.s32.totalorder %s22, 0
      %p201 = por %p199, %p200
      %p202 = scmp.ne.s32.totalorder %s194, %s196
      %p203 = scmp.eq.s32.totalorder %s27, 1
      %p204 = por %p202, %p203
      %p205 = scmp.ne.s32.totalorder %s196, %s197
      %p206 = scmp.eq.s32.totalorder %s27, 0
      %p207 = por %p205, %p206
      %p208 = scmp.ne.s32.totalorder %s196, %s197
      %p209 = scmp.eq.s32.totalorder %s28, 1
      %p210 = por %p208, %p209
      %p212 = scmp.ne.s32.totalorder %s197, %s211
      %p213 = scmp.eq.s32.totalorder %s28, 0
      %p214 = por %p212, %p213
      %s216 = sadd.s32 %s215, 1
      %p219 = scmp.eq.s32.totalorder %s22, 1
      %p220 = scmp.ne.s32.totalorder %s215, %s217
      %p221 = scmp.eq.s32.totalorder %s22, 0
      %p222 = por %p220, %p221
      %p223 = scmp.ne.s32.totalorder %s215, %s217
      %p224 = scmp.eq.s32.totalorder %s27, 1
      %p225 = por %p223, %p224
      %p226 = scmp.ne.s32.totalorder %s217, %s218
      %p227 = scmp.eq.s32.totalorder %s27, 0
      %p228 = por %p226, %p227
      %p229 = scmp.ne.s32.totalorder %s217, %s218
      %p230 = scmp.eq.s32.totalorder %s28, 1
      %p231 = por %p229, %p230
      %p233 = scmp.ne.s32.totalorder %s218, %s232
      %p234 = scmp.eq.s32.totalorder %s28, 0
      %p235 = por %p233, %p234
      %s237 = sadd.s32 %s236, 1
      %p240 = scmp.eq.s32.totalorder %s22, 1
      %p241 = scmp.ne.s32.totalorder %s236, %s238
      %p242 = scmp.eq.s32.totalorder %s22, 0
      %p243 = por %p241, %p242
      %p244 = scmp.ne.s32.totalorder %s236, %s238
      %p245 = scmp.eq.s32.totalorder %s27, 1
      %p246 = por %p244, %p245
      %p247 = scmp.ne.s32.totalorder %s238, %s239
      %p248 = scmp.eq.s32.totalorder %s27, 0
      %p249 = por %p247, %p248
      %p250 = scmp.ne.s32.totalorder %s238, %s239
      %p251 = scmp.eq.s32.totalorder %s28, 1
      %p252 = por %p250, %p251
      %p254 = scmp.ne.s32.totalorder %s239, %s253
      %p255 = scmp.eq.s32.totalorder %s28, 0
      %p256 = por %p254, %p255
      %s258 = sadd.s32 %s257, 1
      %p261 = scmp.eq.s32.totalorder %s22, 1
      %p262 = scmp.ne.s32.totalorder %s257, %s259
      %p263 = scmp.eq.s32.totalorder %s22, 0
      %p264 = por %p262, %p263
      %p265 = scmp.ne.s32.totalorder %s257, %s259
      %p266 = scmp.eq.s32.totalorder %s27, 1
      %p267 = por %p265, %p266
      %p268 = scmp.ne.s32.totalorder %s259, %s260
      %p269 = scmp.eq.s32.totalorder %s27, 0
      %p270 = por %p268, %p269
      %p271 = scmp.ne.s32.totalorder %s259, %s260
      %p272 = scmp.eq.s32.totalorder %s28, 1
      %p273 = por %p271, %p272
      %p275 = scmp.ne.s32.totalorder %s260, %s274
      %p276 = scmp.eq.s32.totalorder %s28, 0
      %p277 = por %p275, %p276
      %s279 = sadd.s32 %s278, 1
      %p282 = scmp.eq.s32.totalorder %s22, 1
      %p283 = scmp.ne.s32.totalorder %s278, %s280
      %p284 = scmp.eq.s32.totalorder %s22, 0
      %p285 = por %p283, %p284
      %p286 = scmp.ne.s32.totalorder %s278, %s280
      %p287 = scmp.eq.s32.totalorder %s27, 1
      %p288 = por %p286, %p287
      %p289 = scmp.ne.s32.totalorder %s280, %s281
      %p290 = scmp.eq.s32.totalorder %s27, 0
      %p291 = por %p289, %p290
      %p292 = scmp.ne.s32.totalorder %s280, %s281
      %p293 = scmp.eq.s32.totalorder %s28, 1
      %p294 = por %p292, %p293
      %p296 = scmp.ne.s32.totalorder %s281, %s295
      %p297 = scmp.eq.s32.totalorder %s28, 0
      %p298 = por %p296, %p297
      %s300 = sadd.s32 %s299, 1
      %p303 = scmp.eq.s32.totalorder %s22, 1
      %p304 = scmp.ne.s32.totalorder %s299, %s301
      %p305 = scmp.eq.s32.totalorder %s22, 0
      %p306 = por %p304, %p305
      %p307 = scmp.ne.s32.totalorder %s299, %s301
      %p308 = scmp.eq.s32.totalorder %s27, 1
      %p309 = por %p307, %p308
      %p310 = scmp.ne.s32.totalorder %s301, %s302
      %p311 = scmp.eq.s32.totalorder %s27, 0
      %p312 = por %p310, %p311
      %p313 = scmp.ne.s32.totalorder %s301, %s302
      %p314 = scmp.eq.s32.totalorder %s28, 1
      %p315 = por %p313, %p314
      %p317 = scmp.ne.s32.totalorder %s302, %s316
      %p318 = scmp.eq.s32.totalorder %s28, 0
      %p319 = por %p317, %p318
      %s320 = ssub.s32 %s29, %s41
      %s321 = ssub.s32 %s30, %s37
      %s322 = sor.u32 %s320, %s321
      %p323 = scmp.eq.s32.totalorder %s322, 0
      %s325 = sadd.s32 %s324, 1
      %s326 = scalar_select %p323, %s324, %s325
      %p329 = pneg %p323
      %p330 = scmp.eq.s32.totalorder %s22, 1
      %p331 = por %p329, %p330
      %p332 = scmp.ne.s32.totalorder %s324, %s327
      %p333 = scmp.eq.s32.totalorder %s22, 0
      %p334 = por %p332, %p333
      %p335 = scmp.ne.s32.totalorder %s324, %s327
      %p336 = scmp.eq.s32.totalorder %s27, 1
      %p337 = por %p335, %p336
      %p338 = scmp.ne.s32.totalorder %s327, %s328
      %p339 = scmp.eq.s32.totalorder %s27, 0
      %p340 = por %p338, %p339
      %p341 = scmp.ne.s32.totalorder %s327, %s328
      %p342 = scmp.eq.s32.totalorder %s28, 1
      %p343 = por %p341, %p342
      %p345 = scmp.ne.s32.totalorder %s328, %s344
      %p346 = scmp.eq.s32.totalorder %s28, 0
      %p347 = por %p345, %p346
      %p348 = scmp.le.s32.totalorder 1, %s22
      %p349 = scmp.lt.s32.totalorder %s22, 3
      %p350 = pnand %p348, %p349
      %p351 = pneg %p350
      // Predicated region
      $region9: #{tpu_custom_call.1} parent=5 // pred_check
        _
      $region10: #{tpu_custom_call.1} parent=5 // pred_check_branch
        %353 = sbr.rel (%p350) target = $region12
      $region11: #{tpu_custom_call.1} parent=5 // pred_region
        %s354 = ssub.s32 %s22, 1
        // Predicated region
        $region13: #{tpu_custom_call.1} parent=11 // pred_check
          %p355 = pneg %p81
        $region14: #{tpu_custom_call.1} parent=11 // pred_check_branch
          %357 = sbr.rel (%p355) target = $region16
        $region15: #{tpu_custom_call.1} parent=11 // pred_region
          _
        $region16: #{tpu_custom_call.1} parent=11 // pred_fallthru
          _
        // Predicated region
        $region17: #{tpu_custom_call.1} parent=11 // pred_check
          %p358 = pneg %p102
        $region18: #{tpu_custom_call.1} parent=11 // pred_check_branch
          %360 = sbr.rel (%p358) target = $region20
        $region19: #{tpu_custom_call.1} parent=11 // pred_region
          _
        $region20: #{tpu_custom_call.1} parent=11 // pred_fallthru
          _
        // Predicated region
        $region21: #{tpu_custom_call.1} parent=11 // pred_check
          %p361 = pneg %p123
        $region22: #{tpu_custom_call.1} parent=11 // pred_check_branch
          %363 = sbr.rel (%p361) target = $region24
        $region23: #{tpu_custom_call.1} parent=11 // pred_region
          _
        $region24: #{tpu_custom_call.1} parent=11 // pred_fallthru
          _
        // Predicated region
        $region25: #{tpu_custom_call.1} parent=11 // pred_check
          %p364 = pneg %p144
        $region26: #{tpu_custom_call.1} parent=11 // pred_check_branch
          %366 = sbr.rel (%p364) target = $region28
        $region27: #{tpu_custom_call.1} parent=11 // pred_region
          _
        $region28: #{tpu_custom_call.1} parent=11 // pred_fallthru
          _
        // Predicated region
        $region29: #{tpu_custom_call.1} parent=11 // pred_check
          %p367 = pneg %p165
        $region30: #{tpu_custom_call.1} parent=11 // pred_check_branch
          %369 = sbr.rel (%p367) target = $region32
        $region31: #{tpu_custom_call.1} parent=11 // pred_region
          _
        $region32: #{tpu_custom_call.1} parent=11 // pred_fallthru
          _
        // Predicated region
        $region33: #{tpu_custom_call.1} parent=11 // pred_check
          %p370 = pneg %p186
        $region34: #{tpu_custom_call.1} parent=11 // pred_check_branch
          %372 = sbr.rel (%p370) target = $region36
        $region35: #{tpu_custom_call.1} parent=11 // pred_region
          _
        $region36: #{tpu_custom_call.1} parent=11 // pred_fallthru
          _
        // Predicated region
        $region37: #{tpu_custom_call.1} parent=11 // pred_check
          %p373 = pneg %p207
        $region38: #{tpu_custom_call.1} parent=11 // pred_check_branch
          %375 = sbr.rel (%p373) target = $region40
        $region39: #{tpu_custom_call.1} parent=11 // pred_region
          _
        $region40: #{tpu_custom_call.1} parent=11 // pred_fallthru
          _
        // Predicated region
        $region41: #{tpu_custom_call.1} parent=11 // pred_check
          %p376 = pneg %p228
        $region42: #{tpu_custom_call.1} parent=11 // pred_check_branch
          %378 = sbr.rel (%p376) target = $region44
        $region43: #{tpu_custom_call.1} parent=11 // pred_region
          _
        $region44: #{tpu_custom_call.1} parent=11 // pred_fallthru
          _
        // Predicated region
        $region45: #{tpu_custom_call.1} parent=11 // pred_check
          %p379 = pneg %p249
        $region46: #{tpu_custom_call.1} parent=11 // pred_check_branch
          %381 = sbr.rel (%p379) target = $region48
        $region47: #{tpu_custom_call.1} parent=11 // pred_region
          _
        $region48: #{tpu_custom_call.1} parent=11 // pred_fallthru
          _
        // Predicated region
        $region49: #{tpu_custom_call.1} parent=11 // pred_check
          %p382 = pneg %p270
        $region50: #{tpu_custom_call.1} parent=11 // pred_check_branch
          %384 = sbr.rel (%p382) target = $region52
        $region51: #{tpu_custom_call.1} parent=11 // pred_region
          _
        $region52: #{tpu_custom_call.1} parent=11 // pred_fallthru
          _
        // Predicated region
        $region53: #{tpu_custom_call.1} parent=11 // pred_check
          %p385 = pneg %p291
        $region54: #{tpu_custom_call.1} parent=11 // pred_check_branch
          %387 = sbr.rel (%p385) target = $region56
        $region55: #{tpu_custom_call.1} parent=11 // pred_region
          _
        $region56: #{tpu_custom_call.1} parent=11 // pred_fallthru
          _
        // Predicated region
        $region57: #{tpu_custom_call.1} parent=11 // pred_check
          %p388 = pneg %p312
        $region58: #{tpu_custom_call.1} parent=11 // pred_check_branch
          %390 = sbr.rel (%p388) target = $region60
        $region59: #{tpu_custom_call.1} parent=11 // pred_region
          _
        $region60: #{tpu_custom_call.1} parent=11 // pred_fallthru
          _
      $region12: #{tpu_custom_call.1} parent=5 // pred_fallthru
        _
      %p391 = scmp.lt.s32.totalorder %s22, 2
      // Predicated region
      $region61: #{tpu_custom_call.1} parent=5 // pred_check
        %p392 = pneg %p391
      $region62: #{tpu_custom_call.1} parent=5 // pred_check_branch
        %394 = sbr.rel (%p392) target = $region64
      $region63: #{tpu_custom_call.1} parent=5 // pred_region
        // Predicated region
        $region65: #{tpu_custom_call.1} parent=63 // pred_check
          %p395 = pneg %p54
        $region66: #{tpu_custom_call.1} parent=63 // pred_check_branch
          %397 = sbr.rel (%p395) target = $region68
        $region67: #{tpu_custom_call.1} parent=63 // pred_region
          %p398 = scmp.lt.s32.totalorder %s29, 1
          %s399 = scalar_select %p398, %s29, 1
          %s400 = smul.addr %s399, 8
          %s401 = scalar_lea.vmem %s0, %s400
        $region68: #{tpu_custom_call.1} parent=63 // pred_fallthru
          _
      $region64: #{tpu_custom_call.1} parent=5 // pred_fallthru
        _
      %p402 = scmp.le.s32.totalorder 1, %s22
      %p403 = scmp.lt.s32.totalorder %s22, 3
      %p404 = pnand %p402, %p403
      %p405 = pneg %p404
      // Predicated region
      $region69: #{tpu_custom_call.1} parent=5 // pred_check
        _
      $region70: #{tpu_custom_call.1} parent=5 // pred_check_branch
        %407 = sbr.rel (%p404) target = $region72
      $region71: #{tpu_custom_call.1} parent=5 // pred_region
        %s408 = ssub.s32 %s22, 1
        %p409 = scmp.lt.s32.totalorder %s31, 1
        %s410 = scalar_select %p409, %s31, 1
        %s411 = smul.addr %s410, 8
        %s412 = scalar_lea.vmem %s0, %s411
        %p413 = pneg %p60
        %p414 = pneg %p57
        %p415 = pneg %p81
        %p416 = pneg %p78
        %p417 = pneg %p102
        %p418 = pneg %p99
        %p419 = pneg %p123
        %p420 = pneg %p120
        %p421 = pneg %p144
        %p422 = pneg %p141
        %p423 = pneg %p165
        %p424 = pneg %p162
        %p425 = pneg %p186
        %p426 = pneg %p183
        %p427 = pneg %p207
        %p428 = pneg %p204
        %p429 = pneg %p228
        %p430 = pneg %p225
        %p431 = pneg %p249
        %p432 = pneg %p246
        %p433 = pneg %p270
        %p434 = pneg %p267
        %p435 = pneg %p291
        %p436 = pneg %p288
        %p437 = pneg %p312
        %p438 = pneg %p309
        %p439 = pneg %p340
        %p440 = pneg %p337
        %s441 = sand.u32 %s327, 1
        %s442 = scalar_lea.sflag [#allocation6], %s441
        %s443 = sand.u32 %s327, 1
        %s444 = smul.addr %s443, 8
        %s445 = scalar_lea.vmem [#allocation5], %s444
        %p446 = scmp.lt.s32.totalorder %s31, 1
        %s447 = scalar_select %p446, %s31, 1
        %s448 = smul.addr %s447, 8
        %s449 = scalar_lea.vmem %s0, %s448
        %p450 = scmp.eq.s32.totalorder %s32, 0
        // Predicated region
        $region73: #{tpu_custom_call.1} parent=71 // pred_check
          %p451 = pneg %p450
        $region74: #{tpu_custom_call.1} parent=71 // pred_check_branch
          %453 = sbr.rel (%p451) target = $region76
        $region75: #{tpu_custom_call.1} parent=71 // pred_region
          %v454 = vld [vmem:[%s449] sm:$0xff]
          %v455 = vld [vmem:[%s2] sm:$0xff]
          %v456 = vld [vmem:[%s2 + $0x8] sm:$0xff]
          %v457 = vld [vmem:[%s2 + $0x10] sm:$0xff]
          %v458 = vld [vmem:[%s2 + $0x18] sm:$0xff]
          %vm459 = vcmask 261120
          %v461 = vsel %vm459, %v454, 0
          %463 = vmatpush.msra.mxu0 0.0
          %464 = vmatpush.msra.mxu0 0.0
          %465 = vmatpush.msra.mxu0 0.0
          %466 = vmatpush.msra.mxu0 0.0
          %467 = vmatpush.msra.mxu0 0.0
          %468 = vmatpush.msra.mxu0 0.0
          %469 = vmatpush.msra.mxu0 0.0
          %470 = vmatpush.msra.mxu0 0.0
          %471 = vmatpush.msra.mxu0 0.0
          %472 = vmatpush.msra.mxu0 0.0
          %473 = vmatpush.msra.mxu0 0.0
          %474 = vmatpush.msra.mxu0 0.0
          %475 = vmatpush.msra.mxu0 %v458
          %476 = vmatpush.msra.mxu0 %v457
          %477 = vmatpush.msra.mxu0 %v456
          %478 = vmatpush.msra.mxu0 %v455
          %479 = vmatmul.f32.gmra.mxu0 %v461
          %v480 = vpop.f32.mrf.mxu0
          %v481 = vadd.f32 0.0, %v480
          %482 = vdwg.mxu0
          %483 = vst.msk [vmem:[#allocation2] sm:$0xff] %vm459, %v481
          %485 = vrot.lane.b32.xlu0 %v481, 96
          %v486 = vpop.permute.xlu0 %485
          %488 = vst.msk [vmem:[#allocation3] sm:$0xff] %vm459, %v486
        $region76: #{tpu_custom_call.1} parent=71 // pred_fallthru
          _
        %s489 = smul.u32 %s32, 8
        %s490 = scalar_lea.vmem %s449, %s489
        %v491 = vld [vmem:[%s490] sm:$0xff]
        %v492 = vld [vmem:[%s1] sm:$0xff]
        %v493 = vld [vmem:[%s1 + $0x8] sm:$0xff]
        %v494 = vld [vmem:[%s1 + $0x10] sm:$0xff]
        %v495 = vld [vmem:[%s1 + $0x18] sm:$0xff]
        %vm496 = vcmask 261120
        %v498 = vsel %vm496, %v491, 0
        %500 = vmatpush.msra.mxu0 0.0
        %501 = vmatpush.msra.mxu0 0.0
        %502 = vmatpush.msra.mxu0 0.0
        %503 = vmatpush.msra.mxu0 0.0
        %504 = vmatpush.msra.mxu0 0.0
        %505 = vmatpush.msra.mxu0 0.0
        %506 = vmatpush.msra.mxu0 0.0
        %507 = vmatpush.msra.mxu0 0.0
        %508 = vmatpush.msra.mxu0 0.0
        %509 = vmatpush.msra.mxu0 0.0
        %510 = vmatpush.msra.mxu0 0.0
        %511 = vmatpush.msra.mxu0 0.0
        %512 = vmatpush.msra.mxu0 %v495
        %513 = vmatpush.msra.mxu0 %v494
        %514 = vmatpush.msra.mxu0 %v493
        %515 = vmatpush.msra.mxu0 %v492
        %516 = vmatmul.f32.gmra.mxu0 %v498
        %v517 = vpop.f32.mrf.mxu0
        %v518 = vadd.f32 0.0, %v517
        %519 = vdwg.mxu0
        %v520 = vld [vmem:[#allocation2] sm:$0xff]
        %vm521 = vcmask 64512
        %v523 = vsel %vm521, %v518, 0
        %v526 = vsel %vm521, %v520, 0
        %528 = vmatpush.xpose.msra.mxu0 0.0
        %529 = vmatpush.xpose.msra.mxu0 0.0
        %530 = vmatpush.xpose.msra.mxu0 0.0
        %531 = vmatpush.xpose.msra.mxu0 0.0
        %532 = vmatpush.xpose.msra.mxu0 0.0
        %533 = vmatpush.xpose.msra.mxu0 0.0
        %534 = vmatpush.xpose.msra.mxu0 0.0
        %535 = vmatpush.xpose.msra.mxu0 0.0
        %536 = vmatpush.xpose.msra.mxu0 0.0
        %537 = vmatpush.xpose.msra.mxu0 0.0
        %538 = vmatpush.xpose.msra.mxu0 0.0
        %539 = vmatpush.xpose.msra.mxu0 0.0
        %540 = vmatpush.xpose.msra.mxu0 0.0
        %541 = vmatpush.xpose.msra.mxu0 0.0
        %542 = vmatpush.xpose.msra.mxu0 0.0
        %543 = vmatpush.xpose.msra.mxu0 %v526
        %544 = vmatmul.f32.gmra.mxu0 %v523
        %v545 = vpop.f32.mrf.mxu0
        %v546 = vadd.f32 0.0, %v545
        %547 = vdwg.mxu0
        %v548 = vsel %vm521, %v546, -inf
        %549 = vmax.xlane.f32.xlu0 %v548
        %v550 = vpop.xlane.xlu0 %549
        %v551 = vsub.f32 %v546, %v550
        %v552 = vmul.f32 %v551, 1.442695
        %v553 = vpow.pop %v552
        %v554 = vsel %vm521, %v553, 0.0
        %555 = vadd.xlane.f32.xlu0 %v554
        %v556 = vpop.xlane.xlu0 %555
        %v557 = vrcp.pop %v556
        %v558 = vmul.f32 %v553, %v557
        %v559 = vld [vmem:[#allocation3] sm:$0xff]
        %v561 = vsel %vm521, %v558, 0
        %563 = vmatpush.msra.mxu0 0.0
        %564 = vmatpush.msra.mxu0 0.0
        %565 = vmatpush.msra.mxu0 0.0
        %566 = vmatpush.msra.mxu0 0.0
        %567 = vmatpush.msra.mxu0 0.0
        %568 = vmatpush.msra.mxu0 0.0
        %569 = vmatpush.msra.mxu0 0.0
        %570 = vmatpush.msra.mxu0 0.0
        %571 = vmatpush.msra.mxu0 0.0
        %572 = vmatpush.msra.mxu0 0.0
        %573 = vmatpush.msra.mxu0 0.0
        %574 = vmatpush.msra.mxu0 0.0
        %575 = vmatpush.msra.mxu0 0.0
        %576 = vmatpush.msra.mxu0 0.0
        %577 = vmatpush.msra.mxu0 0.0
        %578 = vmatpush.msra.mxu0 %v559
        %579 = vmatmul.f32.gmra.mxu0 %v561
        %v580 = vpop.f32.mrf.mxu0
        %v581 = vadd.f32 0.0, %v580
        %582 = vdwg.mxu0
        %583 = vst.msk [vmem:[#allocation4] sm:$0xff] %vm521, %v581
        %v584 = vld [vmem:[#allocation2] sm:$0xff]
        %585 = vrot.lane.b32.xlu0 %v518, 120
        %v586 = vpop.permute.xlu0 %585
        %588 = vrot.lane.b32.xlu0 %v584, 120
        %v589 = vpop.permute.xlu0 %588
        %v590 = vsel %vm521, %v586, 0
        %v592 = vsel %vm521, %v589, 0
        %594 = vmatpush.xpose.msra.mxu0 0.0
        %595 = vmatpush.xpose.msra.mxu0 0.0
        %596 = vmatpush.xpose.msra.mxu0 0.0
        %597 = vmatpush.xpose.msra.mxu0 0.0
        %598 = vmatpush.xpose.msra.mxu0 0.0
        %599 = vmatpush.xpose.msra.mxu0 0.0
        %600 = vmatpush.xpose.msra.mxu0 0.0
        %601 = vmatpush.xpose.msra.mxu0 0.0
        %602 = vmatpush.xpose.msra.mxu0 0.0
        %603 = vmatpush.xpose.msra.mxu0 0.0
        %604 = vmatpush.xpose.msra.mxu0 0.0
        %605 = vmatpush.xpose.msra.mxu0 0.0
        %606 = vmatpush.xpose.msra.mxu0 0.0
        %607 = vmatpush.xpose.msra.mxu0 0.0
        %608 = vmatpush.xpose.msra.mxu0 0.0
        %609 = vmatpush.xpose.msra.mxu0 %v592
        %610 = vmatmul.f32.gmra.mxu0 %v590
        %v611 = vpop.f32.mrf.mxu0
        %v612 = vadd.f32 0.0, %v611
        %613 = vdwg.mxu0
        %v614 = vsel %vm521, %v612, -inf
        %615 = vmax.xlane.f32.xlu0 %v614
        %v616 = vpop.xlane.xlu0 %615
        %v617 = vsub.f32 %v612, %v616
        %v618 = vmul.f32 %v617, 1.442695
        %v619 = vpow.pop %v618
        %v620 = vsel %vm521, %v619, 0.0
        %621 = vadd.xlane.f32.xlu0 %v620
        %v622 = vpop.xlane.xlu0 %621
        %v623 = vrcp.pop %v622
        %v624 = vmul.f32 %v619, %v623
        %v625 = vld [vmem:[#allocation3] sm:$0xff]
        %627 = vrot.lane.b32.xlu0 %v625, 120
        %v628 = vpop.permute.xlu0 %627
        %v631 = vsel %vm521, %v624, 0
        %633 = vmatpush.msra.mxu0 0.0
        %634 = vmatpush.msra.mxu0 0.0
        %635 = vmatpush.msra.mxu0 0.0
        %636 = vmatpush.msra.mxu0 0.0
        %637 = vmatpush.msra.mxu0 0.0
        %638 = vmatpush.msra.mxu0 0.0
        %639 = vmatpush.msra.mxu0 0.0
        %640 = vmatpush.msra.mxu0 0.0
        %641 = vmatpush.msra.mxu0 0.0
        %642 = vmatpush.msra.mxu0 0.0
        %643 = vmatpush.msra.mxu0 0.0
        %644 = vmatpush.msra.mxu0 0.0
        %645 = vmatpush.msra.mxu0 0.0
        %646 = vmatpush.msra.mxu0 0.0
        %647 = vmatpush.msra.mxu0 0.0
        %648 = vmatpush.msra.mxu0 %v628
        %649 = vmatmul.f32.gmra.mxu0 %v631
        %v650 = vpop.f32.mrf.mxu0
        %v651 = vadd.f32 0.0, %v650
        %652 = vdwg.mxu0
        %654 = vrot.lane.b32.xlu0 %v651, 8
        %v655 = vpop.permute.xlu0 %654
        %vm657 = vcmask 130112
        %658 = vst.msk [vmem:[#allocation4] sm:$0xff] %vm657, %v655
        %v659 = vld [vmem:[#allocation2] sm:$0xff]
        %660 = vrot.lane.b32.xlu0 %v518, 112
        %v661 = vpop.permute.xlu0 %660
        %663 = vrot.lane.b32.xlu0 %v659, 112
        %v664 = vpop.permute.xlu0 %663
        %v665 = vsel %vm521, %v661, 0
        %v667 = vsel %vm521, %v664, 0
        %669 = vmatpush.xpose.msra.mxu0 0.0
        %670 = vmatpush.xpose.msra.mxu0 0.0
        %671 = vmatpush.xpose.msra.mxu0 0.0
        %672 = vmatpush.xpose.msra.mxu0 0.0
        %673 = vmatpush.xpose.msra.mxu0 0.0
        %674 = vmatpush.xpose.msra.mxu0 0.0
        %675 = vmatpush.xpose.msra.mxu0 0.0
        %676 = vmatpush.xpose.msra.mxu0 0.0
        %677 = vmatpush.xpose.msra.mxu0 0.0
        %678 = vmatpush.xpose.msra.mxu0 0.0
        %679 = vmatpush.xpose.msra.mxu0 0.0
        %680 = vmatpush.xpose.msra.mxu0 0.0
        %681 = vmatpush.xpose.msra.mxu0 0.0
        %682 = vmatpush.xpose.msra.mxu0 0.0
        %683 = vmatpush.xpose.msra.mxu0 0.0
        %684 = vmatpush.xpose.msra.mxu0 %v667
        %685 = vmatmul.f32.gmra.mxu0 %v665
        %v686 = vpop.f32.mrf.mxu0
        %v687 = vadd.f32 0.0, %v686
        %688 = vdwg.mxu0
        %v689 = vsel %vm521, %v687, -inf
        %690 = vmax.xlane.f32.xlu0 %v689
        %v691 = vpop.xlane.xlu0 %690
        %v692 = vsub.f32 %v687, %v691
        %v693 = vmul.f32 %v692, 1.442695
        %v694 = vpow.pop %v693
        %v695 = vsel %vm521, %v694, 0.0
        %696 = vadd.xlane.f32.xlu0 %v695
        %v697 = vpop.xlane.xlu0 %696
        %v698 = vrcp.pop %v697
        %v699 = vmul.f32 %v694, %v698
        %v700 = vld [vmem:[#allocation3] sm:$0xff]
        %702 = vrot.lane.b32.xlu0 %v700, 112
        %v703 = vpop.permute.xlu0 %702
        %v706 = vsel %vm521, %v699, 0
        %708 = vmatpush.msra.mxu0 0.0
        %709 = vmatpush.msra.mxu0 0.0
        %710 = vmatpush.msra.mxu0 0.0
        %711 = vmatpush.msra.mxu0 0.0
        %712 = vmatpush.msra.mxu0 0.0
        %713 = vmatpush.msra.mxu0 0.0
        %714 = vmatpush.msra.mxu0 0.0
        %715 = vmatpush.msra.mxu0 0.0
        %716 = vmatpush.msra.mxu0 0.0
        %717 = vmatpush.msra.mxu0 0.0
        %718 = vmatpush.msra.mxu0 0.0
        %719 = vmatpush.msra.mxu0 0.0
        %720 = vmatpush.msra.mxu0 0.0
        %721 = vmatpush.msra.mxu0 0.0
        %722 = vmatpush.msra.mxu0 0.0
        %723 = vmatpush.msra.mxu0 %v703
        %724 = vmatmul.f32.gmra.mxu0 %v706
        %v725 = vpop.f32.mrf.mxu0
        %v726 = vadd.f32 0.0, %v725
        %727 = vdwg.mxu0
        %729 = vrot.lane.b32.xlu0 %v726, 16
        %v730 = vpop.permute.xlu0 %729
        %vm732 = vcmask 195712
        %733 = vst.msk [vmem:[#allocation4] sm:$0xff] %vm732, %v730
        %v734 = vld [vmem:[#allocation2] sm:$0xff]
        %735 = vrot.lane.b32.xlu0 %v518, 104
        %v736 = vpop.permute.xlu0 %735
        %738 = vrot.lane.b32.xlu0 %v734, 104
        %v739 = vpop.permute.xlu0 %738
        %v740 = vsel %vm521, %v736, 0
        %v742 = vsel %vm521, %v739, 0
        %744 = vmatpush.xpose.msra.mxu0 0.0
        %745 = vmatpush.xpose.msra.mxu0 0.0
        %746 = vmatpush.xpose.msra.mxu0 0.0
        %747 = vmatpush.xpose.msra.mxu0 0.0
        %748 = vmatpush.xpose.msra.mxu0 0.0
        %749 = vmatpush.xpose.msra.mxu0 0.0
        %750 = vmatpush.xpose.msra.mxu0 0.0
        %751 = vmatpush.xpose.msra.mxu0 0.0
        %752 = vmatpush.xpose.msra.mxu0 0.0
        %753 = vmatpush.xpose.msra.mxu0 0.0
        %754 = vmatpush.xpose.msra.mxu0 0.0
        %755 = vmatpush.xpose.msra.mxu0 0.0
        %756 = vmatpush.xpose.msra.mxu0 0.0
        %757 = vmatpush.xpose.msra.mxu0 0.0
        %758 = vmatpush.xpose.msra.mxu0 0.0
        %759 = vmatpush.xpose.msra.mxu0 %v742
        %760 = vmatmul.f32.gmra.mxu0 %v740
        %v761 = vpop.f32.mrf.mxu0
        %v762 = vadd.f32 0.0, %v761
        %763 = vdwg.mxu0
        %v764 = vsel %vm521, %v762, -inf
        %765 = vmax.xlane.f32.xlu0 %v764
        %v766 = vpop.xlane.xlu0 %765
        %v767 = vsub.f32 %v762, %v766
        %v768 = vmul.f32 %v767, 1.442695
        %v769 = vpow.pop %v768
        %v770 = vsel %vm521, %v769, 0.0
        %771 = vadd.xlane.f32.xlu0 %v770
        %v772 = vpop.xlane.xlu0 %771
        %v773 = vrcp.pop %v772
        %v774 = vmul.f32 %v769, %v773
        %v775 = vld [vmem:[#allocation3] sm:$0xff]
        %777 = vrot.lane.b32.xlu0 %v775, 104
        %v778 = vpop.permute.xlu0 %777
        %v781 = vsel %vm521, %v774, 0
        %783 = vmatpush.msra.mxu0 0.0
        %784 = vmatpush.msra.mxu0 0.0
        %785 = vmatpush.msra.mxu0 0.0
        %786 = vmatpush.msra.mxu0 0.0
        %787 = vmatpush.msra.mxu0 0.0
        %788 = vmatpush.msra.mxu0 0.0
        %789 = vmatpush.msra.mxu0 0.0
        %790 = vmatpush.msra.mxu0 0.0
        %791 = vmatpush.msra.mxu0 0.0
        %792 = vmatpush.msra.mxu0 0.0
        %793 = vmatpush.msra.mxu0 0.0
        %794 = vmatpush.msra.mxu0 0.0
        %795 = vmatpush.msra.mxu0 0.0
        %796 = vmatpush.msra.mxu0 0.0
        %797 = vmatpush.msra.mxu0 0.0
        %798 = vmatpush.msra.mxu0 %v778
        %799 = vmatmul.f32.gmra.mxu0 %v781
        %v800 = vpop.f32.mrf.mxu0
        %v801 = vadd.f32 0.0, %v800
        %802 = vdwg.mxu0
        %804 = vrot.lane.b32.xlu0 %v801, 24
        %v805 = vpop.permute.xlu0 %804
        %vm807 = vcmask 261312
        %808 = vst.msk [vmem:[#allocation4] sm:$0xff] %vm807, %v805
        %v809 = vld [vmem:[#allocation4] sm:$0xff]
        %v810 = vld [vmem:[%s3] sm:$0xff]
        %v811 = vld [vmem:[%s3 + $0x8] sm:$0xff]
        %v812 = vld [vmem:[%s3 + $0x10] sm:$0xff]
        %v813 = vld [vmem:[%s3 + $0x18] sm:$0xff]
        %v814 = vld [vmem:[%s4] sm:$0x1]
        %v816 = vperm.slane %v814, 0
        %v819 = vsel %vm496, %v809, 0
        %821 = vmatpush.msra.mxu0 0.0
        %822 = vmatpush.msra.mxu0 0.0
        %823 = vmatpush.msra.mxu0 0.0
        %824 = vmatpush.msra.mxu0 0.0
        %825 = vmatpush.msra.mxu0 0.0
        %826 = vmatpush.msra.mxu0 0.0
        %827 = vmatpush.msra.mxu0 0.0
        %828 = vmatpush.msra.mxu0 0.0
        %829 = vmatpush.msra.mxu0 0.0
        %830 = vmatpush.msra.mxu0 0.0
        %831 = vmatpush.msra.mxu0 0.0
        %832 = vmatpush.msra.mxu0 0.0
        %833 = vmatpush.msra.mxu0 %v813
        %834 = vmatpush.msra.mxu0 %v812
        %835 = vmatpush.msra.mxu0 %v811
        %836 = vmatpush.msra.mxu0 %v810
        %837 = vmatmul.f32.gmra.mxu0 %v819
        %v838 = vpop.f32.mrf.mxu0
        %v839 = vadd.f32 %v816, %v838
        %840 = vdwg.mxu0
        %v841 = vadd.f32 %v491, %v839
        %v842 = vsel %vm496, %v841, 0.0
        %843 = vadd.xlane.f32.xlu0 %v842
        %v844 = vpop.xlane.xlu0 %843
        %v845 = vrcp.pop 32.0
        %v846 = vmul.f32 32.0, %v845
        %v847 = vsub.f32 1.0, %v846
        %v848 = vmul.f32 %v845, %v847
        %v849 = vadd.f32 %v845, %v848
        %vm850 = vweird.f32 %v845
        %v851 = vsel %vm850, %v845, %v849
        %v852 = vmul.f32 %v844, %v851
        %v853 = vsub.f32 %v841, %v852
        %v854 = vmul.f32 %v853, %v853
        %v855 = vsel %vm496, %v854, 0.0
        %856 = vadd.xlane.f32.xlu0 %v855
        %v857 = vpop.xlane.xlu0 %856
        %v858 = vmul.f32 %v857, %v851
        %v859 = vadd.f32 %v858, 1e-05
        %v860 = vrsqrt.pop %v859
        %v861 = vmul.f32 %v860, %v859
        %v862 = vmul.f32 %v861, %v860
        %v863 = vmul.f32 0.5, %v862
        %v864 = vsub.f32 1.5, %v863
        %v865 = vmul.f32 %v860, %v864
        %vm866 = vweird.f32 %v859
        %vm867 = vweird.f32 %v860
        %vm868 = vmor %vm866, %vm867
        %v869 = vsel %vm868, %v860, %v865
        %v870 = vmul.f32 %v853, %v869
        %v871 = vld [vmem:[%s5] sm:$0x1]
        %v873 = vperm.slane %v871, 0
        %v875 = vmul.f32 %v870, %v873
        %v876 = vld [vmem:[%s6] sm:$0x1]
        %v878 = vperm.slane %v876, 0
        %v880 = vadd.f32 %v875, %v878
        %v881 = vld [vmem:[%s7] sm:$0xff]
        %v882 = vld [vmem:[%s7 + $0x8] sm:$0xff]
        %v883 = vld [vmem:[%s7 + $0x10] sm:$0xff]
        %v884 = vld [vmem:[%s7 + $0x18] sm:$0xff]
        %v885 = vld [vmem:[%s7 + $0x20] sm:$0xff]
        %v886 = vld [vmem:[%s7 + $0x28] sm:$0xff]
        %v887 = vld [vmem:[%s7 + $0x30] sm:$0xff]
        %v888 = vld [vmem:[%s7 + $0x38] sm:$0xff]
        %v889 = vld [vmem:[%s7 + $0x40] sm:$0xff]
        %v890 = vld [vmem:[%s7 + $0x48] sm:$0xff]
        %v891 = vld [vmem:[%s7 + $0x50] sm:$0xff]
        %v892 = vld [vmem:[%s7 + $0x58] sm:$0xff]
        %v893 = vld [vmem:[%s7 + $0x60] sm:$0xff]
        %v894 = vld [vmem:[%s7 + $0x68] sm:$0xff]
        %v895 = vld [vmem:[%s7 + $0x70] sm:$0xff]
        %v896 = vld [vmem:[%s7 + $0x78] sm:$0xff]
        %v897 = vld [vmem:[%s8] sm:$0x1]
        %v899 = vperm.slane %v897, 0
        %v902 = vsel %vm496, %v880, 0
        %v905 = vsel %vm496, %v881, 0
        %v908 = vsel %vm496, %v882, 0
        %v911 = vsel %vm496, %v883, 0
        %v914 = vsel %vm496, %v884, 0
        %v917 = vsel %vm496, %v885, 0
        %v920 = vsel %vm496, %v886, 0
        %v923 = vsel %vm496, %v887, 0
        %v926 = vsel %vm496, %v888, 0
        %v929 = vsel %vm496, %v889, 0
        %v932 = vsel %vm496, %v890, 0
        %v935 = vsel %vm496, %v891, 0
        %v938 = vsel %vm496, %v892, 0
        %v941 = vsel %vm496, %v893, 0
        %v944 = vsel %vm496, %v894, 0
        %v947 = vsel %vm496, %v895, 0
        %v950 = vsel %vm496, %v896, 0
        %952 = vmatpush.xpose.msra.mxu0 %v950
        %953 = vmatpush.xpose.msra.mxu0 %v947
        %954 = vmatpush.xpose.msra.mxu0 %v944
        %955 = vmatpush.xpose.msra.mxu0 %v941
        %956 = vmatpush.xpose.msra.mxu0 %v938
        %957 = vmatpush.xpose.msra.mxu0 %v935
        %958 = vmatpush.xpose.msra.mxu0 %v932
        %959 = vmatpush.xpose.msra.mxu0 %v929
        %960 = vmatpush.xpose.msra.mxu0 %v926
        %961 = vmatpush.xpose.msra.mxu0 %v923
        %962 = vmatpush.xpose.msra.mxu0 %v920
        %963 = vmatpush.xpose.msra.mxu0 %v917
        %964 = vmatpush.xpose.msra.mxu0 %v914
        %965 = vmatpush.xpose.msra.mxu0 %v911
        %966 = vmatpush.xpose.msra.mxu0 %v908
        %967 = vmatpush.xpose.msra.mxu0 %v905
        %968 = vmatmul.f32.gmra.mxu0 %v902
        %v969 = vpop.f32.mrf.mxu0
        %v970 = vadd.f32 %v899, %v969
        %971 = vdwg.mxu0
        %v972 = vmax.f32 %v970, 0.0
        %v973 = vld [vmem:[%s9] sm:$0xff]
        %v974 = vld [vmem:[%s9 + $0x8] sm:$0xff]
        %v975 = vld [vmem:[%s9 + $0x10] sm:$0xff]
        %v976 = vld [vmem:[%s9 + $0x18] sm:$0xff]
        %v977 = vld [vmem:[%s9 + $0x20] sm:$0xff]
        %v978 = vld [vmem:[%s9 + $0x28] sm:$0xff]
        %v979 = vld [vmem:[%s9 + $0x30] sm:$0xff]
        %v980 = vld [vmem:[%s9 + $0x38] sm:$0xff]
        %v981 = vld [vmem:[%s9 + $0x40] sm:$0xff]
        %v982 = vld [vmem:[%s9 + $0x48] sm:$0xff]
        %v983 = vld [vmem:[%s9 + $0x50] sm:$0xff]
        %v984 = vld [vmem:[%s9 + $0x58] sm:$0xff]
        %v985 = vld [vmem:[%s9 + $0x60] sm:$0xff]
        %v986 = vld [vmem:[%s9 + $0x68] sm:$0xff]
        %v987 = vld [vmem:[%s9 + $0x70] sm:$0xff]
        %v988 = vld [vmem:[%s9 + $0x78] sm:$0xff]
        %v989 = vld [vmem:[%s10] sm:$0x1]
        %v991 = vperm.slane %v989, 0
        %993 = vmatpush.msra.mxu0 %v988
        %994 = vmatpush.msra.mxu0 %v987
        %995 = vmatpush.msra.mxu0 %v986
        %996 = vmatpush.msra.mxu0 %v985
        %997 = vmatpush.msra.mxu0 %v984
        %998 = vmatpush.msra.mxu0 %v983
        %999 = vmatpush.msra.mxu0 %v982
        %1000 = vmatpush.msra.mxu0 %v981
        %1001 = vmatpush.msra.mxu0 %v980
        %1002 = vmatpush.msra.mxu0 %v979
        %1003 = vmatpush.msra.mxu0 %v978
        %1004 = vmatpush.msra.mxu0 %v977
        %1005 = vmatpush.msra.mxu0 %v976
        %1006 = vmatpush.msra.mxu0 %v975
        %1007 = vmatpush.msra.mxu0 %v974
        %1008 = vmatpush.msra.mxu0 %v973
        %1009 = vmatmul.f32.gmra.mxu0 %v972
        %v1010 = vpop.f32.mrf.mxu0
        %v1011 = vadd.f32 %v991, %v1010
        %1012 = vdwg.mxu0
        %v1013 = vadd.f32 %v880, %v1011
        %v1014 = vsel %vm496, %v1013, 0.0
        %1015 = vadd.xlane.f32.xlu0 %v1014
        %v1016 = vpop.xlane.xlu0 %1015
        %v1017 = vmul.f32 %v1016, %v851
        %v1018 = vsub.f32 %v1013, %v1017
        %v1019 = vmul.f32 %v1018, %v1018
        %v1020 = vsel %vm496, %v1019, 0.0
        %1021 = vadd.xlane.f32.xlu0 %v1020
        %v1022 = vpop.xlane.xlu0 %1021
        %v1023 = vmul.f32 %v1022, %v851
        %v1024 = vadd.f32 %v1023, 1e-05
        %v1025 = vrsqrt.pop %v1024
        %v1026 = vmul.f32 %v1025, %v1024
        %v1027 = vmul.f32 %v1026, %v1025
        %v1028 = vmul.f32 0.5, %v1027
        %v1029 = vsub.f32 1.5, %v1028
        %v1030 = vmul.f32 %v1025, %v1029
        %vm1031 = vweird.f32 %v1024
        %vm1032 = vweird.f32 %v1025
        %vm1033 = vmor %vm1031, %vm1032
        %v1034 = vsel %vm1033, %v1025, %v1030
        %v1035 = vmul.f32 %v1018, %v1034
        %v1036 = vld [vmem:[%s11] sm:$0x1]
        %v1038 = vperm.slane %v1036, 0
        %v1040 = vmul.f32 %v1035, %v1038
        %v1041 = vld [vmem:[%s12] sm:$0x1]
        %v1043 = vperm.slane %v1041, 0
        %v1045 = vadd.f32 %v1040, %v1043
        %1046 = vst.msk [vmem:[%s445] sm:$0xff] %vm496, %v1045
        %s1047 = sand.u32 %s327, 1
        %s1048 = scalar_lea.sflag [#allocation6], %s1047
        %s1049 = sand.u32 %s327, 1
        %s1050 = smul.addr %s1049, 8
        %s1051 = scalar_lea.vmem [#allocation5], %s1050
        // Predicated region
        $region77: #{tpu_custom_call.1} parent=71 // pred_check
          %p1052 = pneg %p337
        $region78: #{tpu_custom_call.1} parent=71 // pred_check_branch
          %1054 = sbr.rel (%p1052) target = $region80
        $region79: #{tpu_custom_call.1} parent=71 // pred_region
          %1056 = vsyncadd %s1048, 0
          %s1057 = sadd.s32 %s32, %s31
          %s1058 = smul.addr %s1057, 8
          %s1059 = scalar_lea.hbm %s13, %s1058
          %s1061 = sshll.u32 %s1051, 4
          %s1062 = int_to_ptr.vmem [resolvable:$true] %s1061
          %s1063 = sshll.u32 %s1059, 4
          %s1064 = int_to_ptr.hbm [resolvable:$true] %s1063
          %1066 = dma.vmem_to_hbm [thread:$0]  %s1062, 128, %s1064, %s1048
        $region80: #{tpu_custom_call.1} parent=71 // pred_fallthru
          _
      $region72: #{tpu_custom_call.1} parent=5 // pred_fallthru
        _
      %p1067 = scmp.le.s32.totalorder 2, %s22
      // Predicated region
      $region81: #{tpu_custom_call.1} parent=5 // pred_check
        %p1068 = pneg %p1067
      $region82: #{tpu_custom_call.1} parent=5 // pred_check_branch
        %1070 = sbr.rel (%p1068) target = $region84
      $region83: #{tpu_custom_call.1} parent=5 // pred_region
        %s1071 = ssub.s32 %s22, 2
        // Predicated region
        $region85: #{tpu_custom_call.1} parent=83 // pred_check
          %p1072 = pneg %p343
        $region86: #{tpu_custom_call.1} parent=83 // pred_check_branch
          %1074 = sbr.rel (%p1072) target = $region88
        $region87: #{tpu_custom_call.1} parent=83 // pred_region
          %s1075 = sand.u32 %s328, 1
          %s1076 = scalar_lea.sflag [#allocation6], %s1075
          %s1077 = sand.u32 %s328, 1
          %s1078 = smul.addr %s1077, 8
          %s1079 = scalar_lea.vmem [#allocation5], %s1078
          %1081 = dma.done %s1076, 128
        $region88: #{tpu_custom_call.1} parent=83 // pred_fallthru
          _
      $region84: #{tpu_custom_call.1} parent=5 // pred_fallthru
        _
    $region6: #{tpu_custom_call.1} parent=1 // loop_footer
      %s26 = sadd.s32 1, %s22
    $region7: #{tpu_custom_call.1} parent=1 // loop_footer_branch
      %21 = sbr.rel target = $region3
    $region8: #{tpu_custom_call.1} parent=1 // loop_exit
      _
    %1082 = vsyncpa [#allocation6], 1
    %s1083 = scalar_lea.sflag [#allocation6], 1
    %1084 = vsyncpa %s1083, 1

// kernel: tpu_custom_call.1
$region0: #{tpu_custom_call.1}
  #allocation0 [shape = 'u32[]', space=smem, size = 0x4, offset = 0x4, fixed_abs, tag = 'smem constant byte address 0x4 - core index']
  #allocation1 [shape = 'u32[72,128]{1,0:T(1,128)}', space=vmem, size = 0x9000, scoped, tag = 'internal scratch']
  #allocation2 [shape = 'f32[8,32]{1,0:T(8,128)}', space=vmem, size = 0x1000, scoped, tag = 'scratch operand']
  #allocation3 [shape = 'f32[8,32]{1,0:T(8,128)}', space=vmem, size = 0x1000, scoped, tag = 'scratch operand']
  #allocation4 [shape = 'f32[8,32]{1,0:T(8,128)}', space=vmem, size = 0x1000, scoped, tag = 'scratch operand']
  %s0 = inlined_call_operand.vmem [shape: f32[2,8,32], index: 0, kind: input, shape index: {}]
  %s1 = inlined_call_operand.vmem [shape: f32[32,32], index: 1, kind: input, shape index: {}]
  %s2 = inlined_call_operand.vmem [shape: f32[32,64], index: 2, kind: input, shape index: {}]
  %s3 = inlined_call_operand.vmem [shape: f32[32,32], index: 3, kind: input, shape index: {}]
  %s4 = inlined_call_operand.vmem [shape: f32[1,32], index: 4, kind: input, shape index: {}]
  %s5 = inlined_call_operand.vmem [shape: f32[1,32], index: 5, kind: input, shape index: {}]
  %s6 = inlined_call_operand.vmem [shape: f32[1,32], index: 6, kind: input, shape index: {}]
  %s7 = inlined_call_operand.vmem [shape: f32[128,32], index: 7, kind: input, shape index: {}]
  %s8 = inlined_call_operand.vmem [shape: f32[1,128], index: 8, kind: input, shape index: {}]
  %s9 = inlined_call_operand.vmem [shape: f32[128,32], index: 9, kind: input, shape index: {}]
  %s10 = inlined_call_operand.vmem [shape: f32[1,32], index: 10, kind: input, shape index: {}]
  %s11 = inlined_call_operand.vmem [shape: f32[1,32], index: 11, kind: input, shape index: {}]
  %s12 = inlined_call_operand.vmem [shape: f32[1,32], index: 12, kind: input, shape index: {}]
  %s13 = inlined_call_operand.hbm [shape: f32[2,8,32], index: 13, kind: output, shape index: {}]
  %s14 = sld [smem:[#allocation0]]
  $region89: #{tpu_custom_call.1} parent=0
    _
  %s16 = ssub.s32 1, %s14
  %s17 = scalar_select 0, %s16, %s14
  $region1: #{tpu_custom_call.1} parent=0
    #allocation5 [shape = 'u8[8192]{0}', space=vmem, size = 0x2000, scoped, tag = 'output window, operand 0']
    #allocation6 [shape = 's32[2]{0}', space=sflag, size = 0x8, scoped, tag = 'scoped memory for tpu_custom_call.1']
    %18 = vsyncpa [#allocation6], 0
    %s19 = scalar_lea.sflag [#allocation6], 1
    %20 = vsyncpa %s19, 0
    loop: start=0, step=1, limit=4
    $region2: #{tpu_custom_call.1} parent=1 // loop_pre_header
      _
    $region3: #{tpu_custom_call.1} parent=1 // loop_header
      %s22 = sphi 0, %s26
      %p23 = scmp.ge.s32.totalorder %s22, 4
      %s29 = sphi 0, %s41
      %s30 = sphi 0, %s37
      %s31 = sphi 0, %s29
      %s32 = sphi 0, %s30
      %s33 = sphi 0, %s31
      %s34 = sphi 0, %s32
      %s44 = sphi 0, %s46
      %s47 = sphi 0, %s44
      %s48 = sphi 0, %s47
      %s64 = sphi 0, %s48
      %s68 = sphi 0, %s68
      %s70 = sphi 0, %s68
      %s71 = sphi 0, %s70
      %s85 = sphi 0, %s71
      %s89 = sphi 0, %s89
      %s91 = sphi 0, %s89
      %s92 = sphi 0, %s91
      %s106 = sphi 0, %s92
      %s110 = sphi 0, %s110
      %s112 = sphi 0, %s110
      %s113 = sphi 0, %s112
      %s127 = sphi 0, %s113
      %s131 = sphi 0, %s131
      %s133 = sphi 0, %s131
      %s134 = sphi 0, %s133
      %s148 = sphi 0, %s134
      %s152 = sphi 0, %s152
      %s154 = sphi 0, %s152
      %s155 = sphi 0, %s154
      %s169 = sphi 0, %s155
      %s173 = sphi 0, %s173
      %s175 = sphi 0, %s173
      %s176 = sphi 0, %s175
      %s190 = sphi 0, %s176
      %s194 = sphi 0, %s194
      %s196 = sphi 0, %s194
      %s197 = sphi 0, %s196
      %s211 = sphi 0, %s197
      %s215 = sphi 0, %s215
      %s217 = sphi 0, %s215
      %s218 = sphi 0, %s217
      %s232 = sphi 0, %s218
      %s236 = sphi 0, %s236
      %s238 = sphi 0, %s236
      %s239 = sphi 0, %s238
      %s253 = sphi 0, %s239
      %s257 = sphi 0, %s257
      %s259 = sphi 0, %s257
      %s260 = sphi 0, %s259
      %s274 = sphi 0, %s260
      %s278 = sphi 0, %s278
      %s280 = sphi 0, %s278
      %s281 = sphi 0, %s280
      %s295 = sphi 0, %s281
      %s299 = sphi 0, %s299
      %s301 = sphi 0, %s299
      %s302 = sphi 0, %s301
      %s316 = sphi 0, %s302
      %s324 = sphi 0, %s326
      %s327 = sphi 0, %s324
      %s328 = sphi 0, %s327
      %s344 = sphi 0, %s328
    $region4: #{tpu_custom_call.1} parent=1 // loop_header_branch
      %25 = sbr.rel (%p23) target = $region8
    $region5: #{tpu_custom_call.1} parent=1 // loop_body
      %s27 = ssub.s32 %s22, 1
      %s28 = ssub.s32 %s22, 2
      %s35 = sadd.s32 1, %s30
      %p36 = scmp.ge.s32.totalorder %s35, 1
      %s37 = scalar_select %p36, 0, %s35
      %s38 = sadd.s32 1, %s29
      %s39 = scalar_select %p36, %s38, %s29
      %p40 = scmp.ge.s32.totalorder %s39, 2
      %s41 = scalar_select %p40, 0, %s39
      %s42 = ssub.s32 %s29, %s41
      %p43 = scmp.eq.s32.totalorder %s42, 0
      %s45 = sadd.s32 %s44, 1
      %s46 = scalar_select %p43, %s44, %s45
      %p49 = pneg %p43
      %p50 = scmp.eq.s32.totalorder %s22, 1
      %p51 = por %p49, %p50
      %p52 = scmp.ne.s32.totalorder %s44, %s47
      %p53 = scmp.eq.s32.totalorder %s22, 0
      %p54 = por %p52, %p53
      %p55 = scmp.ne.s32.totalorder %s44, %s47
      %p56 = scmp.eq.s32.totalorder %s27, 1
      %p57 = por %p55, %p56
      %p58 = scmp.ne.s32.totalorder %s47, %s48
      %p59 = scmp.eq.s32.totalorder %s27, 0
      %p60 = por %p58, %p59
      %p61 = scmp.ne.s32.totalorder %s47, %s48
      %p62 = scmp.eq.s32.totalorder %s28, 1
      %p63 = por %p61, %p62
      %p65 = scmp.ne.s32.totalorder %s48, %s64
      %p66 = scmp.eq.s32.totalorder %s28, 0
      %p67 = por %p65, %p66
      %s69 = sadd.s32 %s68, 1
      %p72 = scmp.eq.s32.totalorder %s22, 1
      %p73 = scmp.ne.s32.totalorder %s68, %s70
      %p74 = scmp.eq.s32.totalorder %s22, 0
      %p75 = por %p73, %p74
      %p76 = scmp.ne.s32.totalorder %s68, %s70
      %p77 = scmp.eq.s32.totalorder %s27, 1
      %p78 = por %p76, %p77
      %p79 = scmp.ne.s32.totalorder %s70, %s71
      %p80 = scmp.eq.s32.totalorder %s27, 0
      %p81 = por %p79, %p80
      %p82 = scmp.ne.s32.totalorder %s70, %s71
      %p83 = scmp.eq.s32.totalorder %s28, 1
      %p84 = por %p82, %p83
      %p86 = scmp.ne.s32.totalorder %s71, %s85
      %p87 = scmp.eq.s32.totalorder %s28, 0
      %p88 = por %p86, %p87
      %s90 = sadd.s32 %s89, 1
      %p93 = scmp.eq.s32.totalorder %s22, 1
      %p94 = scmp.ne.s32.totalorder %s89, %s91
      %p95 = scmp.eq.s32.totalorder %s22, 0
      %p96 = por %p94, %p95
      %p97 = scmp.ne.s32.totalorder %s89, %s91
      %p98 = scmp.eq.s32.totalorder %s27, 1
      %p99 = por %p97, %p98
      %p100 = scmp.ne.s32.totalorder %s91, %s92
      %p101 = scmp.eq.s32.totalorder %s27, 0
      %p102 = por %p100, %p101
      %p103 = scmp.ne.s32.totalorder %s91, %s92
      %p104 = scmp.eq.s32.totalorder %s28, 1
      %p105 = por %p103, %p104
      %p107 = scmp.ne.s32.totalorder %s92, %s106
      %p108 = scmp.eq.s32.totalorder %s28, 0
      %p109 = por %p107, %p108
      %s111 = sadd.s32 %s110, 1
      %p114 = scmp.eq.s32.totalorder %s22, 1
      %p115 = scmp.ne.s32.totalorder %s110, %s112
      %p116 = scmp.eq.s32.totalorder %s22, 0
      %p117 = por %p115, %p116
      %p118 = scmp.ne.s32.totalorder %s110, %s112
      %p119 = scmp.eq.s32.totalorder %s27, 1
      %p120 = por %p118, %p119
      %p121 = scmp.ne.s32.totalorder %s112, %s113
      %p122 = scmp.eq.s32.totalorder %s27, 0
      %p123 = por %p121, %p122
      %p124 = scmp.ne.s32.totalorder %s112, %s113
      %p125 = scmp.eq.s32.totalorder %s28, 1
      %p126 = por %p124, %p125
      %p128 = scmp.ne.s32.totalorder %s113, %s127
      %p129 = scmp.eq.s32.totalorder %s28, 0
      %p130 = por %p128, %p129
      %s132 = sadd.s32 %s131, 1
      %p135 = scmp.eq.s32.totalorder %s22, 1
      %p136 = scmp.ne.s32.totalorder %s131, %s133
      %p137 = scmp.eq.s32.totalorder %s22, 0
      %p138 = por %p136, %p137
      %p139 = scmp.ne.s32.totalorder %s131, %s133
      %p140 = scmp.eq.s32.totalorder %s27, 1
      %p141 = por %p139, %p140
      %p142 = scmp.ne.s32.totalorder %s133, %s134
      %p143 = scmp.eq.s32.totalorder %s27, 0
      %p144 = por %p142, %p143
      %p145 = scmp.ne.s32.totalorder %s133, %s134
      %p146 = scmp.eq.s32.totalorder %s28, 1
      %p147 = por %p145, %p146
      %p149 = scmp.ne.s32.totalorder %s134, %s148
      %p150 = scmp.eq.s32.totalorder %s28, 0
      %p151 = por %p149, %p150
      %s153 = sadd.s32 %s152, 1
      %p156 = scmp.eq.s32.totalorder %s22, 1
      %p157 = scmp.ne.s32.totalorder %s152, %s154
      %p158 = scmp.eq.s32.totalorder %s22, 0
      %p159 = por %p157, %p158
      %p160 = scmp.ne.s32.totalorder %s152, %s154
      %p161 = scmp.eq.s32.totalorder %s27, 1
      %p162 = por %p160, %p161
      %p163 = scmp.ne.s32.totalorder %s154, %s155
      %p164 = scmp.eq.s32.totalorder %s27, 0
      %p165 = por %p163, %p164
      %p166 = scmp.ne.s32.totalorder %s154, %s155
      %p167 = scmp.eq.s32.totalorder %s28, 1
      %p168 = por %p166, %p167
      %p170 = scmp.ne.s32.totalorder %s155, %s169
      %p171 = scmp.eq.s32.totalorder %s28, 0
      %p172 = por %p170, %p171
      %s174 = sadd.s32 %s173, 1
      %p177 = scmp.eq.s32.totalorder %s22, 1
      %p178 = scmp.ne.s32.totalorder %s173, %s175
      %p179 = scmp.eq.s32.totalorder %s22, 0
      %p180 = por %p178, %p179
      %p181 = scmp.ne.s32.totalorder %s173, %s175
      %p182 = scmp.eq.s32.totalorder %s27, 1
      %p183 = por %p181, %p182
      %p184 = scmp.ne.s32.totalorder %s175, %s176
      %p185 = scmp.eq.s32.totalorder %s27, 0
      %p186 = por %p184, %p185
      %p187 = scmp.ne.s32.totalorder %s175, %s176
      %p188 = scmp.eq.s32.totalorder %s28, 1
      %p189 = por %p187, %p188
      %p191 = scmp.ne.s32.totalorder %s176, %s190
      %p192 = scmp.eq.s32.totalorder %s28, 0
      %p193 = por %p191, %p192
      %s195 = sadd.s32 %s194, 1
      %p198 = scmp.eq.s32.totalorder %s22, 1
      %p199 = scmp.ne.s32.totalorder %s194, %s196
      %p200 = scmp.eq.s32.totalorder %s22, 0
      %p201 = por %p199, %p200
      %p202 = scmp.ne.s32.totalorder %s194, %s196
      %p203 = scmp.eq.s32.totalorder %s27, 1
      %p204 = por %p202, %p203
      %p205 = scmp.ne.s32.totalorder %s196, %s197
      %p206 = scmp.eq.s32.totalorder %s27, 0
      %p207 = por %p205, %p206
      %p208 = scmp.ne.s32.totalorder %s196, %s197
      %p209 = scmp.eq.s32.totalorder %s28, 1
      %p210 = por %p208, %p209
      %p212 = scmp.ne.s32.totalorder %s197, %s211
      %p213 = scmp.eq.s32.totalorder %s28, 0
      %p214 = por %p212, %p213
      %s216 = sadd.s32 %s215, 1
      %p219 = scmp.eq.s32.totalorder %s22, 1
      %p220 = scmp.ne.s32.totalorder %s215, %s217
      %p221 = scmp.eq.s32.totalorder %s22, 0
      %p222 = por %p220, %p221
      %p223 = scmp.ne.s32.totalorder %s215, %s217
      %p224 = scmp.eq.s32.totalorder %s27, 1
      %p225 = por %p223, %p224
      %p226 = scmp.ne.s32.totalorder %s217, %s218
      %p227 = scmp.eq.s32.totalorder %s27, 0
      %p228 = por %p226, %p227
      %p229 = scmp.ne.s32.totalorder %s217, %s218
      %p230 = scmp.eq.s32.totalorder %s28, 1
      %p231 = por %p229, %p230
      %p233 = scmp.ne.s32.totalorder %s218, %s232
      %p234 = scmp.eq.s32.totalorder %s28, 0
      %p235 = por %p233, %p234
      %s237 = sadd.s32 %s236, 1
      %p240 = scmp.eq.s32.totalorder %s22, 1
      %p241 = scmp.ne.s32.totalorder %s236, %s238
      %p242 = scmp.eq.s32.totalorder %s22, 0
      %p243 = por %p241, %p242
      %p244 = scmp.ne.s32.totalorder %s236, %s238
      %p245 = scmp.eq.s32.totalorder %s27, 1
      %p246 = por %p244, %p245
      %p247 = scmp.ne.s32.totalorder %s238, %s239
      %p248 = scmp.eq.s32.totalorder %s27, 0
      %p249 = por %p247, %p248
      %p250 = scmp.ne.s32.totalorder %s238, %s239
      %p251 = scmp.eq.s32.totalorder %s28, 1
      %p252 = por %p250, %p251
      %p254 = scmp.ne.s32.totalorder %s239, %s253
      %p255 = scmp.eq.s32.totalorder %s28, 0
      %p256 = por %p254, %p255
      %s258 = sadd.s32 %s257, 1
      %p261 = scmp.eq.s32.totalorder %s22, 1
      %p262 = scmp.ne.s32.totalorder %s257, %s259
      %p263 = scmp.eq.s32.totalorder %s22, 0
      %p264 = por %p262, %p263
      %p265 = scmp.ne.s32.totalorder %s257, %s259
      %p266 = scmp.eq.s32.totalorder %s27, 1
      %p267 = por %p265, %p266
      %p268 = scmp.ne.s32.totalorder %s259, %s260
      %p269 = scmp.eq.s32.totalorder %s27, 0
      %p270 = por %p268, %p269
      %p271 = scmp.ne.s32.totalorder %s259, %s260
      %p272 = scmp.eq.s32.totalorder %s28, 1
      %p273 = por %p271, %p272
      %p275 = scmp.ne.s32.totalorder %s260, %s274
      %p276 = scmp.eq.s32.totalorder %s28, 0
      %p277 = por %p275, %p276
      %s279 = sadd.s32 %s278, 1
      %p282 = scmp.eq.s32.totalorder %s22, 1
      %p283 = scmp.ne.s32.totalorder %s278, %s280
      %p284 = scmp.eq.s32.totalorder %s22, 0
      %p285 = por %p283, %p284
      %p286 = scmp.ne.s32.totalorder %s278, %s280
      %p287 = scmp.eq.s32.totalorder %s27, 1
      %p288 = por %p286, %p287
      %p289 = scmp.ne.s32.totalorder %s280, %s281
      %p290 = scmp.eq.s32.totalorder %s27, 0
      %p291 = por %p289, %p290
      %p292 = scmp.ne.s32.totalorder %s280, %s281
      %p293 = scmp.eq.s32.totalorder %s28, 1
      %p294 = por %p292, %p293
      %p296 = scmp.ne.s32.totalorder %s281, %s295
      %p297 = scmp.eq.s32.totalorder %s28, 0
      %p298 = por %p296, %p297
      %s300 = sadd.s32 %s299, 1
      %p303 = scmp.eq.s32.totalorder %s22, 1
      %p304 = scmp.ne.s32.totalorder %s299, %s301
      %p305 = scmp.eq.s32.totalorder %s22, 0
      %p306 = por %p304, %p305
      %p307 = scmp.ne.s32.totalorder %s299, %s301
      %p308 = scmp.eq.s32.totalorder %s27, 1
      %p309 = por %p307, %p308
      %p310 = scmp.ne.s32.totalorder %s301, %s302
      %p311 = scmp.eq.s32.totalorder %s27, 0
      %p312 = por %p310, %p311
      %p313 = scmp.ne.s32.totalorder %s301, %s302
      %p314 = scmp.eq.s32.totalorder %s28, 1
      %p315 = por %p313, %p314
      %p317 = scmp.ne.s32.totalorder %s302, %s316
      %p318 = scmp.eq.s32.totalorder %s28, 0
      %p319 = por %p317, %p318
      %s320 = ssub.s32 %s29, %s41
      %s321 = ssub.s32 %s30, %s37
      %s322 = sor.u32 %s320, %s321
      %p323 = scmp.eq.s32.totalorder %s322, 0
      %s325 = sadd.s32 %s324, 1
      %s326 = scalar_select %p323, %s324, %s325
      %p329 = pneg %p323
      %p330 = scmp.eq.s32.totalorder %s22, 1
      %p331 = por %p329, %p330
      %p332 = scmp.ne.s32.totalorder %s324, %s327
      %p333 = scmp.eq.s32.totalorder %s22, 0
      %p334 = por %p332, %p333
      %p335 = scmp.ne.s32.totalorder %s324, %s327
      %p336 = scmp.eq.s32.totalorder %s27, 1
      %p337 = por %p335, %p336
      %p338 = scmp.ne.s32.totalorder %s327, %s328
      %p339 = scmp.eq.s32.totalorder %s27, 0
      %p340 = por %p338, %p339
      %p341 = scmp.ne.s32.totalorder %s327, %s328
      %p342 = scmp.eq.s32.totalorder %s28, 1
      %p343 = por %p341, %p342
      %p345 = scmp.ne.s32.totalorder %s328, %s344
      %p346 = scmp.eq.s32.totalorder %s28, 0
      %p347 = por %p345, %p346
      %p348 = scmp.le.s32.totalorder 1, %s22
      %p349 = scmp.lt.s32.totalorder %s22, 3
      %p350 = pnand %p348, %p349
      %p351 = pneg %p350
      // Predicated region
      $region9: #{tpu_custom_call.1} parent=5 // pred_check
        _
      $region10: #{tpu_custom_call.1} parent=5 // pred_check_branch
        %353 = sbr.rel (%p350) target = $region12
      $region11: #{tpu_custom_call.1} parent=5 // pred_region
        %s354 = ssub.s32 %s22, 1
        // Predicated region
        $region13: #{tpu_custom_call.1} parent=11 // pred_check
          %p355 = pneg %p81
        $region14: #{tpu_custom_call.1} parent=11 // pred_check_branch
          %357 = sbr.rel (%p355) target = $region16
        $region15: #{tpu_custom_call.1} parent=11 // pred_region
          _
        $region16: #{tpu_custom_call.1} parent=11 // pred_fallthru
          _
        // Predicated region
        $region17: #{tpu_custom_call.1} parent=11 // pred_check
          %p358 = pneg %p102
        $region18: #{tpu_custom_call.1} parent=11 // pred_check_branch
          %360 = sbr.rel (%p358) target = $region20
        $region19: #{tpu_custom_call.1} parent=11 // pred_region
          _
        $region20: #{tpu_custom_call.1} parent=11 // pred_fallthru
          _
        // Predicated region
        $region21: #{tpu_custom_call.1} parent=11 // pred_check
          %p361 = pneg %p123
        $region22: #{tpu_custom_call.1} parent=11 // pred_check_branch
          %363 = sbr.rel (%p361) target = $region24
        $region23: #{tpu_custom_call.1} parent=11 // pred_region
          _
        $region24: #{tpu_custom_call.1} parent=11 // pred_fallthru
          _
        // Predicated region
        $region25: #{tpu_custom_call.1} parent=11 // pred_check
          %p364 = pneg %p144
        $region26: #{tpu_custom_call.1} parent=11 // pred_check_branch
          %366 = sbr.rel (%p364) target = $region28
        $region27: #{tpu_custom_call.1} parent=11 // pred_region
          _
        $region28: #{tpu_custom_call.1} parent=11 // pred_fallthru
          _
        // Predicated region
        $region29: #{tpu_custom_call.1} parent=11 // pred_check
          %p367 = pneg %p165
        $region30: #{tpu_custom_call.1} parent=11 // pred_check_branch
          %369 = sbr.rel (%p367) target = $region32
        $region31: #{tpu_custom_call.1} parent=11 // pred_region
          _
        $region32: #{tpu_custom_call.1} parent=11 // pred_fallthru
          _
        // Predicated region
        $region33: #{tpu_custom_call.1} parent=11 // pred_check
          %p370 = pneg %p186
        $region34: #{tpu_custom_call.1} parent=11 // pred_check_branch
          %372 = sbr.rel (%p370) target = $region36
        $region35: #{tpu_custom_call.1} parent=11 // pred_region
          _
        $region36: #{tpu_custom_call.1} parent=11 // pred_fallthru
          _
        // Predicated region
        $region37: #{tpu_custom_call.1} parent=11 // pred_check
          %p373 = pneg %p207
        $region38: #{tpu_custom_call.1} parent=11 // pred_check_branch
          %375 = sbr.rel (%p373) target = $region40
        $region39: #{tpu_custom_call.1} parent=11 // pred_region
          _
        $region40: #{tpu_custom_call.1} parent=11 // pred_fallthru
          _
        // Predicated region
        $region41: #{tpu_custom_call.1} parent=11 // pred_check
          %p376 = pneg %p228
        $region42: #{tpu_custom_call.1} parent=11 // pred_check_branch
          %378 = sbr.rel (%p376) target = $region44
        $region43: #{tpu_custom_call.1} parent=11 // pred_region
          _
        $region44: #{tpu_custom_call.1} parent=11 // pred_fallthru
          _
        // Predicated region
        $region45: #{tpu_custom_call.1} parent=11 // pred_check
          %p379 = pneg %p249
        $region46: #{tpu_custom_call.1} parent=11 // pred_check_branch
          %381 = sbr.rel (%p379) target = $region48
        $region47: #{tpu_custom_call.1} parent=11 // pred_region
          _
        $region48: #{tpu_custom_call.1} parent=11 // pred_fallthru
          _
        // Predicated region
        $region49: #{tpu_custom_call.1} parent=11 // pred_check
          %p382 = pneg %p270
        $region50: #{tpu_custom_call.1} parent=11 // pred_check_branch
          %384 = sbr.rel (%p382) target = $region52
        $region51: #{tpu_custom_call.1} parent=11 // pred_region
          _
        $region52: #{tpu_custom_call.1} parent=11 // pred_fallthru
          _
        // Predicated region
        $region53: #{tpu_custom_call.1} parent=11 // pred_check
          %p385 = pneg %p291
        $region54: #{tpu_custom_call.1} parent=11 // pred_check_branch
          %387 = sbr.rel (%p385) target = $region56
        $region55: #{tpu_custom_call.1} parent=11 // pred_region
          _
        $region56: #{tpu_custom_call.1} parent=11 // pred_fallthru
          _
        // Predicated region
        $region57: #{tpu_custom_call.1} parent=11 // pred_check
          %p388 = pneg %p312
        $region58: #{tpu_custom_call.1} parent=11 // pred_check_branch
          %390 = sbr.rel (%p388) target = $region60
        $region59: #{tpu_custom_call.1} parent=11 // pred_region
          _
        $region60: #{tpu_custom_call.1} parent=11 // pred_fallthru
          _
      $region12: #{tpu_custom_call.1} parent=5 // pred_fallthru
        _
      %p391 = scmp.lt.s32.totalorder %s22, 2
      // Predicated region
      $region61: #{tpu_custom_call.1} parent=5 // pred_check
        %p392 = pneg %p391
      $region62: #{tpu_custom_call.1} parent=5 // pred_check_branch
        %394 = sbr.rel (%p392) target = $region64
      $region63: #{tpu_custom_call.1} parent=5 // pred_region
        // Predicated region
        $region65: #{tpu_custom_call.1} parent=63 // pred_check
          %p395 = pneg %p54
        $region66: #{tpu_custom_call.1} parent=63 // pred_check_branch
          %397 = sbr.rel (%p395) target = $region68
        $region67: #{tpu_custom_call.1} parent=63 // pred_region
          %p398 = scmp.lt.s32.totalorder %s29, 1
          %s399 = scalar_select %p398, %s29, 1
          %s400 = smul.addr %s399, 8
          %s401 = scalar_lea.vmem %s0, %s400
        $region68: #{tpu_custom_call.1} parent=63 // pred_fallthru
          _
      $region64: #{tpu_custom_call.1} parent=5 // pred_fallthru
        _
      %p402 = scmp.le.s32.totalorder 1, %s22
      %p403 = scmp.lt.s32.totalorder %s22, 3
      %p404 = pnand %p402, %p403
      %p405 = pneg %p404
      // Predicated region
      $region69: #{tpu_custom_call.1} parent=5 // pred_check
        _
      $region70: #{tpu_custom_call.1} parent=5 // pred_check_branch
        %407 = sbr.rel (%p404) target = $region72
      $region71: #{tpu_custom_call.1} parent=5 // pred_region
        %s408 = ssub.s32 %s22, 1
        %p409 = scmp.lt.s32.totalorder %s31, 1
        %s410 = scalar_select %p409, %s31, 1
        %s411 = smul.addr %s410, 8
        %s412 = scalar_lea.vmem %s0, %s411
        %p413 = pneg %p60
        %p414 = pneg %p57
        %p415 = pneg %p81
        %p416 = pneg %p78
        %p417 = pneg %p102
        %p418 = pneg %p99
        %p419 = pneg %p123
        %p420 = pneg %p120
        %p421 = pneg %p144
        %p422 = pneg %p141
        %p423 = pneg %p165
        %p424 = pneg %p162
        %p425 = pneg %p186
        %p426 = pneg %p183
        %p427 = pneg %p207
        %p428 = pneg %p204
        %p429 = pneg %p228
        %p430 = pneg %p225
        %p431 = pneg %p249
        %p432 = pneg %p246
        %p433 = pneg %p270
        %p434 = pneg %p267
        %p435 = pneg %p291
        %p436 = pneg %p288
        %p437 = pneg %p312
        %p438 = pneg %p309
        %p439 = pneg %p340
        %p440 = pneg %p337
        %s441 = sand.u32 %s327, 1
        %s442 = scalar_lea.sflag [#allocation6], %s441
        %s443 = sand.u32 %s327, 1
        %s444 = smul.addr %s443, 8
        %s445 = scalar_lea.vmem [#allocation5], %s444
        %p446 = scmp.lt.s32.totalorder %s31, 1
        %s447 = scalar_select %p446, %s31, 1
        %s448 = smul.addr %s447, 8
        %s449 = scalar_lea.vmem %s0, %s448
        %p450 = scmp.eq.s32.totalorder %s32, 0
        // Predicated region
        $region73: #{tpu_custom_call.1} parent=71 // pred_check
          %p451 = pneg %p450
        $region74: #{tpu_custom_call.1} parent=71 // pred_check_branch
          %453 = sbr.rel (%p451) target = $region76
        $region75: #{tpu_custom_call.1} parent=71 // pred_region
          %v454 = vld [vmem:[%s449] sm:$0xff]
          %v455 = vld [vmem:[%s2] sm:$0xff]
          %v456 = vld [vmem:[%s2 + $0x8] sm:$0xff]
          %v457 = vld [vmem:[%s2 + $0x10] sm:$0xff]
          %v458 = vld [vmem:[%s2 + $0x18] sm:$0xff]
          %vm459 = vcmask 261120
          %v461 = vsel %vm459, %v454, 0
          %463 = vmatpush.msra.mxu0 0.0
          %464 = vmatpush.msra.mxu0 0.0
          %465 = vmatpush.msra.mxu0 0.0
          %466 = vmatpush.msra.mxu0 0.0
          %467 = vmatpush.msra.mxu0 0.0
          %468 = vmatpush.msra.mxu0 0.0
          %469 = vmatpush.msra.mxu0 0.0
          %470 = vmatpush.msra.mxu0 0.0
          %471 = vmatpush.msra.mxu0 0.0
          %472 = vmatpush.msra.mxu0 0.0
          %473 = vmatpush.msra.mxu0 0.0
          %474 = vmatpush.msra.mxu0 0.0
          %475 = vmatpush.msra.mxu0 %v458
          %476 = vmatpush.msra.mxu0 %v457
          %477 = vmatpush.msra.mxu0 %v456
          %478 = vmatpush.msra.mxu0 %v455
          %479 = vmatmul.f32.gmra.mxu0 %v461
          %v480 = vpop.f32.mrf.mxu0
          %v481 = vadd.f32 0.0, %v480
          %482 = vdwg.mxu0
          %483 = vst.msk [vmem:[#allocation2] sm:$0xff] %vm459, %v481
          %485 = vrot.lane.b32.xlu0 %v481, 96
          %v486 = vpop.permute.xlu0 %485
          %488 = vst.msk [vmem:[#allocation3] sm:$0xff] %vm459, %v486
        $region76: #{tpu_custom_call.1} parent=71 // pred_fallthru
          _
        %s489 = smul.u32 %s32, 8
        %s490 = scalar_lea.vmem %s449, %s489
        %v491 = vld [vmem:[%s490] sm:$0xff]
        %v492 = vld [vmem:[%s1] sm:$0xff]
        %v493 = vld [vmem:[%s1 + $0x8] sm:$0xff]
        %v494 = vld [vmem:[%s1 + $0x10] sm:$0xff]
        %v495 = vld [vmem:[%s1 + $0x18] sm:$0xff]
        %vm496 = vcmask 261120
        %v498 = vsel %vm496, %v491, 0
        %500 = vmatpush.msra.mxu0 0.0
        %501 = vmatpush.msra.mxu0 0.0
        %502 = vmatpush.msra.mxu0 0.0
        %503 = vmatpush.msra.mxu0 0.0
        %504 = vmatpush.msra.mxu0 0.0
        %505 = vmatpush.msra.mxu0 0.0
        %506 = vmatpush.msra.mxu0 0.0
        %507 = vmatpush.msra.mxu0 0.0
        %508 = vmatpush.msra.mxu0 0.0
        %509 = vmatpush.msra.mxu0 0.0
        %510 = vmatpush.msra.mxu0 0.0
        %511 = vmatpush.msra.mxu0 0.0
        %512 = vmatpush.msra.mxu0 %v495
        %513 = vmatpush.msra.mxu0 %v494
        %514 = vmatpush.msra.mxu0 %v493
        %515 = vmatpush.msra.mxu0 %v492
        %516 = vmatmul.f32.gmra.mxu0 %v498
        %v517 = vpop.f32.mrf.mxu0
        %v518 = vadd.f32 0.0, %v517
        %519 = vdwg.mxu0
        %v520 = vld [vmem:[#allocation2] sm:$0xff]
        %vm521 = vcmask 64512
        %v523 = vsel %vm521, %v518, 0
        %v526 = vsel %vm521, %v520, 0
        %528 = vmatpush.xpose.msra.mxu0 0.0
        %529 = vmatpush.xpose.msra.mxu0 0.0
        %530 = vmatpush.xpose.msra.mxu0 0.0
        %531 = vmatpush.xpose.msra.mxu0 0.0
        %532 = vmatpush.xpose.msra.mxu0 0.0
        %533 = vmatpush.xpose.msra.mxu0 0.0
        %534 = vmatpush.xpose.msra.mxu0 0.0
        %535 = vmatpush.xpose.msra.mxu0 0.0
        %536 = vmatpush.xpose.msra.mxu0 0.0
        %537 = vmatpush.xpose.msra.mxu0 0.0
        %538 = vmatpush.xpose.msra.mxu0 0.0
        %539 = vmatpush.xpose.msra.mxu0 0.0
        %540 = vmatpush.xpose.msra.mxu0 0.0
        %541 = vmatpush.xpose.msra.mxu0 0.0
        %542 = vmatpush.xpose.msra.mxu0 0.0
        %543 = vmatpush.xpose.msra.mxu0 %v526
        %544 = vmatmul.f32.gmra.mxu0 %v523
        %v545 = vpop.f32.mrf.mxu0
        %v546 = vadd.f32 0.0, %v545
        %547 = vdwg.mxu0
        %v548 = vsel %vm521, %v546, -inf
        %549 = vmax.xlane.f32.xlu0 %v548
        %v550 = vpop.xlane.xlu0 %549
        %v551 = vsub.f32 %v546, %v550
        %v552 = vmul.f32 %v551, 1.442695
        %v553 = vpow.pop %v552
        %v554 = vsel %vm521, %v553, 0.0
        %555 = vadd.xlane.f32.xlu0 %v554
        %v556 = vpop.xlane.xlu0 %555
        %v557 = vrcp.pop %v556
        %v558 = vmul.f32 %v553, %v557
        %v559 = vld [vmem:[#allocation3] sm:$0xff]
        %v561 = vsel %vm521, %v558, 0
        %563 = vmatpush.msra.mxu0 0.0
        %564 = vmatpush.msra.mxu0 0.0
        %565 = vmatpush.msra.mxu0 0.0
        %566 = vmatpush.msra.mxu0 0.0
        %567 = vmatpush.msra.mxu0 0.0
        %568 = vmatpush.msra.mxu0 0.0
        %569 = vmatpush.msra.mxu0 0.0
        %570 = vmatpush.msra.mxu0 0.0
        %571 = vmatpush.msra.mxu0 0.0
        %572 = vmatpush.msra.mxu0 0.0
        %573 = vmatpush.msra.mxu0 0.0
        %574 = vmatpush.msra.mxu0 0.0
        %575 = vmatpush.msra.mxu0 0.0
        %576 = vmatpush.msra.mxu0 0.0
        %577 = vmatpush.msra.mxu0 0.0
        %578 = vmatpush.msra.mxu0 %v559
        %579 = vmatmul.f32.gmra.mxu0 %v561
        %v580 = vpop.f32.mrf.mxu0
        %v581 = vadd.f32 0.0, %v580
        %582 = vdwg.mxu0
        %583 = vst.msk [vmem:[#allocation4] sm:$0xff] %vm521, %v581
        %v584 = vld [vmem:[#allocation2] sm:$0xff]
        %585 = vrot.lane.b32.xlu0 %v518, 120
        %v586 = vpop.permute.xlu0 %585
        %588 = vrot.lane.b32.xlu0 %v584, 120
        %v589 = vpop.permute.xlu0 %588
        %v590 = vsel %vm521, %v586, 0
        %v592 = vsel %vm521, %v589, 0
        %594 = vmatpush.xpose.msra.mxu0 0.0
        %595 = vmatpush.xpose.msra.mxu0 0.0
        %596 = vmatpush.xpose.msra.mxu0 0.0
        %597 = vmatpush.xpose.msra.mxu0 0.0
        %598 = vmatpush.xpose.msra.mxu0 0.0
        %599 = vmatpush.xpose.msra.mxu0 0.0
        %600 = vmatpush.xpose.msra.mxu0 0.0
        %601 = vmatpush.xpose.msra.mxu0 0.0
        %602 = vmatpush.xpose.msra.mxu0 0.0
        %603 = vmatpush.xpose.msra.mxu0 0.0
        %604 = vmatpush.xpose.msra.mxu0 0.0
        %605 = vmatpush.xpose.msra.mxu0 0.0
        %606 = vmatpush.xpose.msra.mxu0 0.0
        %607 = vmatpush.xpose.msra.mxu0 0.0
        %608 = vmatpush.xpose.msra.mxu0 0.0
        %609 = vmatpush.xpose.msra.mxu0 %v592
        %610 = vmatmul.f32.gmra.mxu0 %v590
        %v611 = vpop.f32.mrf.mxu0
        %v612 = vadd.f32 0.0, %v611
        %613 = vdwg.mxu0
        %v614 = vsel %vm521, %v612, -inf
        %615 = vmax.xlane.f32.xlu0 %v614
        %v616 = vpop.xlane.xlu0 %615
        %v617 = vsub.f32 %v612, %v616
        %v618 = vmul.f32 %v617, 1.442695
        %v619 = vpow.pop %v618
        %v620 = vsel %vm521, %v619, 0.0
        %621 = vadd.xlane.f32.xlu0 %v620
        %v622 = vpop.xlane.xlu0 %621
        %v623 = vrcp.pop %v622
        %v624 = vmul.f32 %v619, %v623
        %v625 = vld [vmem:[#allocation3] sm:$0xff]
        %627 = vrot.lane.b32.xlu0 %v625, 120
        %v628 = vpop.permute.xlu0 %627
        %v631 = vsel %vm521, %v624, 0
        %633 = vmatpush.msra.mxu0 0.0
        %634 = vmatpush.msra.mxu0 0.0
        %635 = vmatpush.msra.mxu0 0.0
        %636 = vmatpush.msra.mxu0 0.0
        %637 = vmatpush.msra.mxu0 0.0
        %638 = vmatpush.msra.mxu0 0.0
        %639 = vmatpush.msra.mxu0 0.0
        %640 = vmatpush.msra.mxu0 0.0
        %641 = vmatpush.msra.mxu0 0.0
        %642 = vmatpush.msra.mxu0 0.0
        %643 = vmatpush.msra.mxu0 0.0
        %644 = vmatpush.msra.mxu0 0.0
        %645 = vmatpush.msra.mxu0 0.0
        %646 = vmatpush.msra.mxu0 0.0
        %647 = vmatpush.msra.mxu0 0.0
        %648 = vmatpush.msra.mxu0 %v628
        %649 = vmatmul.f32.gmra.mxu0 %v631
        %v650 = vpop.f32.mrf.mxu0
        %v651 = vadd.f32 0.0, %v650
        %652 = vdwg.mxu0
        %654 = vrot.lane.b32.xlu0 %v651, 8
        %v655 = vpop.permute.xlu0 %654
        %vm657 = vcmask 130112
        %658 = vst.msk [vmem:[#allocation4] sm:$0xff] %vm657, %v655
        %v659 = vld [vmem:[#allocation2] sm:$0xff]
        %660 = vrot.lane.b32.xlu0 %v518, 112
        %v661 = vpop.permute.xlu0 %660
        %663 = vrot.lane.b32.xlu0 %v659, 112
        %v664 = vpop.permute.xlu0 %663
        %v665 = vsel %vm521, %v661, 0
        %v667 = vsel %vm521, %v664, 0
        %669 = vmatpush.xpose.msra.mxu0 0.0
        %670 = vmatpush.xpose.msra.mxu0 0.0
        %671 = vmatpush.xpose.msra.mxu0 0.0
        %672 = vmatpush.xpose.msra.mxu0 0.0
        %673 = vmatpush.xpose.msra.mxu0 0.0
        %674 = vmatpush.xpose.msra.mxu0 0.0
        %675 = vmatpush.xpose.msra.mxu0 0.0
        %676 = vmatpush.xpose.msra.mxu0 0.0
        %677 = vmatpush.xpose.msra.mxu0 0.0
        %678 = vmatpush.xpose.msra.mxu0 0.0
        %679 = vmatpush.xpose.msra.mxu0 0.0
        %680 = vmatpush.xpose.msra.mxu0 0.0
        %681 = vmatpush.xpose.msra.mxu0 0.0
        %682 = vmatpush.xpose.msra.mxu0 0.0
        %683 = vmatpush.xpose.msra.mxu0 0.0
        %684 = vmatpush.xpose.msra.mxu0 %v667
        %685 = vmatmul.f32.gmra.mxu0 %v665
        %v686 = vpop.f32.mrf.mxu0
        %v687 = vadd.f32 0.0, %v686
        %688 = vdwg.mxu0
        %v689 = vsel %vm521, %v687, -inf
        %690 = vmax.xlane.f32.xlu0 %v689
        %v691 = vpop.xlane.xlu0 %690
        %v692 = vsub.f32 %v687, %v691
        %v693 = vmul.f32 %v692, 1.442695
        %v694 = vpow.pop %v693
        %v695 = vsel %vm521, %v694, 0.0
        %696 = vadd.xlane.f32.xlu0 %v695
        %v697 = vpop.xlane.xlu0 %696
        %v698 = vrcp.pop %v697
        %v699 = vmul.f32 %v694, %v698
        %v700 = vld [vmem:[#allocation3] sm:$0xff]
        %702 = vrot.lane.b32.xlu0 %v700, 112
        %v703 = vpop.permute.xlu0 %702
        %v706 = vsel %vm521, %v699, 0
        %708 = vmatpush.msra.mxu0 0.0
        %709 = vmatpush.msra.mxu0 0.0
        %710 = vmatpush.msra.mxu0 0.0
        %711 = vmatpush.msra.mxu0 0.0
        %712 = vmatpush.msra.mxu0 0.0
        %713 = vmatpush.msra.mxu0 0.0
        %714 = vmatpush.msra.mxu0 0.0
        %715 = vmatpush.msra.mxu0 0.0
        %716 = vmatpush.msra.mxu0 0.0
        %717 = vmatpush.msra.mxu0 0.0
        %718 = vmatpush.msra.mxu0 0.0
        %719 = vmatpush.msra.mxu0 0.0
        %720 = vmatpush.msra.mxu0 0.0
        %721 = vmatpush.msra.mxu0 0.0
        %722 = vmatpush.msra.mxu0 0.0
        %723 = vmatpush.msra.mxu0 %v703
        %724 = vmatmul.f32.gmra.mxu0 %v706
        %v725 = vpop.f32.mrf.mxu0
        %v726 = vadd.f32 0.0, %v725
        %727 = vdwg.mxu0
        %729 = vrot.lane.b32.xlu0 %v726, 16
        %v730 = vpop.permute.xlu0 %729
        %vm732 = vcmask 195712
        %733 = vst.msk [vmem:[#allocation4] sm:$0xff] %vm732, %v730
        %v734 = vld [vmem:[#allocation2] sm:$0xff]
        %735 = vrot.lane.b32.xlu0 %v518, 104
        %v736 = vpop.permute.xlu0 %735
        %738 = vrot.lane.b32.xlu0 %v734, 104
        %v739 = vpop.permute.xlu0 %738
        %v740 = vsel %vm521, %v736, 0
        %v742 = vsel %vm521, %v739, 0
        %744 = vmatpush.xpose.msra.mxu0 0.0
        %745 = vmatpush.xpose.msra.mxu0 0.0
        %746 = vmatpush.xpose.msra.mxu0 0.0
        %747 = vmatpush.xpose.msra.mxu0 0.0
        %748 = vmatpush.xpose.msra.mxu0 0.0
        %749 = vmatpush.xpose.msra.mxu0 0.0
        %750 = vmatpush.xpose.msra.mxu0 0.0
        %751 = vmatpush.xpose.msra.mxu0 0.0
        %752 = vmatpush.xpose.msra.mxu0 0.0
        %753 = vmatpush.xpose.msra.mxu0 0.0
        %754 = vmatpush.xpose.msra.mxu0 0.0
        %755 = vmatpush.xpose.msra.mxu0 0.0
        %756 = vmatpush.xpose.msra.mxu0 0.0
        %757 = vmatpush.xpose.msra.mxu0 0.0
        %758 = vmatpush.xpose.msra.mxu0 0.0
        %759 = vmatpush.xpose.msra.mxu0 %v742
        %760 = vmatmul.f32.gmra.mxu0 %v740
        %v761 = vpop.f32.mrf.mxu0
        %v762 = vadd.f32 0.0, %v761
        %763 = vdwg.mxu0
        %v764 = vsel %vm521, %v762, -inf
        %765 = vmax.xlane.f32.xlu0 %v764
        %v766 = vpop.xlane.xlu0 %765
        %v767 = vsub.f32 %v762, %v766
        %v768 = vmul.f32 %v767, 1.442695
        %v769 = vpow.pop %v768
        %v770 = vsel %vm521, %v769, 0.0
        %771 = vadd.xlane.f32.xlu0 %v770
        %v772 = vpop.xlane.xlu0 %771
        %v773 = vrcp.pop %v772
        %v774 = vmul.f32 %v769, %v773
        %v775 = vld [vmem:[#allocation3] sm:$0xff]
        %777 = vrot.lane.b32.xlu0 %v775, 104
        %v778 = vpop.permute.xlu0 %777
        %v781 = vsel %vm521, %v774, 0
        %783 = vmatpush.msra.mxu0 0.0
        %784 = vmatpush.msra.mxu0 0.0
        %785 = vmatpush.msra.mxu0 0.0
        %786 = vmatpush.msra.mxu0 0.0
        %787 = vmatpush.msra.mxu0 0.0
        %788 = vmatpush.msra.mxu0 0.0
        %789 = vmatpush.msra.mxu0 0.0
        %790 = vmatpush.msra.mxu0 0.0
        %791 = vmatpush.msra.mxu0 0.0
        %792 = vmatpush.msra.mxu0 0.0
        %793 = vmatpush.msra.mxu0 0.0
        %794 = vmatpush.msra.mxu0 0.0
        %795 = vmatpush.msra.mxu0 0.0
        %796 = vmatpush.msra.mxu0 0.0
        %797 = vmatpush.msra.mxu0 0.0
        %798 = vmatpush.msra.mxu0 %v778
        %799 = vmatmul.f32.gmra.mxu0 %v781
        %v800 = vpop.f32.mrf.mxu0
        %v801 = vadd.f32 0.0, %v800
        %802 = vdwg.mxu0
        %804 = vrot.lane.b32.xlu0 %v801, 24
        %v805 = vpop.permute.xlu0 %804
        %vm807 = vcmask 261312
        %808 = vst.msk [vmem:[#allocation4] sm:$0xff] %vm807, %v805
        %v809 = vld [vmem:[#allocation4] sm:$0xff]
        %v810 = vld [vmem:[%s3] sm:$0xff]
        %v811 = vld [vmem:[%s3 + $0x8] sm:$0xff]
        %v812 = vld [vmem:[%s3 + $0x10] sm:$0xff]
        %v813 = vld [vmem:[%s3 + $0x18] sm:$0xff]
        %v814 = vld [vmem:[%s4] sm:$0x1]
        %v816 = vperm.slane %v814, 0
        %v819 = vsel %vm496, %v809, 0
        %821 = vmatpush.msra.mxu0 0.0
        %822 = vmatpush.msra.mxu0 0.0
        %823 = vmatpush.msra.mxu0 0.0
        %824 = vmatpush.msra.mxu0 0.0
        %825 = vmatpush.msra.mxu0 0.0
        %826 = vmatpush.msra.mxu0 0.0
        %827 = vmatpush.msra.mxu0 0.0
        %828 = vmatpush.msra.mxu0 0.0
        %829 = vmatpush.msra.mxu0 0.0
        %830 = vmatpush.msra.mxu0 0.0
        %831 = vmatpush.msra.mxu0 0.0
        %832 = vmatpush.msra.mxu0 0.0
        %833 = vmatpush.msra.mxu0 %v813
        %834 = vmatpush.msra.mxu0 %v812
        %835 = vmatpush.msra.mxu0 %v811
        %836 = vmatpush.msra.mxu0 %v810
        %837 = vmatmul.f32.gmra.mxu0 %v819
        %v838 = vpop.f32.mrf.mxu0
        %v839 = vadd.f32 %v816, %v838
        %840 = vdwg.mxu0
        %v841 = vadd.f32 %v491, %v839
        %v842 = vsel %vm496, %v841, 0.0
        %843 = vadd.xlane.f32.xlu0 %v842
        %v844 = vpop.xlane.xlu0 %843
        %v845 = vrcp.pop 32.0
        %v846 = vmul.f32 32.0, %v845
        %v847 = vsub.f32 1.0, %v846
        %v848 = vmul.f32 %v845, %v847
        %v849 = vadd.f32 %v845, %v848
        %vm850 = vweird.f32 %v845
        %v851 = vsel %vm850, %v845, %v849
        %v852 = vmul.f32 %v844, %v851
        %v853 = vsub.f32 %v841, %v852
        %v854 = vmul.f32 %v853, %v853
        %v855 = vsel %vm496, %v854, 0.0
        %856 = vadd.xlane.f32.xlu0 %v855
        %v857 = vpop.xlane.xlu0 %856
        %v858 = vmul.f32 %v857, %v851
        %v859 = vadd.f32 %v858, 1e-05
        %v860 = vrsqrt.pop %v859
        %v861 = vmul.f32 %v860, %v859
        %v862 = vmul.f32 %v861, %v860
        %v863 = vmul.f32 0.5, %v862
        %v864 = vsub.f32 1.5, %v863
        %v865 = vmul.f32 %v860, %v864
        %vm866 = vweird.f32 %v859
        %vm867 = vweird.f32 %v860
        %vm868 = vmor %vm866, %vm867
        %v869 = vsel %vm868, %v860, %v865
        %v870 = vmul.f32 %v853, %v869
        %v871 = vld [vmem:[%s5] sm:$0x1]
        %v873 = vperm.slane %v871, 0
        %v875 = vmul.f32 %v870, %v873
        %v876 = vld [vmem:[%s6] sm:$0x1]
        %v878 = vperm.slane %v876, 0
        %v880 = vadd.f32 %v875, %v878
        %v881 = vld [vmem:[%s7] sm:$0xff]
        %v882 = vld [vmem:[%s7 + $0x8] sm:$0xff]
        %v883 = vld [vmem:[%s7 + $0x10] sm:$0xff]
        %v884 = vld [vmem:[%s7 + $0x18] sm:$0xff]
        %v885 = vld [vmem:[%s7 + $0x20] sm:$0xff]
        %v886 = vld [vmem:[%s7 + $0x28] sm:$0xff]
        %v887 = vld [vmem:[%s7 + $0x30] sm:$0xff]
        %v888 = vld [vmem:[%s7 + $0x38] sm:$0xff]
        %v889 = vld [vmem:[%s7 + $0x40] sm:$0xff]
        %v890 = vld [vmem:[%s7 + $0x48] sm:$0xff]
        %v891 = vld [vmem:[%s7 + $0x50] sm:$0xff]
        %v892 = vld [vmem:[%s7 + $0x58] sm:$0xff]
        %v893 = vld [vmem:[%s7 + $0x60] sm:$0xff]
        %v894 = vld [vmem:[%s7 + $0x68] sm:$0xff]
        %v895 = vld [vmem:[%s7 + $0x70] sm:$0xff]
        %v896 = vld [vmem:[%s7 + $0x78] sm:$0xff]
        %v897 = vld [vmem:[%s8] sm:$0x1]
        %v899 = vperm.slane %v897, 0
        %v902 = vsel %vm496, %v880, 0
        %v905 = vsel %vm496, %v881, 0
        %v908 = vsel %vm496, %v882, 0
        %v911 = vsel %vm496, %v883, 0
        %v914 = vsel %vm496, %v884, 0
        %v917 = vsel %vm496, %v885, 0
        %v920 = vsel %vm496, %v886, 0
        %v923 = vsel %vm496, %v887, 0
        %v926 = vsel %vm496, %v888, 0
        %v929 = vsel %vm496, %v889, 0
        %v932 = vsel %vm496, %v890, 0
        %v935 = vsel %vm496, %v891, 0
        %v938 = vsel %vm496, %v892, 0
        %v941 = vsel %vm496, %v893, 0
        %v944 = vsel %vm496, %v894, 0
        %v947 = vsel %vm496, %v895, 0
        %v950 = vsel %vm496, %v896, 0
        %952 = vmatpush.xpose.msra.mxu0 %v950
        %953 = vmatpush.xpose.msra.mxu0 %v947
        %954 = vmatpush.xpose.msra.mxu0 %v944
        %955 = vmatpush.xpose.msra.mxu0 %v941
        %956 = vmatpush.xpose.msra.mxu0 %v938
        %957 = vmatpush.xpose.msra.mxu0 %v935
        %958 = vmatpush.xpose.msra.mxu0 %v932
        %959 = vmatpush.xpose.msra.mxu0 %v929
        %960 = vmatpush.xpose.msra.mxu0 %v926
        %961 = vmatpush.xpose.msra.mxu0 %v923
        %962 = vmatpush.xpose.msra.mxu0 %v920
        %963 = vmatpush.xpose.msra.mxu0 %v917
        %964 = vmatpush.xpose.msra.mxu0 %v914
        %965 = vmatpush.xpose.msra.mxu0 %v911
        %966 = vmatpush.xpose.msra.mxu0 %v908
        %967 = vmatpush.xpose.msra.mxu0 %v905
        %968 = vmatmul.f32.gmra.mxu0 %v902
        %v969 = vpop.f32.mrf.mxu0
        %v970 = vadd.f32 %v899, %v969
        %971 = vdwg.mxu0
        %v972 = vmax.f32 %v970, 0.0
        %v973 = vld [vmem:[%s9] sm:$0xff]
        %v974 = vld [vmem:[%s9 + $0x8] sm:$0xff]
        %v975 = vld [vmem:[%s9 + $0x10] sm:$0xff]
        %v976 = vld [vmem:[%s9 + $0x18] sm:$0xff]
        %v977 = vld [vmem:[%s9 + $0x20] sm:$0xff]
        %v978 = vld [vmem:[%s9 + $0x28] sm:$0xff]
        %v979 = vld [vmem:[%s9 + $0x30] sm:$0xff]
        %v980 = vld [vmem:[%s9 + $0x38] sm:$0xff]
        %v981 = vld [vmem:[%s9 + $0x40] sm:$0xff]
        %v982 = vld [vmem:[%s9 + $0x48] sm:$0xff]
        %v983 = vld [vmem:[%s9 + $0x50] sm:$0xff]
        %v984 = vld [vmem:[%s9 + $0x58] sm:$0xff]
        %v985 = vld [vmem:[%s9 + $0x60] sm:$0xff]
        %v986 = vld [vmem:[%s9 + $0x68] sm:$0xff]
        %v987 = vld [vmem:[%s9 + $0x70] sm:$0xff]
        %v988 = vld [vmem:[%s9 + $0x78] sm:$0xff]
        %v989 = vld [vmem:[%s10] sm:$0x1]
        %v991 = vperm.slane %v989, 0
        %993 = vmatpush.msra.mxu0 %v988
        %994 = vmatpush.msra.mxu0 %v987
        %995 = vmatpush.msra.mxu0 %v986
        %996 = vmatpush.msra.mxu0 %v985
        %997 = vmatpush.msra.mxu0 %v984
        %998 = vmatpush.msra.mxu0 %v983
        %999 = vmatpush.msra.mxu0 %v982
        %1000 = vmatpush.msra.mxu0 %v981
        %1001 = vmatpush.msra.mxu0 %v980
        %1002 = vmatpush.msra.mxu0 %v979
        %1003 = vmatpush.msra.mxu0 %v978
        %1004 = vmatpush.msra.mxu0 %v977
        %1005 = vmatpush.msra.mxu0 %v976
        %1006 = vmatpush.msra.mxu0 %v975
        %1007 = vmatpush.msra.mxu0 %v974
        %1008 = vmatpush.msra.mxu0 %v973
        %1009 = vmatmul.f32.gmra.mxu0 %v972
        %v1010 = vpop.f32.mrf.mxu0
        %v1011 = vadd.f32 %v991, %v1010
        %1012 = vdwg.mxu0
        %v1013 = vadd.f32 %v880, %v1011
        %v1014 = vsel %vm496, %v1013, 0.0
        %1015 = vadd.xlane.f32.xlu0 %v1014
        %v1016 = vpop.xlane.xlu0 %1015
        %v1017 = vmul.f32 %v1016, %v851
        %v1018 = vsub.f32 %v1013, %v1017
        %v1019 = vmul.f32 %v1018, %v1018
        %v1020 = vsel %vm496, %v1019, 0.0
        %1021 = vadd.xlane.f32.xlu0 %v1020
        %v1022 = vpop.xlane.xlu0 %1021
        %v1023 = vmul.f32 %v1022, %v851
        %v1024 = vadd.f32 %v1023, 1e-05
        %v1025 = vrsqrt.pop %v1024
        %v1026 = vmul.f32 %v1025, %v1024
        %v1027 = vmul.f32 %v1026, %v1025
        %v1028 = vmul.f32 0.5, %v1027
        %v1029 = vsub.f32 1.5, %v1028
        %v1030 = vmul.f32 %v1025, %v1029
        %vm1031 = vweird.f32 %v1024
        %vm1032 = vweird.f32 %v1025
        %vm1033 = vmor %vm1031, %vm1032
        %v1034 = vsel %vm1033, %v1025, %v1030
        %v1035 = vmul.f32 %v1018, %v1034
        %v1036 = vld [vmem:[%s11] sm:$0x1]
        %v1038 = vperm.slane %v1036, 0
        %v1040 = vmul.f32 %v1035, %v1038
        %v1041 = vld [vmem:[%s12] sm:$0x1]
        %v1043 = vperm.slane %v1041, 0
        %v1045 = vadd.f32 %v1040, %v1043
        %1046 = vst.msk [vmem:[%s445] sm:$0xff] %vm496, %v1045
        %s1047 = sand.u32 %s327, 1
        %s1048 = scalar_lea.sflag [#allocation6], %s1047
        %s1049 = sand.u32 %s327, 1
        %s1050 = smul.addr %s1049, 8
        %s1051 = scalar_lea.vmem [#allocation5], %s1050
        // Predicated region
        $region77: #{tpu_custom_call.1} parent=71 // pred_check
          %p1052 = pneg %p337
        $region78: #{tpu_custom_call.1} parent=71 // pred_check_branch
          %1054 = sbr.rel (%p1052) target = $region80
        $region79: #{tpu_custom_call.1} parent=71 // pred_region
          %1056 = vsyncadd %s1048, 0
          %s1057 = sadd.s32 %s32, %s31
          %s1058 = smul.addr %s1057, 8
          %s1059 = scalar_lea.hbm %s13, %s1058
          %s1061 = sshll.u32 %s1051, 4
          %s1062 = int_to_ptr.vmem [resolvable:$true] %s1061
          %s1063 = sshll.u32 %s1059, 4
          %s1064 = int_to_ptr.hbm [resolvable:$true] %s1063
          %1066 = dma.vmem_to_hbm [thread:$0]  %s1062, 128, %s1064, %s1048
        $region80: #{tpu_custom_call.1} parent=71 // pred_fallthru
          _
      $region72: #{tpu_custom_call.1} parent=5 // pred_fallthru
        _
      %p1067 = scmp.le.s32.totalorder 2, %s22
      // Predicated region
      $region81: #{tpu_custom_call.1} parent=5 // pred_check
        %p1068 = pneg %p1067
      $region82: #{tpu_custom_call.1} parent=5 // pred_check_branch
        %1070 = sbr.rel (%p1068) target = $region84
      $region83: #{tpu_custom_call.1} parent=5 // pred_region
        %s1071 = ssub.s32 %s22, 2
        // Predicated region
        $region85: #{tpu_custom_call.1} parent=83 // pred_check
          %p1072 = pneg %p343
        $region86: #{tpu_custom_call.1} parent=83 // pred_check_branch
          %1074 = sbr.rel (%p1072) target = $region88
        $region87: #{tpu_custom_call.1} parent=83 // pred_region
          %s1075 = sand.u32 %s328, 1
          %s1076 = scalar_lea.sflag [#allocation6], %s1075
          %s1077 = sand.u32 %s328, 1
          %s1078 = smul.addr %s1077, 8
          %s1079 = scalar_lea.vmem [#allocation5], %s1078
          %1081 = dma.done %s1076, 128
        $region88: #{tpu_custom_call.1} parent=83 // pred_fallthru
          _
      $region84: #{tpu_custom_call.1} parent=5 // pred_fallthru
        _
    $region6: #{tpu_custom_call.1} parent=1 // loop_footer
      %s26 = sadd.s32 1, %s22
    $region7: #{tpu_custom_call.1} parent=1 // loop_footer_branch
      %21 = sbr.rel target = $region3
    $region8: #{tpu_custom_call.1} parent=1 // loop_exit
      _
    %1082 = vsyncpa [#allocation6], 1
    %s1083 = scalar_lea.sflag [#allocation6], 1
    %1084 = vsyncpa %s1083, 1

</llo_original>
